<compile_context>
chip_gen: v7x
topology: tpu7x:2x2x1
jax: 0.10.0
libtpu: 0.0.40
codegen_flags: <defaults>
</compile_context>

<pallas_src>
import jax
import jax.numpy as jnp
from jax.experimental import pallas as pl
from jax.experimental.pallas import tpu as pltpu

EPS = 1e-5

# For output parity s (0/1) and 3x3-kernel row/col index p (0..2):
#   2*h + s + (p - 1) == 2*(h + shift) + tap       (tap in {0,1})
# so conv tap p at output parity s reads CT tap plane `tap` shifted by `shift`
# rows/cols at input resolution.
_PARITY_TAPS = (
    ((1, -1), (0, 0), (1, 0)),   # s = 0 : p -> (tap, shift)
    ((0, 0), (1, 0), (0, 1)),    # s = 1
)


def upsample_fused_kernel(x_ref, w1_ref, b1_ref, w2_ref, b2_ref, o_ref, ct_ref):
    """Fused UpSample forward for one (batch, row-tile) grid step.

    Block shapes (C = channels, TH = row tile):
      x_ref : (1, 1, TH+2, W, C)  f32  overlapped input row tile (+1 halo row
                                       each side; zero rows at the image border)
      w1_ref: (C, 4C)             cdt  ConvTranspose taps (BN1-folded), columns
                                       ordered (2*kh+kw)*C + o
      b1_ref: (1, 4C)             f32  stage-1 folded bias, tiled per tap plane
      w2_ref: (9C, C)             cdt  3x3 conv taps (BN2-folded), rows ordered
                                       (3*p+q)*C + i
      b2_ref: (1, C)              f32  stage-2 folded bias
      o_ref : (1, TH, 2, W, 2C)   f32  o[0,h,a,w,b*C+c] = y[2h+a, 2w+b, c]
      ct_ref: (TH+2, W+2, 4C)     cdt  scratch: stage-1 tap planes + 1 halo ring
    """
    t = pl.program_id(1)
    n_t = pl.num_programs(1)
    TH = o_ref.shape[1]
    W = o_ref.shape[3]
    C = b2_ref.shape[1]
    cdt = w1_ref.dtype                      # matmul / scratch compute dtype

    # ---- stage 1: ConvTranspose(k=2,s=2) + BN1 + ReLU, all 4 taps at once ---
    x_tile = x_ref[0, 0]                                  # (TH+2, W, C) f32
    x_mat = x_tile.reshape((TH + 2) * W, C).astype(cdt)
    y1 = jnp.dot(x_mat, w1_ref[...], preferred_element_type=jnp.float32)
    y1 = jnp.maximum(y1 + b1_ref[...], 0.0)
    ct_ref[:, pl.ds(1, W), :] = y1.astype(cdt).reshape(TH + 2, W, 4 * C)

    # Zero-pad halo of the 3x3 conv (image border only).  Left/right columns
    # are always an image border; top/bottom halo rows are real neighbour rows
    # (already computed above) except at the first/last row tile.
    zero_col = jnp.zeros((TH + 2, 1, 4 * C), cdt)
    ct_ref[:, pl.ds(0, 1), :] = zero_col
    ct_ref[:, pl.ds(W + 1, 1), :] = zero_col

    @pl.when(t == 0)
    def _zero_top_halo():
        ct_ref[0, :, :] = jnp.zeros((W + 2, 4 * C), cdt)

    @pl.when(t == n_t - 1)
    def _zero_bottom_halo():
        ct_ref[TH + 1, :, :] = jnp.zeros((W + 2, 4 * C), cdt)

    # ---- stage 2: 3x3 conv (BN2-folded) + nearest-up skip + ReLU ------------
    # The nearest-neighbour-upsampled skip equals x itself for every parity.
    x_int = x_tile[1:TH + 1].reshape(TH * W, C)           # f32 interior rows
    base = x_int + b2_ref[...]                            # (TH*W, C) f32
    base2 = jnp.concatenate([base, base], axis=-1)        # (TH*W, 2C) f32

    for a in range(2):                                    # output row parity
        halves = []
        for b in range(2):                                # output col parity
            cols = []
            for p in range(3):
                kh, hs = _PARITY_TAPS[a][p]
                for q in range(3):
                    kw, ws = _PARITY_TAPS[b][q]
                    plane = 2 * kh + kw
                    win = ct_ref[pl.ds(1 + hs, TH),
                                 pl.ds(1 + ws, W),
                                 pl.ds(plane * C, C)]      # (TH, W, C) cdt
                    cols.append(win.reshape(TH * W, C))
            lhs = jnp.concatenate(cols, axis=-1)           # (TH*W, 9C) cdt
            halves.append(jnp.dot(lhs, w2_ref[...],
                                  preferred_element_type=jnp.float32))
        acc = jnp.concatenate(halves, axis=-1)             # (TH*W, 2C) f32
        o_ref[0, :, a, :, :] = jnp.maximum(acc + base2,
                                           0.0).reshape(TH, W, 2 * C)


def _pick_row_tile(H, W, C, cdt_bytes, budget_bytes=24 << 20):
    """Largest divisor-of-H row tile whose VMEM footprint fits the budget."""
    f32 = 4

    def est(th):
        x_buf = 2 * (th + 2) * W * C * f32            # double-buffered input tile
        out_buf = 2 * th * 2 * W * 2 * C * f32        # double-buffered output tile
        ct = (th + 2) * (W + 2) * 4 * C * cdt_bytes   # scratch
        lhs_tmp = th * W * 9 * C * cdt_bytes          # stage-2 K-merged operand
        wts = 2 * (4 * C * C + 9 * C * C) * cdt_bytes
        return x_buf + out_buf + ct + lhs_tmp + wts

    for cand in (32, 16, 8, 4, 2, 1):
        if H % cand == 0 and est(cand) <= budget_bytes:
            return cand
    return 1


def upsample_forward(x_nchw, params, stride=2, *,
                     compute_dtype=jnp.bfloat16, row_tile=None,
                     vmem_limit_bytes=48 * 1024 * 1024, out_layout="NHWC"):
    """Fused UpSample forward.

    Returns NHWC (N, 2H, 2W, C) by default (lane-dense, no extra HBM transpose
    pass); pass out_layout="NCHW" for drop-in PyTorch layout parity.
    """
    N, Cin, H, W = x_nchw.shape
    Cout = params["w_ct"].shape[1]
    assert stride == 2 and Cin == Cout, \
        "residual add requires stride == 2 and in_ch == out_ch"
    C = Cout
    x_nchw = x_nchw.astype(jnp.float32)

    # ---- fold ConvTranspose bias + BN1 into the stage-1 weights/bias --------
    scale1 = params["g1"] / jnp.sqrt(params["v1"] + EPS)
    bias1 = (params["b_ct"] - params["m1"]) * scale1 + params["b1"]
    # w1_wide[i, (2*kh+kw)*C + o] = w_ct[i, o, kh, kw] * scale1[o]
    w1_wide = jnp.transpose(params["w_ct"] * scale1[None, :, None, None],
                            (0, 2, 3, 1)).reshape(C, 4 * C)
    b1_wide = jnp.tile(bias1, 4).reshape(1, 4 * C)

    # ---- fold BN2 into the 3x3 conv weights/bias ----------------------------
    scale2 = params["g2"] / jnp.sqrt(params["v2"] + EPS)
    bias2 = (params["b_c"] - params["m2"]) * scale2 + params["b2"]
    # w2_stack[(3*p+q)*C + i, o] = w_c[o, i, p, q] * scale2[o]
    w2_stack = jnp.transpose(params["w_c"] * scale2[:, None, None, None],
                             (2, 3, 1, 0)).reshape(9 * C, C)

    cdt = compute_dtype
    w1c = w1_wide.astype(cdt)
    w2c = w2_stack.astype(cdt)
    b1r = b1_wide.astype(jnp.float32)
    b2r = bias2.reshape(1, C).astype(jnp.float32)

    # Layout plumbing: NCHW -> NHWC once, on the small input tensor.
    x_nhwc = jnp.transpose(x_nchw, (0, 2, 3, 1))          # (N, H, W, C)

    if row_tile is None:
        row_tile = _pick_row_tile(H, W, C, jnp.dtype(cdt).itemsize)
    assert H % row_tile == 0, (H, row_tile)
    TH = row_tile
    n_tiles = H // TH

    # Overlapped row tiles: tile t covers original rows [t*TH-1, t*TH+TH], with
    # zero rows at the image border.  Input-resolution gather; lets BlockSpec
    # stream exactly TH+2 rows per grid step (bounded VMEM, pipelined DMA).
    x_pad = jnp.pad(x_nhwc, ((0, 0), (1, 1), (0, 0), (0, 0)))
    row_idx = (jnp.arange(n_tiles)[:, None] * TH
               + jnp.arange(TH + 2)[None, :]).reshape(-1)
    x_tiles = jnp.take(x_pad, row_idx, axis=1).reshape(N, n_tiles, TH + 2, W, C)

    out6 = pl.pallas_call(
        upsample_fused_kernel,
        out_shape=jax.ShapeDtypeStruct((N, H, 2, W, 2 * C), jnp.float32),
        grid=(N, n_tiles),
        in_specs=[
            pl.BlockSpec((1, 1, TH + 2, W, C), lambda n, t: (n, t, 0, 0, 0)),
            pl.BlockSpec((C, 4 * C), lambda n, t: (0, 0)),        # w1 (wide)
            pl.BlockSpec((1, 4 * C), lambda n, t: (0, 0)),        # b1 (wide)
            pl.BlockSpec((9 * C, C), lambda n, t: (0, 0)),        # w2 (stacked K)
            pl.BlockSpec((1, C), lambda n, t: (0, 0)),            # b2
        ],
        out_specs=pl.BlockSpec((1, TH, 2, W, 2 * C),
                               lambda n, t: (n, t, 0, 0, 0)),
        scratch_shapes=[
            pltpu.VMEM((TH + 2, W + 2, 4 * C), cdt),
        ],
        compiler_params=pltpu.CompilerParams(
            dimension_semantics=("parallel", "parallel"),
            vmem_limit_bytes=vmem_limit_bytes),
    )(x_tiles, w1c, b1r, w2c, b2r)

    # Free (row-major) reshape: (N, H, 2, W, 2C) -> NHWC (N, 2H, 2W, C).
    y_nhwc = out6.reshape(N, 2 * H, 2 * W, C)
    if out_layout == "NCHW":
        return jnp.transpose(y_nhwc, (0, 3, 1, 2))
    return y_nhwc


# ----------------------------------------------------------------------------
# Pure-JAX reference (direct transcription of the PyTorch math, NCHW)
# ----------------------------------------------------------------------------
def _bn(x, g, b, m, v):
    return (x - m[None, :, None, None]) / jnp.sqrt(v[None, :, None, None] + EPS) \
        * g[None, :, None, None] + b[None, :, None, None]


def upsample_reference(x, params, stride=2):
    N, Cin, H, W = x.shape
    Cout = params["w_ct"].shape[1]
    Ho, Wo = stride * H, stride * W
    y = jnp.zeros((N, Cout, Ho, Wo), jnp.float32)
    for kh in range(2):
        for kw in range(2):
            contrib = jnp.einsum("nihw,io->nohw", x, params["w_ct"][:, :, kh, kw])
            y = y.at[:, :, kh::stride, kw::stride].set(contrib)
    y = y + params["b_ct"][None, :, None, None]
    y = jnp.maximum(_bn(y, params["g1"], params["b1"], params["m1"], params["v1"]), 0.0)
    yp = jnp.pad(y, ((0, 0), (0, 0), (1, 1), (1, 1)))
    z = jnp.zeros((N, Cout, Ho, Wo), jnp.float32)
    for kh in range(3):
        for kw in range(3):
            z = z + jnp.einsum("nihw,oi->nohw",
                               yp[:, :, kh:kh + Ho, kw:kw + Wo],
                               params["w_c"][:, :, kh, kw])
    z = z + params["b_c"][None, :, None, None]
    z = _bn(z, params["g2"], params["b2"], params["m2"], params["v2"])
    x_up = jnp.repeat(jnp.repeat(x, stride, axis=2), stride, axis=3)
    return jnp.maximum(z + x_up, 0.0)


# ----------------------------------------------------------------------------
if __name__ == "__main__":
    in_ch = out_ch = 4
    stride = 2
    N, H, W = 2, 16, 16

    key = jax.random.PRNGKey(0)
    ks = jax.random.split(key, 14)
    f32 = jnp.float32
    params = {
        "w_ct": jax.random.normal(ks[0], (in_ch, out_ch, 2, 2), f32) * 0.2,
        "b_ct": jax.random.normal(ks[1], (out_ch,), f32) * 0.1,
        "g1": 1.0 + 0.1 * jax.random.normal(ks[2], (out_ch,), f32),
        "b1": 0.1 * jax.random.normal(ks[3], (out_ch,), f32),
        "m1": 0.1 * jax.random.normal(ks[4], (out_ch,), f32),
        "v1": 0.5 + jax.random.uniform(ks[5], (out_ch,), f32),
        "w_c": jax.random.normal(ks[6], (out_ch, out_ch, 3, 3), f32) * 0.2,
        "b_c": 0.1 * jax.random.normal(ks[7], (out_ch,), f32),
        "g2": 1.0 + 0.1 * jax.random.normal(ks[8], (out_ch,), f32),
        "b2": 0.1 * jax.random.normal(ks[9], (out_ch,), f32),
        "m2": 0.1 * jax.random.normal(ks[10], (out_ch,), f32),
        "v2": 0.5 + jax.random.uniform(ks[11], (out_ch,), f32),
    }
    x = jax.random.normal(ks[12], (N, in_ch, H, W), f32)

    ref = jax.block_until_ready(upsample_reference(x, params, stride=stride))
    ref_nhwc = jnp.transpose(ref, (0, 2, 3, 1))

    # f32 debug path, NCHW output: tight elementwise check vs the reference.
    out_f32 = jax.block_until_ready(
        upsample_forward(x, params, stride=stride,
                         compute_dtype=jnp.float32, out_layout="NCHW"))
    assert out_f32.shape == (N, out_ch, stride * H, stride * W), out_f32.shape
    assert jnp.allclose(out_f32, ref, atol=1e-3, rtol=1e-3), \
        float(jnp.max(jnp.abs(out_f32 - ref)))

    # bf16 production path (default), lane-dense NHWC output: norm-level check.
    out_bf16 = jax.block_until_ready(
        upsample_forward(x, params, stride=stride))
    assert out_bf16.shape == (N, stride * H, stride * W, out_ch), out_bf16.shape
    rel = float(jnp.linalg.norm(out_bf16 - ref_nhwc)
                / (jnp.linalg.norm(ref_nhwc) + 1e-12))
    assert rel < 5e-2, rel

    print("KERNEL_OK")
</pallas_src>

<mosaic_0001>
module attributes {stable_mosaic.version = 11 : i64} {
  func.func @upsample_fused_kernel(%arg0: i32, %arg1: i32, %arg2: memref<1x1x18x16x4xf32, #tpu.memory_space<vmem>>, %arg3: memref<4x16xf32, #tpu.memory_space<vmem>>, %arg4: memref<1x16xf32, #tpu.memory_space<vmem>>, %arg5: memref<36x4xf32, #tpu.memory_space<vmem>>, %arg6: memref<1x4xf32, #tpu.memory_space<vmem>>, %arg7: memref<1x16x2x16x8xf32, #tpu.memory_space<vmem>>, %arg8: memref<18x18x16xf32, #tpu.memory_space<vmem>>) attributes {dimension_semantics = [#tpu.dimension_semantics<parallel>, #tpu.dimension_semantics<parallel>], iteration_bounds = array<i64: 2, 1>, scalar_prefetch = 0 : i64, scratch_operands = 1 : i64, tpu.core_type = #tpu.core_type<tc>, window_params = [{transform_indices = @transform_0, window_bounds = array<i64: 1, 1, 18, 16, 4>}, {pipeline_mode = #tpu.pipeline_mode<synchronous>, transform_indices = @transform_1, window_bounds = array<i64: 4, 16>}, {pipeline_mode = #tpu.pipeline_mode<synchronous>, transform_indices = @transform_2, window_bounds = array<i64: 1, 16>}, {pipeline_mode = #tpu.pipeline_mode<synchronous>, transform_indices = @transform_3, window_bounds = array<i64: 36, 4>}, {pipeline_mode = #tpu.pipeline_mode<synchronous>, transform_indices = @transform_4, window_bounds = array<i64: 1, 4>}, {transform_indices = @transform_5, window_bounds = array<i64: 1, 16, 2, 16, 8>}]} {
    %c0 = arith.constant 0 : index
    %c0_0 = arith.constant 0 : index
    %c0_1 = arith.constant 0 : index
    %c0_2 = arith.constant 0 : index
    %c0_3 = arith.constant 0 : index
    %0 = vector.load %arg2[%c0, %c0_0, %c0_1, %c0_2, %c0_3] : memref<1x1x18x16x4xf32, #tpu.memory_space<vmem>>, vector<1x1x18x16x4xf32>
    %1 = vector.shape_cast %0 : vector<1x1x18x16x4xf32> to vector<18x16x4xf32>
    %2 = vector.shape_cast %1 : vector<18x16x4xf32> to vector<288x4xf32>
    %c0_4 = arith.constant 0 : index
    %c0_5 = arith.constant 0 : index
    %3 = vector.load %arg3[%c0_4, %c0_5] : memref<4x16xf32, #tpu.memory_space<vmem>>, vector<4x16xf32>
    %cst = arith.constant dense<0.000000e+00> : vector<288x16xf32>
    %4 = tpu.matmul %2, %3, %cst {dimension_numbers = #tpu.dot_dimension_numbers<[1], [0], [0], [1], [0, 0, 1, 1], [], []>} : vector<288x4xf32>, vector<4x16xf32>, vector<288x16xf32> -> vector<288x16xf32>
    %c0_6 = arith.constant 0 : index
    %c0_7 = arith.constant 0 : index
    %5 = vector.load %arg4[%c0_6, %c0_7] : memref<1x16xf32, #tpu.memory_space<vmem>>, vector<1x16xf32>
    %6 = vector.broadcast %5 : vector<1x16xf32> to vector<288x16xf32>
    %7 = arith.addf %4, %6 : vector<288x16xf32>
    %cst_8 = arith.constant 0.000000e+00 : f32
    %8 = vector.broadcast %cst_8 : f32 to vector<288x16xf32>
    %9 = arith.maximumf %7, %8 : vector<288x16xf32>
    %10 = vector.shape_cast %9 : vector<288x16xf32> to vector<18x16x16xf32>
    %c0_9 = arith.constant 0 : index
    %c1 = arith.constant 1 : index
    %c0_10 = arith.constant 0 : index
    %11 = vector.load %arg8[%c0_9, %c1, %c0_10] : memref<18x18x16xf32, #tpu.memory_space<vmem>>, vector<18x16x16xf32>
    tpu.vector_store %arg8[%c0_9, %c1, %c0_10], %10 {strides = array<i32>} : memref<18x18x16xf32, #tpu.memory_space<vmem>>, vector<18x16x16xf32>,
    %cst_11 = arith.constant 0.000000e+00 : f32
    %12 = vector.broadcast %cst_11 : f32 to vector<18x1x16xf32>
    %c0_12 = arith.constant 0 : index
    %c0_13 = arith.constant 0 : index
    %c0_14 = arith.constant 0 : index
    %13 = vector.load %arg8[%c0_12, %c0_13, %c0_14] : memref<18x18x16xf32, #tpu.memory_space<vmem>>, vector<18x1x16xf32>
    tpu.vector_store %arg8[%c0_12, %c0_13, %c0_14], %12 {strides = array<i32>} : memref<18x18x16xf32, #tpu.memory_space<vmem>>, vector<18x1x16xf32>,
    %c0_15 = arith.constant 0 : index
    %c17 = arith.constant 17 : index
    %c0_16 = arith.constant 0 : index
    %14 = vector.load %arg8[%c0_15, %c17, %c0_16] : memref<18x18x16xf32, #tpu.memory_space<vmem>>, vector<18x1x16xf32>
    tpu.vector_store %arg8[%c0_15, %c17, %c0_16], %12 {strides = array<i32>} : memref<18x18x16xf32, #tpu.memory_space<vmem>>, vector<18x1x16xf32>,
    %c0_i32 = arith.constant 0 : i32
    %15 = arith.cmpi eq, %arg1, %c0_i32 : i32
    %16 = arith.extui %15 : i1 to i32
    %c0_i32_17 = arith.constant 0 : i32
    %17 = arith.cmpi ne, %16, %c0_i32_17 : i32
    scf.if %17 {
      %cst_150 = arith.constant 0.000000e+00 : f32
      %127 = vector.broadcast %cst_150 : f32 to vector<18x16xf32>
      %c0_151 = arith.constant 0 : index
      %c0_152 = arith.constant 0 : index
      %c0_153 = arith.constant 0 : index
      %128 = vector.load %arg8[%c0_151, %c0_152, %c0_153] : memref<18x18x16xf32, #tpu.memory_space<vmem>>, vector<1x18x16xf32>
      %129 = vector.shape_cast %128 : vector<1x18x16xf32> to vector<18x16xf32>
      %130 = vector.shape_cast %127 : vector<18x16xf32> to vector<1x18x16xf32>
      tpu.vector_store %arg8[%c0_151, %c0_152, %c0_153], %130 {strides = array<i32>} : memref<18x18x16xf32, #tpu.memory_space<vmem>>, vector<1x18x16xf32>,
    } else {
    }
    %c0_i32_18 = arith.constant 0 : i32
    %18 = arith.cmpi eq, %arg1, %c0_i32_18 : i32
    %19 = arith.extui %18 : i1 to i32
    %c0_i32_19 = arith.constant 0 : i32
    %20 = arith.cmpi ne, %19, %c0_i32_19 : i32
    scf.if %20 {
      %cst_150 = arith.constant 0.000000e+00 : f32
      %127 = vector.broadcast %cst_150 : f32 to vector<18x16xf32>
      %c17_151 = arith.constant 17 : index
      %c0_152 = arith.constant 0 : index
      %c0_153 = arith.constant 0 : index
      %128 = vector.load %arg8[%c17_151, %c0_152, %c0_153] : memref<18x18x16xf32, #tpu.memory_space<vmem>>, vector<1x18x16xf32>
      %129 = vector.shape_cast %128 : vector<1x18x16xf32> to vector<18x16xf32>
      %130 = vector.shape_cast %127 : vector<18x16xf32> to vector<1x18x16xf32>
      tpu.vector_store %arg8[%c17_151, %c0_152, %c0_153], %130 {strides = array<i32>} : memref<18x18x16xf32, #tpu.memory_space<vmem>>, vector<1x18x16xf32>,
    } else {
    }
    %21 = vector.extract_strided_slice %1 {offsets = [1, 0, 0], sizes = [16, 16, 4], strides = [1, 1, 1]} : vector<18x16x4xf32> to vector<16x16x4xf32>
    %22 = vector.shape_cast %21 : vector<16x16x4xf32> to vector<256x4xf32>
    %c0_20 = arith.constant 0 : index
    %c0_21 = arith.constant 0 : index
    %23 = vector.load %arg6[%c0_20, %c0_21] : memref<1x4xf32, #tpu.memory_space<vmem>>, vector<1x4xf32>
    %24 = vector.broadcast %23 : vector<1x4xf32> to vector<256x4xf32>
    %25 = arith.addf %22, %24 : vector<256x4xf32>
    %26 = tpu.concatenate %25, %25 in 1 : vector<256x4xf32>, vector<256x4xf32> -> vector<256x8xf32>
    %c0_22 = arith.constant 0 : index
    %c0_23 = arith.constant 0 : index
    %c12 = arith.constant 12 : index
    %27 = vector.load %arg8[%c0_22, %c0_23, %c12] : memref<18x18x16xf32, #tpu.memory_space<vmem>>, vector<16x16x4xf32>
    %28 = vector.shape_cast %27 : vector<16x16x4xf32> to vector<256x4xf32>
    %c0_24 = arith.constant 0 : index
    %c1_25 = arith.constant 1 : index
    %c8 = arith.constant 8 : index
    %29 = vector.load %arg8[%c0_24, %c1_25, %c8] : memref<18x18x16xf32, #tpu.memory_space<vmem>>, vector<16x16x4xf32>
    %30 = vector.shape_cast %29 : vector<16x16x4xf32> to vector<256x4xf32>
    %c0_26 = arith.constant 0 : index
    %c1_27 = arith.constant 1 : index
    %c12_28 = arith.constant 12 : index
    %31 = vector.load %arg8[%c0_26, %c1_27, %c12_28] : memref<18x18x16xf32, #tpu.memory_space<vmem>>, vector<16x16x4xf32>
    %32 = vector.shape_cast %31 : vector<16x16x4xf32> to vector<256x4xf32>
    %c1_29 = arith.constant 1 : index
    %c0_30 = arith.constant 0 : index
    %c4 = arith.constant 4 : index
    %33 = vector.load %arg8[%c1_29, %c0_30, %c4] : memref<18x18x16xf32, #tpu.memory_space<vmem>>, vector<16x16x4xf32>
    %34 = vector.shape_cast %33 : vector<16x16x4xf32> to vector<256x4xf32>
    %c1_31 = arith.constant 1 : index
    %c1_32 = arith.constant 1 : index
    %c0_33 = arith.constant 0 : index
    %35 = vector.load %arg8[%c1_31, %c1_32, %c0_33] : memref<18x18x16xf32, #tpu.memory_space<vmem>>, vector<16x16x4xf32>
    %36 = vector.shape_cast %35 : vector<16x16x4xf32> to vector<256x4xf32>
    %c1_34 = arith.constant 1 : index
    %c1_35 = arith.constant 1 : index
    %c4_36 = arith.constant 4 : index
    %37 = vector.load %arg8[%c1_34, %c1_35, %c4_36] : memref<18x18x16xf32, #tpu.memory_space<vmem>>, vector<16x16x4xf32>
    %38 = vector.shape_cast %37 : vector<16x16x4xf32> to vector<256x4xf32>
    %c1_37 = arith.constant 1 : index
    %c0_38 = arith.constant 0 : index
    %c12_39 = arith.constant 12 : index
    %39 = vector.load %arg8[%c1_37, %c0_38, %c12_39] : memref<18x18x16xf32, #tpu.memory_space<vmem>>, vector<16x16x4xf32>
    %40 = vector.shape_cast %39 : vector<16x16x4xf32> to vector<256x4xf32>
    %c1_40 = arith.constant 1 : index
    %c1_41 = arith.constant 1 : index
    %c8_42 = arith.constant 8 : index
    %41 = vector.load %arg8[%c1_40, %c1_41, %c8_42] : memref<18x18x16xf32, #tpu.memory_space<vmem>>, vector<16x16x4xf32>
    %42 = vector.shape_cast %41 : vector<16x16x4xf32> to vector<256x4xf32>
    %c1_43 = arith.constant 1 : index
    %c1_44 = arith.constant 1 : index
    %c12_45 = arith.constant 12 : index
    %43 = vector.load %arg8[%c1_43, %c1_44, %c12_45] : memref<18x18x16xf32, #tpu.memory_space<vmem>>, vector<16x16x4xf32>
    %44 = vector.shape_cast %43 : vector<16x16x4xf32> to vector<256x4xf32>
    %45 = tpu.concatenate %28, %30, %32, %34, %36, %38, %40, %42, %44 in 1 : vector<256x4xf32>, vector<256x4xf32>, vector<256x4xf32>, vector<256x4xf32>, vector<256x4xf32>, vector<256x4xf32>, vector<256x4xf32>, vector<256x4xf32>, vector<256x4xf32> -> vector<256x36xf32>
    %c0_46 = arith.constant 0 : index
    %c0_47 = arith.constant 0 : index
    %46 = vector.load %arg5[%c0_46, %c0_47] : memref<36x4xf32, #tpu.memory_space<vmem>>, vector<36x4xf32>
    %cst_48 = arith.constant dense<0.000000e+00> : vector<256x4xf32>
    %47 = tpu.matmul %45, %46, %cst_48 {dimension_numbers = #tpu.dot_dimension_numbers<[1], [0], [0], [1], [0, 0, 1, 1], [], []>} : vector<256x36xf32>, vector<36x4xf32>, vector<256x4xf32> -> vector<256x4xf32>
    %c0_49 = arith.constant 0 : index
    %c1_50 = arith.constant 1 : index
    %c8_51 = arith.constant 8 : index
    %48 = vector.load %arg8[%c0_49, %c1_50, %c8_51] : memref<18x18x16xf32, #tpu.memory_space<vmem>>, vector<16x16x4xf32>
    %49 = vector.shape_cast %48 : vector<16x16x4xf32> to vector<256x4xf32>
    %c0_52 = arith.constant 0 : index
    %c1_53 = arith.constant 1 : index
    %c12_54 = arith.constant 12 : index
    %50 = vector.load %arg8[%c0_52, %c1_53, %c12_54] : memref<18x18x16xf32, #tpu.memory_space<vmem>>, vector<16x16x4xf32>
    %51 = vector.shape_cast %50 : vector<16x16x4xf32> to vector<256x4xf32>
    %c0_55 = arith.constant 0 : index
    %c2 = arith.constant 2 : index
    %c8_56 = arith.constant 8 : index
    %52 = vector.load %arg8[%c0_55, %c2, %c8_56] : memref<18x18x16xf32, #tpu.memory_space<vmem>>, vector<16x16x4xf32>
    %53 = vector.shape_cast %52 : vector<16x16x4xf32> to vector<256x4xf32>
    %c1_57 = arith.constant 1 : index
    %c1_58 = arith.constant 1 : index
    %c0_59 = arith.constant 0 : index
    %54 = vector.load %arg8[%c1_57, %c1_58, %c0_59] : memref<18x18x16xf32, #tpu.memory_space<vmem>>, vector<16x16x4xf32>
    %55 = vector.shape_cast %54 : vector<16x16x4xf32> to vector<256x4xf32>
    %c1_60 = arith.constant 1 : index
    %c1_61 = arith.constant 1 : index
    %c4_62 = arith.constant 4 : index
    %56 = vector.load %arg8[%c1_60, %c1_61, %c4_62] : memref<18x18x16xf32, #tpu.memory_space<vmem>>, vector<16x16x4xf32>
    %57 = vector.shape_cast %56 : vector<16x16x4xf32> to vector<256x4xf32>
    %c1_63 = arith.constant 1 : index
    %c2_64 = arith.constant 2 : index
    %c0_65 = arith.constant 0 : index
    %58 = vector.load %arg8[%c1_63, %c2_64, %c0_65] : memref<18x18x16xf32, #tpu.memory_space<vmem>>, vector<16x16x4xf32>
    %59 = vector.shape_cast %58 : vector<16x16x4xf32> to vector<256x4xf32>
    %c1_66 = arith.constant 1 : index
    %c1_67 = arith.constant 1 : index
    %c8_68 = arith.constant 8 : index
    %60 = vector.load %arg8[%c1_66, %c1_67, %c8_68] : memref<18x18x16xf32, #tpu.memory_space<vmem>>, vector<16x16x4xf32>
    %61 = vector.shape_cast %60 : vector<16x16x4xf32> to vector<256x4xf32>
    %c1_69 = arith.constant 1 : index
    %c1_70 = arith.constant 1 : index
    %c12_71 = arith.constant 12 : index
    %62 = vector.load %arg8[%c1_69, %c1_70, %c12_71] : memref<18x18x16xf32, #tpu.memory_space<vmem>>, vector<16x16x4xf32>
    %63 = vector.shape_cast %62 : vector<16x16x4xf32> to vector<256x4xf32>
    %c1_72 = arith.constant 1 : index
    %c2_73 = arith.constant 2 : index
    %c8_74 = arith.constant 8 : index
    %64 = vector.load %arg8[%c1_72, %c2_73, %c8_74] : memref<18x18x16xf32, #tpu.memory_space<vmem>>, vector<16x16x4xf32>
    %65 = vector.shape_cast %64 : vector<16x16x4xf32> to vector<256x4xf32>
    %66 = tpu.concatenate %49, %51, %53, %55, %57, %59, %61, %63, %65 in 1 : vector<256x4xf32>, vector<256x4xf32>, vector<256x4xf32>, vector<256x4xf32>, vector<256x4xf32>, vector<256x4xf32>, vector<256x4xf32>, vector<256x4xf32>, vector<256x4xf32> -> vector<256x36xf32>
    %c0_75 = arith.constant 0 : index
    %c0_76 = arith.constant 0 : index
    %67 = vector.load %arg5[%c0_75, %c0_76] : memref<36x4xf32, #tpu.memory_space<vmem>>, vector<36x4xf32>
    %cst_77 = arith.constant dense<0.000000e+00> : vector<256x4xf32>
    %68 = tpu.matmul %66, %67, %cst_77 {dimension_numbers = #tpu.dot_dimension_numbers<[1], [0], [0], [1], [0, 0, 1, 1], [], []>} : vector<256x36xf32>, vector<36x4xf32>, vector<256x4xf32> -> vector<256x4xf32>
    %69 = tpu.concatenate %47, %68 in 1 : vector<256x4xf32>, vector<256x4xf32> -> vector<256x8xf32>
    %70 = arith.addf %69, %26 : vector<256x8xf32>
    %cst_78 = arith.constant 0.000000e+00 : f32
    %71 = vector.broadcast %cst_78 : f32 to vector<256x8xf32>
    %72 = arith.maximumf %70, %71 : vector<256x8xf32>
    %73 = vector.shape_cast %72 : vector<256x8xf32> to vector<16x16x8xf32>
    %c0_79 = arith.constant 0 : index
    %c0_80 = arith.constant 0 : index
    %c0_81 = arith.constant 0 : index
    %c0_82 = arith.constant 0 : index
    %c0_83 = arith.constant 0 : index
    %74 = vector.load %arg7[%c0_79, %c0_80, %c0_81, %c0_82, %c0_83] : memref<1x16x2x16x8xf32, #tpu.memory_space<vmem>>, vector<1x16x1x16x8xf32>
    %75 = vector.shape_cast %74 : vector<1x16x1x16x8xf32> to vector<16x16x8xf32>
    %76 = vector.shape_cast %73 : vector<16x16x8xf32> to vector<1x16x1x16x8xf32>
    tpu.vector_store %arg7[%c0_79, %c0_80, %c0_81, %c0_82, %c0_83], %76 {strides = array<i32>} : memref<1x16x2x16x8xf32, #tpu.memory_space<vmem>>, vector<1x16x1x16x8xf32>,
    %c1_84 = arith.constant 1 : index
    %c0_85 = arith.constant 0 : index
    %c4_86 = arith.constant 4 : index
    %77 = vector.load %arg8[%c1_84, %c0_85, %c4_86] : memref<18x18x16xf32, #tpu.memory_space<vmem>>, vector<16x16x4xf32>
    %78 = vector.shape_cast %77 : vector<16x16x4xf32> to vector<256x4xf32>
    %c1_87 = arith.constant 1 : index
    %c1_88 = arith.constant 1 : index
    %c0_89 = arith.constant 0 : index
    %79 = vector.load %arg8[%c1_87, %c1_88, %c0_89] : memref<18x18x16xf32, #tpu.memory_space<vmem>>, vector<16x16x4xf32>
    %80 = vector.shape_cast %79 : vector<16x16x4xf32> to vector<256x4xf32>
    %c1_90 = arith.constant 1 : index
    %c1_91 = arith.constant 1 : index
    %c4_92 = arith.constant 4 : index
    %81 = vector.load %arg8[%c1_90, %c1_91, %c4_92] : memref<18x18x16xf32, #tpu.memory_space<vmem>>, vector<16x16x4xf32>
    %82 = vector.shape_cast %81 : vector<16x16x4xf32> to vector<256x4xf32>
    %c1_93 = arith.constant 1 : index
    %c0_94 = arith.constant 0 : index
    %c12_95 = arith.constant 12 : index
    %83 = vector.load %arg8[%c1_93, %c0_94, %c12_95] : memref<18x18x16xf32, #tpu.memory_space<vmem>>, vector<16x16x4xf32>
    %84 = vector.shape_cast %83 : vector<16x16x4xf32> to vector<256x4xf32>
    %c1_96 = arith.constant 1 : index
    %c1_97 = arith.constant 1 : index
    %c8_98 = arith.constant 8 : index
    %85 = vector.load %arg8[%c1_96, %c1_97, %c8_98] : memref<18x18x16xf32, #tpu.memory_space<vmem>>, vector<16x16x4xf32>
    %86 = vector.shape_cast %85 : vector<16x16x4xf32> to vector<256x4xf32>
    %c1_99 = arith.constant 1 : index
    %c1_100 = arith.constant 1 : index
    %c12_101 = arith.constant 12 : index
    %87 = vector.load %arg8[%c1_99, %c1_100, %c12_101] : memref<18x18x16xf32, #tpu.memory_space<vmem>>, vector<16x16x4xf32>
    %88 = vector.shape_cast %87 : vector<16x16x4xf32> to vector<256x4xf32>
    %c2_102 = arith.constant 2 : index
    %c0_103 = arith.constant 0 : index
    %c4_104 = arith.constant 4 : index
    %89 = vector.load %arg8[%c2_102, %c0_103, %c4_104] : memref<18x18x16xf32, #tpu.memory_space<vmem>>, vector<16x16x4xf32>
    %90 = vector.shape_cast %89 : vector<16x16x4xf32> to vector<256x4xf32>
    %c2_105 = arith.constant 2 : index
    %c1_106 = arith.constant 1 : index
    %c0_107 = arith.constant 0 : index
    %91 = vector.load %arg8[%c2_105, %c1_106, %c0_107] : memref<18x18x16xf32, #tpu.memory_space<vmem>>, vector<16x16x4xf32>
    %92 = vector.shape_cast %91 : vector<16x16x4xf32> to vector<256x4xf32>
    %c2_108 = arith.constant 2 : index
    %c1_109 = arith.constant 1 : index
    %c4_110 = arith.constant 4 : index
    %93 = vector.load %arg8[%c2_108, %c1_109, %c4_110] : memref<18x18x16xf32, #tpu.memory_space<vmem>>, vector<16x16x4xf32>
    %94 = vector.shape_cast %93 : vector<16x16x4xf32> to vector<256x4xf32>
    %95 = tpu.concatenate %78, %80, %82, %84, %86, %88, %90, %92, %94 in 1 : vector<256x4xf32>, vector<256x4xf32>, vector<256x4xf32>, vector<256x4xf32>, vector<256x4xf32>, vector<256x4xf32>, vector<256x4xf32>, vector<256x4xf32>, vector<256x4xf32> -> vector<256x36xf32>
    %c0_111 = arith.constant 0 : index
    %c0_112 = arith.constant 0 : index
    %96 = vector.load %arg5[%c0_111, %c0_112] : memref<36x4xf32, #tpu.memory_space<vmem>>, vector<36x4xf32>
    %cst_113 = arith.constant dense<0.000000e+00> : vector<256x4xf32>
    %97 = tpu.matmul %95, %96, %cst_113 {dimension_numbers = #tpu.dot_dimension_numbers<[1], [0], [0], [1], [0, 0, 1, 1], [], []>} : vector<256x36xf32>, vector<36x4xf32>, vector<256x4xf32> -> vector<256x4xf32>
    %c1_114 = arith.constant 1 : index
    %c1_115 = arith.constant 1 : index
    %c0_116 = arith.constant 0 : index
    %98 = vector.load %arg8[%c1_114, %c1_115, %c0_116] : memref<18x18x16xf32, #tpu.memory_space<vmem>>, vector<16x16x4xf32>
    %99 = vector.shape_cast %98 : vector<16x16x4xf32> to vector<256x4xf32>
    %c1_117 = arith.constant 1 : index
    %c1_118 = arith.constant 1 : index
    %c4_119 = arith.constant 4 : index
    %100 = vector.load %arg8[%c1_117, %c1_118, %c4_119] : memref<18x18x16xf32, #tpu.memory_space<vmem>>, vector<16x16x4xf32>
    %101 = vector.shape_cast %100 : vector<16x16x4xf32> to vector<256x4xf32>
    %c1_120 = arith.constant 1 : index
    %c2_121 = arith.constant 2 : index
    %c0_122 = arith.constant 0 : index
    %102 = vector.load %arg8[%c1_120, %c2_121, %c0_122] : memref<18x18x16xf32, #tpu.memory_space<vmem>>, vector<16x16x4xf32>
    %103 = vector.shape_cast %102 : vector<16x16x4xf32> to vector<256x4xf32>
    %c1_123 = arith.constant 1 : index
    %c1_124 = arith.constant 1 : index
    %c8_125 = arith.constant 8 : index
    %104 = vector.load %arg8[%c1_123, %c1_124, %c8_125] : memref<18x18x16xf32, #tpu.memory_space<vmem>>, vector<16x16x4xf32>
    %105 = vector.shape_cast %104 : vector<16x16x4xf32> to vector<256x4xf32>
    %c1_126 = arith.constant 1 : index
    %c1_127 = arith.constant 1 : index
    %c12_128 = arith.constant 12 : index
    %106 = vector.load %arg8[%c1_126, %c1_127, %c12_128] : memref<18x18x16xf32, #tpu.memory_space<vmem>>, vector<16x16x4xf32>
    %107 = vector.shape_cast %106 : vector<16x16x4xf32> to vector<256x4xf32>
    %c1_129 = arith.constant 1 : index
    %c2_130 = arith.constant 2 : index
    %c8_131 = arith.constant 8 : index
    %108 = vector.load %arg8[%c1_129, %c2_130, %c8_131] : memref<18x18x16xf32, #tpu.memory_space<vmem>>, vector<16x16x4xf32>
    %109 = vector.shape_cast %108 : vector<16x16x4xf32> to vector<256x4xf32>
    %c2_132 = arith.constant 2 : index
    %c1_133 = arith.constant 1 : index
    %c0_134 = arith.constant 0 : index
    %110 = vector.load %arg8[%c2_132, %c1_133, %c0_134] : memref<18x18x16xf32, #tpu.memory_space<vmem>>, vector<16x16x4xf32>
    %111 = vector.shape_cast %110 : vector<16x16x4xf32> to vector<256x4xf32>
    %c2_135 = arith.constant 2 : index
    %c1_136 = arith.constant 1 : index
    %c4_137 = arith.constant 4 : index
    %112 = vector.load %arg8[%c2_135, %c1_136, %c4_137] : memref<18x18x16xf32, #tpu.memory_space<vmem>>, vector<16x16x4xf32>
    %113 = vector.shape_cast %112 : vector<16x16x4xf32> to vector<256x4xf32>
    %c2_138 = arith.constant 2 : index
    %c2_139 = arith.constant 2 : index
    %c0_140 = arith.constant 0 : index
    %114 = vector.load %arg8[%c2_138, %c2_139, %c0_140] : memref<18x18x16xf32, #tpu.memory_space<vmem>>, vector<16x16x4xf32>
    %115 = vector.shape_cast %114 : vector<16x16x4xf32> to vector<256x4xf32>
    %116 = tpu.concatenate %99, %101, %103, %105, %107, %109, %111, %113, %115 in 1 : vector<256x4xf32>, vector<256x4xf32>, vector<256x4xf32>, vector<256x4xf32>, vector<256x4xf32>, vector<256x4xf32>, vector<256x4xf32>, vector<256x4xf32>, vector<256x4xf32> -> vector<256x36xf32>
    %c0_141 = arith.constant 0 : index
    %c0_142 = arith.constant 0 : index
    %117 = vector.load %arg5[%c0_141, %c0_142] : memref<36x4xf32, #tpu.memory_space<vmem>>, vector<36x4xf32>
    %cst_143 = arith.constant dense<0.000000e+00> : vector<256x4xf32>
    %118 = tpu.matmul %116, %117, %cst_143 {dimension_numbers = #tpu.dot_dimension_numbers<[1], [0], [0], [1], [0, 0, 1, 1], [], []>} : vector<256x36xf32>, vector<36x4xf32>, vector<256x4xf32> -> vector<256x4xf32>
    %119 = tpu.concatenate %97, %118 in 1 : vector<256x4xf32>, vector<256x4xf32> -> vector<256x8xf32>
    %120 = arith.addf %119, %26 : vector<256x8xf32>
    %cst_144 = arith.constant 0.000000e+00 : f32
    %121 = vector.broadcast %cst_144 : f32 to vector<256x8xf32>
    %122 = arith.maximumf %120, %121 : vector<256x8xf32>
    %123 = vector.shape_cast %122 : vector<256x8xf32> to vector<16x16x8xf32>
    %c0_145 = arith.constant 0 : index
    %c0_146 = arith.constant 0 : index
    %c1_147 = arith.constant 1 : index
    %c0_148 = arith.constant 0 : index
    %c0_149 = arith.constant 0 : index
    %124 = vector.load %arg7[%c0_145, %c0_146, %c1_147, %c0_148, %c0_149] : memref<1x16x2x16x8xf32, #tpu.memory_space<vmem>>, vector<1x16x1x16x8xf32>
    %125 = vector.shape_cast %124 : vector<1x16x1x16x8xf32> to vector<16x16x8xf32>
    %126 = vector.shape_cast %123 : vector<16x16x8xf32> to vector<1x16x1x16x8xf32>
    tpu.vector_store %arg7[%c0_145, %c0_146, %c1_147, %c0_148, %c0_149], %126 {strides = array<i32>} : memref<1x16x2x16x8xf32, #tpu.memory_space<vmem>>, vector<1x16x1x16x8xf32>,
    return
  }
  func.func @transform_0(%arg0: i32, %arg1: i32) -> (i32, i32, i32, i32, i32) {
    %c0_i32 = arith.constant 0 : i32
    %c0_i32_0 = arith.constant 0 : i32
    %c0_i32_1 = arith.constant 0 : i32
    %c0_i32_2 = arith.constant 0 : i32
    return %arg0, %arg1, %c0_i32, %c0_i32_0, %c0_i32_1 : i32, i32, i32, i32, i32
  }
  func.func @transform_1(%arg0: i32, %arg1: i32) -> (i32, i32) {
    %c0_i32 = arith.constant 0 : i32
    %c0_i32_0 = arith.constant 0 : i32
    %c0_i32_1 = arith.constant 0 : i32
    return %c0_i32, %c0_i32_0 : i32, i32
  }
  func.func @transform_2(%arg0: i32, %arg1: i32) -> (i32, i32) {
    %c0_i32 = arith.constant 0 : i32
    %c0_i32_0 = arith.constant 0 : i32
    %c0_i32_1 = arith.constant 0 : i32
    return %c0_i32, %c0_i32_0 : i32, i32
  }
  func.func @transform_3(%arg0: i32, %arg1: i32) -> (i32, i32) {
    %c0_i32 = arith.constant 0 : i32
    %c0_i32_0 = arith.constant 0 : i32
    %c0_i32_1 = arith.constant 0 : i32
    return %c0_i32, %c0_i32_0 : i32, i32
  }
  func.func @transform_4(%arg0: i32, %arg1: i32) -> (i32, i32) {
    %c0_i32 = arith.constant 0 : i32
    %c0_i32_0 = arith.constant 0 : i32
    %c0_i32_1 = arith.constant 0 : i32
    return %c0_i32, %c0_i32_0 : i32, i32
  }
  func.func @transform_5(%arg0: i32, %arg1: i32) -> (i32, i32, i32, i32, i32) {
    %c0_i32 = arith.constant 0 : i32
    %c0_i32_0 = arith.constant 0 : i32
    %c0_i32_1 = arith.constant 0 : i32
    %c0_i32_2 = arith.constant 0 : i32
    return %arg0, %arg1, %c0_i32, %c0_i32_0, %c0_i32_1 : i32, i32, i32, i32, i32
  }
}

</mosaic_0001>

<llo_original>
// kernel: tpu_custom_call.1
$region0: #{tpu_custom_call.1}
  #allocation0 [shape = 'u32[]', space=smem, size = 0x4, offset = 0x4, fixed_abs, tag = 'smem constant byte address 0x4 - core index']
  #allocation1 [shape = 'u32[144,128]{1,0:T(1,128)}', space=vmem, size = 0x12000, scoped, tag = 'internal scratch']
  #allocation2 [shape = 'f32[18,18,16]{2,1,0:T(8,128)}', space=vmem, size = 0x36000, scoped, tag = 'scratch operand']
  %s0 = inlined_call_operand.vmem [shape: f32[2,1,18,16,4], index: 0, kind: input, shape index: {}]
  %s1 = inlined_call_operand.vmem [shape: f32[4,16], index: 1, kind: input, shape index: {}]
  %s2 = inlined_call_operand.vmem [shape: f32[1,16], index: 2, kind: input, shape index: {}]
  %s3 = inlined_call_operand.vmem [shape: f32[36,4], index: 3, kind: input, shape index: {}]
  %s4 = inlined_call_operand.vmem [shape: f32[1,4], index: 4, kind: input, shape index: {}]
  %s5 = inlined_call_operand.vmem [shape: f32[2,16,2,16,8], index: 5, kind: output, shape index: {}]
  %s6 = sld [smem:[#allocation0]]
  $region57: #{tpu_custom_call.1} parent=0
    _
  %s8 = ssub.s32 1, %s6
  %s9 = scalar_select 0, %s8, %s6
  loop: start=0, step=1, limit=4
  $region2: #{tpu_custom_call.1} parent=0 // loop_pre_header
    _
  $region3: #{tpu_custom_call.1} parent=0 // loop_header
    %s11 = sphi 0, %s15
    %p12 = scmp.ge.s32.totalorder %s11, 4
    %s18 = sphi 0, %s30
    %s19 = sphi 0, %s26
    %s20 = sphi 0, %s18
    %s21 = sphi 0, %s19
    %s22 = sphi 0, %s20
    %s23 = sphi 0, %s21
    %s35 = sphi 0, %s37
    %s38 = sphi 0, %s35
    %s39 = sphi 0, %s38
    %s55 = sphi 0, %s39
    %s59 = sphi 0, %s59
    %s61 = sphi 0, %s59
    %s62 = sphi 0, %s61
    %s76 = sphi 0, %s62
    %s80 = sphi 0, %s80
    %s82 = sphi 0, %s80
    %s83 = sphi 0, %s82
    %s97 = sphi 0, %s83
    %s101 = sphi 0, %s101
    %s103 = sphi 0, %s101
    %s104 = sphi 0, %s103
    %s118 = sphi 0, %s104
    %s122 = sphi 0, %s122
    %s124 = sphi 0, %s122
    %s125 = sphi 0, %s124
    %s139 = sphi 0, %s125
    %s147 = sphi 0, %s149
    %s150 = sphi 0, %s147
    %s151 = sphi 0, %s150
    %s167 = sphi 0, %s151
  $region4: #{tpu_custom_call.1} parent=0 // loop_header_branch
    %14 = sbr.rel (%p12) target = $region8
  $region5: #{tpu_custom_call.1} parent=0 // loop_body
    %s16 = ssub.s32 %s11, 1
    %s17 = ssub.s32 %s11, 2
    %s24 = sadd.s32 1, %s19
    %p25 = scmp.ge.s32.totalorder %s24, 1
    %s26 = scalar_select %p25, 0, %s24
    %s27 = sadd.s32 1, %s18
    %s28 = scalar_select %p25, %s27, %s18
    %p29 = scmp.ge.s32.totalorder %s28, 2
    %s30 = scalar_select %p29, 0, %s28
    %s31 = ssub.s32 %s18, %s30
    %s32 = ssub.s32 %s19, %s26
    %s33 = sor.u32 %s31, %s32
    %p34 = scmp.eq.s32.totalorder %s33, 0
    %s36 = sadd.s32 %s35, 1
    %s37 = scalar_select %p34, %s35, %s36
    %p40 = pneg %p34
    %p41 = scmp.eq.s32.totalorder %s11, 1
    %p42 = por %p40, %p41
    %p43 = scmp.ne.s32.totalorder %s35, %s38
    %p44 = scmp.eq.s32.totalorder %s11, 0
    %p45 = por %p43, %p44
    %p46 = scmp.ne.s32.totalorder %s35, %s38
    %p47 = scmp.eq.s32.totalorder %s16, 1
    %p48 = por %p46, %p47
    %p49 = scmp.ne.s32.totalorder %s38, %s39
    %p50 = scmp.eq.s32.totalorder %s16, 0
    %p51 = por %p49, %p50
    %p52 = scmp.ne.s32.totalorder %s38, %s39
    %p53 = scmp.eq.s32.totalorder %s17, 1
    %p54 = por %p52, %p53
    %p56 = scmp.ne.s32.totalorder %s39, %s55
    %p57 = scmp.eq.s32.totalorder %s17, 0
    %p58 = por %p56, %p57
    %s60 = sadd.s32 %s59, 1
    %p63 = scmp.eq.s32.totalorder %s11, 1
    %p64 = scmp.ne.s32.totalorder %s59, %s61
    %p65 = scmp.eq.s32.totalorder %s11, 0
    %p66 = por %p64, %p65
    %p67 = scmp.ne.s32.totalorder %s59, %s61
    %p68 = scmp.eq.s32.totalorder %s16, 1
    %p69 = por %p67, %p68
    %p70 = scmp.ne.s32.totalorder %s61, %s62
    %p71 = scmp.eq.s32.totalorder %s16, 0
    %p72 = por %p70, %p71
    %p73 = scmp.ne.s32.totalorder %s61, %s62
    %p74 = scmp.eq.s32.totalorder %s17, 1
    %p75 = por %p73, %p74
    %p77 = scmp.ne.s32.totalorder %s62, %s76
    %p78 = scmp.eq.s32.totalorder %s17, 0
    %p79 = por %p77, %p78
    %s81 = sadd.s32 %s80, 1
    %p84 = scmp.eq.s32.totalorder %s11, 1
    %p85 = scmp.ne.s32.totalorder %s80, %s82
    %p86 = scmp.eq.s32.totalorder %s11, 0
    %p87 = por %p85, %p86
    %p88 = scmp.ne.s32.totalorder %s80, %s82
    %p89 = scmp.eq.s32.totalorder %s16, 1
    %p90 = por %p88, %p89
    %p91 = scmp.ne.s32.totalorder %s82, %s83
    %p92 = scmp.eq.s32.totalorder %s16, 0
    %p93 = por %p91, %p92
    %p94 = scmp.ne.s32.totalorder %s82, %s83
    %p95 = scmp.eq.s32.totalorder %s17, 1
    %p96 = por %p94, %p95
    %p98 = scmp.ne.s32.totalorder %s83, %s97
    %p99 = scmp.eq.s32.totalorder %s17, 0
    %p100 = por %p98, %p99
    %s102 = sadd.s32 %s101, 1
    %p105 = scmp.eq.s32.totalorder %s11, 1
    %p106 = scmp.ne.s32.totalorder %s101, %s103
    %p107 = scmp.eq.s32.totalorder %s11, 0
    %p108 = por %p106, %p107
    %p109 = scmp.ne.s32.totalorder %s101, %s103
    %p110 = scmp.eq.s32.totalorder %s16, 1
    %p111 = por %p109, %p110
    %p112 = scmp.ne.s32.totalorder %s103, %s104
    %p113 = scmp.eq.s32.totalorder %s16, 0
    %p114 = por %p112, %p113
    %p115 = scmp.ne.s32.totalorder %s103, %s104
    %p116 = scmp.eq.s32.totalorder %s17, 1
    %p117 = por %p115, %p116
    %p119 = scmp.ne.s32.totalorder %s104, %s118
    %p120 = scmp.eq.s32.totalorder %s17, 0
    %p121 = por %p119, %p120
    %s123 = sadd.s32 %s122, 1
    %p126 = scmp.eq.s32.totalorder %s11, 1
    %p127 = scmp.ne.s32.totalorder %s122, %s124
    %p128 = scmp.eq.s32.totalorder %s11, 0
    %p129 = por %p127, %p128
    %p130 = scmp.ne.s32.totalorder %s122, %s124
    %p131 = scmp.eq.s32.totalorder %s16, 1
    %p132 = por %p130, %p131
    %p133 = scmp.ne.s32.totalorder %s124, %s125
    %p134 = scmp.eq.s32.totalorder %s16, 0
    %p135 = por %p133, %p134
    %p136 = scmp.ne.s32.totalorder %s124, %s125
    %p137 = scmp.eq.s32.totalorder %s17, 1
    %p138 = por %p136, %p137
    %p140 = scmp.ne.s32.totalorder %s125, %s139
    %p141 = scmp.eq.s32.totalorder %s17, 0
    %p142 = por %p140, %p141
    %s143 = ssub.s32 %s18, %s30
    %s144 = ssub.s32 %s19, %s26
    %s145 = sor.u32 %s143, %s144
    %p146 = scmp.eq.s32.totalorder %s145, 0
    %s148 = sadd.s32 %s147, 1
    %s149 = scalar_select %p146, %s147, %s148
    %p152 = pneg %p146
    %p153 = scmp.eq.s32.totalorder %s11, 1
    %p154 = por %p152, %p153
    %p155 = scmp.ne.s32.totalorder %s147, %s150
    %p156 = scmp.eq.s32.totalorder %s11, 0
    %p157 = por %p155, %p156
    %p158 = scmp.ne.s32.totalorder %s147, %s150
    %p159 = scmp.eq.s32.totalorder %s16, 1
    %p160 = por %p158, %p159
    %p161 = scmp.ne.s32.totalorder %s150, %s151
    %p162 = scmp.eq.s32.totalorder %s16, 0
    %p163 = por %p161, %p162
    %p164 = scmp.ne.s32.totalorder %s150, %s151
    %p165 = scmp.eq.s32.totalorder %s17, 1
    %p166 = por %p164, %p165
    %p168 = scmp.ne.s32.totalorder %s151, %s167
    %p169 = scmp.eq.s32.totalorder %s17, 0
    %p170 = por %p168, %p169
    %p171 = scmp.le.s32.totalorder 1, %s11
    %p172 = scmp.lt.s32.totalorder %s11, 3
    %p173 = pnand %p171, %p172
    %p174 = pneg %p173
    // Predicated region
    $region9: #{tpu_custom_call.1} parent=5 // pred_check
      _
    $region10: #{tpu_custom_call.1} parent=5 // pred_check_branch
      %176 = sbr.rel (%p173) target = $region12
    $region11: #{tpu_custom_call.1} parent=5 // pred_region
      %s177 = ssub.s32 %s11, 1
      // Predicated region
      $region13: #{tpu_custom_call.1} parent=11 // pred_check
        %p178 = pneg %p72
      $region14: #{tpu_custom_call.1} parent=11 // pred_check_branch
        %180 = sbr.rel (%p178) target = $region16
      $region15: #{tpu_custom_call.1} parent=11 // pred_region
        _
      $region16: #{tpu_custom_call.1} parent=11 // pred_fallthru
        _
      // Predicated region
      $region17: #{tpu_custom_call.1} parent=11 // pred_check
        %p181 = pneg %p93
      $region18: #{tpu_custom_call.1} parent=11 // pred_check_branch
        %183 = sbr.rel (%p181) target = $region20
      $region19: #{tpu_custom_call.1} parent=11 // pred_region
        _
      $region20: #{tpu_custom_call.1} parent=11 // pred_fallthru
        _
      // Predicated region
      $region21: #{tpu_custom_call.1} parent=11 // pred_check
        %p184 = pneg %p114
      $region22: #{tpu_custom_call.1} parent=11 // pred_check_branch
        %186 = sbr.rel (%p184) target = $region24
      $region23: #{tpu_custom_call.1} parent=11 // pred_region
        _
      $region24: #{tpu_custom_call.1} parent=11 // pred_fallthru
        _
      // Predicated region
      $region25: #{tpu_custom_call.1} parent=11 // pred_check
        %p187 = pneg %p135
      $region26: #{tpu_custom_call.1} parent=11 // pred_check_branch
        %189 = sbr.rel (%p187) target = $region28
      $region27: #{tpu_custom_call.1} parent=11 // pred_region
        _
      $region28: #{tpu_custom_call.1} parent=11 // pred_fallthru
        _
    $region12: #{tpu_custom_call.1} parent=5 // pred_fallthru
      _
    %p190 = scmp.lt.s32.totalorder %s11, 2
    // Predicated region
    $region29: #{tpu_custom_call.1} parent=5 // pred_check
      %p191 = pneg %p190
    $region30: #{tpu_custom_call.1} parent=5 // pred_check_branch
      %193 = sbr.rel (%p191) target = $region32
    $region31: #{tpu_custom_call.1} parent=5 // pred_region
      // Predicated region
      $region33: #{tpu_custom_call.1} parent=31 // pred_check
        %p194 = pneg %p45
      $region34: #{tpu_custom_call.1} parent=31 // pred_check_branch
        %196 = sbr.rel (%p194) target = $region36
      $region35: #{tpu_custom_call.1} parent=31 // pred_region
        %p197 = scmp.lt.s32.totalorder %s18, 1
        %s198 = scalar_select %p197, %s18, 1
        %p199 = scmp.lt.s32.totalorder %s19, 0
        %s200 = scalar_select %p199, %s19, 0
        %s201 = smul.addr %s200, 36
        %s202 = smul.addr %s198, 36
        %s203 = sadd.s32 %s201, %s202
        %s204 = smul.addr %s203, 8
        %s205 = scalar_lea.vmem %s0, %s204
      $region36: #{tpu_custom_call.1} parent=31 // pred_fallthru
        _
    $region32: #{tpu_custom_call.1} parent=5 // pred_fallthru
      _
    %p206 = scmp.le.s32.totalorder 1, %s11
    %p207 = scmp.lt.s32.totalorder %s11, 3
    %p208 = pnand %p206, %p207
    %p209 = pneg %p208
    // Predicated region
    $region37: #{tpu_custom_call.1} parent=5 // pred_check
      _
    $region38: #{tpu_custom_call.1} parent=5 // pred_check_branch
      %211 = sbr.rel (%p208) target = $region40
    $region39: #{tpu_custom_call.1} parent=5 // pred_region
      %s212 = ssub.s32 %s11, 1
      %p213 = scmp.lt.s32.totalorder %s20, 1
      %s214 = scalar_select %p213, %s20, 1
      %p215 = scmp.lt.s32.totalorder %s21, 0
      %s216 = scalar_select %p215, %s21, 0
      %s217 = smul.addr %s216, 36
      %s218 = smul.addr %s214, 36
      %s219 = sadd.s32 %s217, %s218
      %s220 = smul.addr %s219, 8
      %s221 = scalar_lea.vmem %s0, %s220
      %p222 = pneg %p51
      %p223 = pneg %p48
      %p224 = pneg %p72
      %p225 = pneg %p69
      %p226 = pneg %p93
      %p227 = pneg %p90
      %p228 = pneg %p114
      %p229 = pneg %p111
      %p230 = pneg %p135
      %p231 = pneg %p132
      %p232 = pneg %p163
      %p233 = pneg %p160
      %s234 = smul.u32 16, %s21
      %p235 = scmp.lt.s32.totalorder %s20, 1
      %s236 = scalar_select %p235, %s20, 1
      %p237 = scmp.lt.s32.totalorder %s234, 15
      %s238 = scalar_select %p237, %s234, 15
      %s239 = smul.addr %s238, 4
      %s240 = smul.addr %s236, 64
      %s241 = sadd.s32 %s239, %s240
      %s242 = smul.addr %s241, 8
      %s243 = scalar_lea.vmem %s5, %s242
      %p244 = scmp.lt.s32.totalorder %s20, 1
      %s245 = scalar_select %p244, %s20, 1
      %p246 = scmp.lt.s32.totalorder %s21, 0
      %s247 = scalar_select %p246, %s21, 0
      %s248 = smul.addr %s247, 36
      %s249 = smul.addr %s245, 36
      %s250 = sadd.s32 %s248, %s249
      %s251 = smul.addr %s250, 8
      %s252 = scalar_lea.vmem %s0, %s251
      %s253 = smul.u32 16, %s21
      %p254 = scmp.lt.s32.totalorder %s20, 1
      %s255 = scalar_select %p254, %s20, 1
      %p256 = scmp.lt.s32.totalorder %s253, 15
      %s257 = scalar_select %p256, %s253, 15
      %s258 = smul.addr %s257, 4
      %s259 = smul.addr %s255, 64
      %s260 = sadd.s32 %s258, %s259
      %s261 = smul.addr %s260, 8
      %s262 = scalar_lea.vmem %s5, %s261
      %s263 = smul.u32 16, %s21
      %v264 = vld [vmem:[%s252] sm:$0xff]
      %v265 = vld [vmem:[%s252 + $0x8] sm:$0xff]
      %v266 = vld [vmem:[%s252 + $0x10] sm:$0xff]
      %v267 = vld [vmem:[%s252 + $0x18] sm:$0xff]
      %v268 = vld [vmem:[%s252 + $0x20] sm:$0xff]
      %v269 = vld [vmem:[%s252 + $0x28] sm:$0xff]
      %v270 = vld [vmem:[%s252 + $0x30] sm:$0xff]
      %v271 = vld [vmem:[%s252 + $0x38] sm:$0xff]
      %v272 = vld [vmem:[%s252 + $0x40] sm:$0xff]
      %v273 = vld [vmem:[%s252 + $0x48] sm:$0xff]
      %v274 = vld [vmem:[%s252 + $0x50] sm:$0xff]
      %v275 = vld [vmem:[%s252 + $0x58] sm:$0xff]
      %v276 = vld [vmem:[%s252 + $0x60] sm:$0xff]
      %v277 = vld [vmem:[%s252 + $0x68] sm:$0xff]
      %v278 = vld [vmem:[%s252 + $0x70] sm:$0xff]
      %v279 = vld [vmem:[%s252 + $0x78] sm:$0xff]
      %v280 = vld [vmem:[%s252 + $0x80] sm:$0xff]
      %v281 = vld [vmem:[%s252 + $0x88] sm:$0xff]
      %v282 = vld [vmem:[%s252 + $0x90] sm:$0xff]
      %v283 = vld [vmem:[%s252 + $0x98] sm:$0xff]
      %v284 = vld [vmem:[%s252 + $0xa0] sm:$0xff]
      %v285 = vld [vmem:[%s252 + $0xa8] sm:$0xff]
      %v286 = vld [vmem:[%s252 + $0xb0] sm:$0xff]
      %v287 = vld [vmem:[%s252 + $0xb8] sm:$0xff]
      %v288 = vld [vmem:[%s252 + $0xc0] sm:$0xff]
      %v289 = vld [vmem:[%s252 + $0xc8] sm:$0xff]
      %v290 = vld [vmem:[%s252 + $0xd0] sm:$0xff]
      %v291 = vld [vmem:[%s252 + $0xd8] sm:$0xff]
      %v292 = vld [vmem:[%s252 + $0xe0] sm:$0xff]
      %v293 = vld [vmem:[%s252 + $0xe8] sm:$0xff]
      %v294 = vld [vmem:[%s252 + $0xf0] sm:$0xff]
      %v295 = vld [vmem:[%s252 + $0xf8] sm:$0xff]
      %v296 = vld [vmem:[%s252 + $0x100] sm:$0xff]
      %v297 = vld [vmem:[%s252 + $0x108] sm:$0xff]
      %v298 = vld [vmem:[%s252 + $0x110] sm:$0xff]
      %v299 = vld [vmem:[%s252 + $0x118] sm:$0xff]
      %v300 = vld [vmem:[%s1] sm:$0xf]
      %v301 = vld [vmem:[%s2] sm:$0x1]
      %v303 = vlaneseq
      %v304 = vshrl.u32 %v303, 7
      %v305 = vsub.s32 0, %v304
      %v306 = vrot.slane %v301, %v305
      %vm308 = vcmask 31744
      %v310 = vsel %vm308, %v264, 0
      %v313 = vsel %vm308, %v265, 0
      %v316 = vsel %vm308, %v266, 0
      %v319 = vsel %vm308, %v267, 0
      %v322 = vsel %vm308, %v268, 0
      %v325 = vsel %vm308, %v269, 0
      %v328 = vsel %vm308, %v270, 0
      %v331 = vsel %vm308, %v271, 0
      %v334 = vsel %vm308, %v272, 0
      %v337 = vsel %vm308, %v273, 0
      %v340 = vsel %vm308, %v274, 0
      %v343 = vsel %vm308, %v275, 0
      %v346 = vsel %vm308, %v276, 0
      %v349 = vsel %vm308, %v277, 0
      %v352 = vsel %vm308, %v278, 0
      %v355 = vsel %vm308, %v279, 0
      %v358 = vsel %vm308, %v280, 0
      %v361 = vsel %vm308, %v281, 0
      %v364 = vsel %vm308, %v282, 0
      %v367 = vsel %vm308, %v283, 0
      %v370 = vsel %vm308, %v284, 0
      %v373 = vsel %vm308, %v285, 0
      %v376 = vsel %vm308, %v286, 0
      %v379 = vsel %vm308, %v287, 0
      %v382 = vsel %vm308, %v288, 0
      %v385 = vsel %vm308, %v289, 0
      %v388 = vsel %vm308, %v290, 0
      %v391 = vsel %vm308, %v291, 0
      %v394 = vsel %vm308, %v292, 0
      %v397 = vsel %vm308, %v293, 0
      %v400 = vsel %vm308, %v294, 0
      %v403 = vsel %vm308, %v295, 0
      %v406 = vsel %vm308, %v296, 0
      %v409 = vsel %vm308, %v297, 0
      %v412 = vsel %vm308, %v298, 0
      %v415 = vsel %vm308, %v299, 0
      %vm417 = vcmask 1043456
      %v419 = vsel %vm417, %v300, 0
      %421 = vmatprep.subr.mxu0 0.0
      %422 = vmatpush1.msra.mxu0 %v419
      %423 = vmatprep.subr.mxu0 0.0
      %424 = vmatpush1.msra.mxu0 0.0
      %425 = vmatprep.subr.mxu0 0.0
      %426 = vmatpush1.msra.mxu0 0.0
      %427 = vmatprep.subr.mxu0 0.0
      %428 = vmatpush1.msra.mxu0 0.0
      %429 = vmatprep.subr.mxu0 0.0
      %430 = vmatpush1.msra.mxu0 0.0
      %431 = vmatprep.subr.mxu0 0.0
      %432 = vmatpush1.msra.mxu0 0.0
      %433 = vmatprep.subr.mxu0 0.0
      %434 = vmatpush1.msra.mxu0 0.0
      %435 = vmatprep.subr.mxu0 0.0
      %436 = vmatpush1.msra.mxu0 0.0
      %437 = vmatprep.subr.mxu0 0.0
      %438 = vmatpush1.msra.mxu0 0.0
      %439 = vmatprep.subr.mxu0 0.0
      %440 = vmatpush1.msra.mxu0 0.0
      %441 = vmatprep.subr.mxu0 0.0
      %442 = vmatpush1.msra.mxu0 0.0
      %443 = vmatprep.subr.mxu0 0.0
      %444 = vmatpush1.msra.mxu0 0.0
      %445 = vmatprep.subr.mxu0 0.0
      %446 = vmatpush1.msra.mxu0 0.0
      %447 = vmatprep.subr.mxu0 0.0
      %448 = vmatpush1.msra.mxu0 0.0
      %449 = vmatprep.subr.mxu0 0.0
      %450 = vmatpush1.msra.mxu0 0.0
      %451 = vmatprep.subr.mxu0 0.0
      %452 = vmatpush1.msra.mxu0 0.0
      %453 = vmatprep.subr.mxu0 0.0
      %454 = vmatpush1.msra.mxu0 0.0
      %455 = vmatprep.subr.mxu0 0.0
      %456 = vmatpush1.msra.mxu0 0.0
      %457 = vmatprep.subr.mxu0 0.0
      %458 = vmatpush1.msra.mxu0 0.0
      %459 = vmatprep.subr.mxu0 0.0
      %460 = vmatpush1.msra.mxu0 0.0
      %461 = vmatprep.subr.mxu0 0.0
      %462 = vmatpush1.msra.mxu0 0.0
      %463 = vmatprep.subr.mxu0 0.0
      %464 = vmatpush1.msra.mxu0 0.0
      %465 = vmatprep.subr.mxu0 0.0
      %466 = vmatpush1.msra.mxu0 0.0
      %467 = vmatprep.subr.mxu0 0.0
      %468 = vmatpush1.msra.mxu0 0.0
      %469 = vmatprep.subr.mxu0 0.0
      %470 = vmatpush1.msra.mxu0 0.0
      %471 = vmatprep.subr.mxu0 0.0
      %472 = vmatpush1.msra.mxu0 0.0
      %473 = vmatprep.subr.mxu0 0.0
      %474 = vmatpush1.msra.mxu0 0.0
      %475 = vmatprep.subr.mxu0 0.0
      %476 = vmatpush1.msra.mxu0 0.0
      %477 = vmatprep.subr.mxu0 0.0
      %478 = vmatpush1.msra.mxu0 0.0
      %479 = vmatprep.subr.mxu0 0.0
      %480 = vmatpush1.msra.mxu0 0.0
      %481 = vmatprep.subr.mxu0 0.0
      %482 = vmatpush1.msra.mxu0 0.0
      %483 = vmatprep.subr.mxu0 0.0
      %484 = vmatpush1.msra.mxu0 0.0
      %485 = vmatprep.mubr.f32.mxu0 0.0
      %486 = vmatmul.mubr.f32.gmra.mrb[0].mxu0 %v310
      %v487 = vpop.f32.mrb[0].mxu0
      %v488 = vadd.f32 %v306, %v487
      %v489 = vpop.f32.mrb[0].mxu0
      %490 = vmatprep.mubr.f32.mxu0 0.0
      %491 = vmatmul.mubr.f32.gmra.mrb[0].mxu0 %v313
      %v492 = vpop.f32.mrb[0].mxu0
      %v493 = vadd.f32 %v306, %v492
      %v494 = vpop.f32.mrb[0].mxu0
      %495 = vmatprep.mubr.f32.mxu0 0.0
      %496 = vmatmul.mubr.f32.gmra.mrb[0].mxu0 %v316
      %v497 = vpop.f32.mrb[0].mxu0
      %v498 = vadd.f32 %v306, %v497
      %v499 = vpop.f32.mrb[0].mxu0
      %500 = vmatprep.mubr.f32.mxu0 0.0
      %501 = vmatmul.mubr.f32.gmra.mrb[0].mxu0 %v319
      %v502 = vpop.f32.mrb[0].mxu0
      %v503 = vadd.f32 %v306, %v502
      %v504 = vpop.f32.mrb[0].mxu0
      %505 = vmatprep.mubr.f32.mxu0 0.0
      %506 = vmatmul.mubr.f32.gmra.mrb[0].mxu0 %v322
      %v507 = vpop.f32.mrb[0].mxu0
      %v508 = vadd.f32 %v306, %v507
      %v509 = vpop.f32.mrb[0].mxu0
      %510 = vmatprep.mubr.f32.mxu0 0.0
      %511 = vmatmul.mubr.f32.gmra.mrb[0].mxu0 %v325
      %v512 = vpop.f32.mrb[0].mxu0
      %v513 = vadd.f32 %v306, %v512
      %v514 = vpop.f32.mrb[0].mxu0
      %515 = vmatprep.mubr.f32.mxu0 0.0
      %516 = vmatmul.mubr.f32.gmra.mrb[0].mxu0 %v328
      %v517 = vpop.f32.mrb[0].mxu0
      %v518 = vadd.f32 %v306, %v517
      %v519 = vpop.f32.mrb[0].mxu0
      %520 = vmatprep.mubr.f32.mxu0 0.0
      %521 = vmatmul.mubr.f32.gmra.mrb[0].mxu0 %v331
      %v522 = vpop.f32.mrb[0].mxu0
      %v523 = vadd.f32 %v306, %v522
      %v524 = vpop.f32.mrb[0].mxu0
      %525 = vmatprep.mubr.f32.mxu0 0.0
      %526 = vmatmul.mubr.f32.gmra.mrb[0].mxu0 %v334
      %v527 = vpop.f32.mrb[0].mxu0
      %v528 = vadd.f32 %v306, %v527
      %v529 = vpop.f32.mrb[0].mxu0
      %530 = vmatprep.mubr.f32.mxu0 0.0
      %531 = vmatmul.mubr.f32.gmra.mrb[0].mxu0 %v337
      %v532 = vpop.f32.mrb[0].mxu0
      %v533 = vadd.f32 %v306, %v532
      %v534 = vpop.f32.mrb[0].mxu0
      %535 = vmatprep.mubr.f32.mxu0 0.0
      %536 = vmatmul.mubr.f32.gmra.mrb[0].mxu0 %v340
      %v537 = vpop.f32.mrb[0].mxu0
      %v538 = vadd.f32 %v306, %v537
      %v539 = vpop.f32.mrb[0].mxu0
      %540 = vmatprep.mubr.f32.mxu0 0.0
      %541 = vmatmul.mubr.f32.gmra.mrb[0].mxu0 %v343
      %v542 = vpop.f32.mrb[0].mxu0
      %v543 = vadd.f32 %v306, %v542
      %v544 = vpop.f32.mrb[0].mxu0
      %545 = vmatprep.mubr.f32.mxu0 0.0
      %546 = vmatmul.mubr.f32.gmra.mrb[0].mxu0 %v346
      %v547 = vpop.f32.mrb[0].mxu0
      %v548 = vadd.f32 %v306, %v547
      %v549 = vpop.f32.mrb[0].mxu0
      %550 = vmatprep.mubr.f32.mxu0 0.0
      %551 = vmatmul.mubr.f32.gmra.mrb[0].mxu0 %v349
      %v552 = vpop.f32.mrb[0].mxu0
      %v553 = vadd.f32 %v306, %v552
      %v554 = vpop.f32.mrb[0].mxu0
      %555 = vmatprep.mubr.f32.mxu0 0.0
      %556 = vmatmul.mubr.f32.gmra.mrb[0].mxu0 %v352
      %v557 = vpop.f32.mrb[0].mxu0
      %v558 = vadd.f32 %v306, %v557
      %v559 = vpop.f32.mrb[0].mxu0
      %560 = vmatprep.mubr.f32.mxu0 0.0
      %561 = vmatmul.mubr.f32.gmra.mrb[0].mxu0 %v355
      %v562 = vpop.f32.mrb[0].mxu0
      %v563 = vadd.f32 %v306, %v562
      %v564 = vpop.f32.mrb[0].mxu0
      %565 = vmatprep.mubr.f32.mxu0 0.0
      %566 = vmatmul.mubr.f32.gmra.mrb[0].mxu0 %v358
      %v567 = vpop.f32.mrb[0].mxu0
      %v568 = vadd.f32 %v306, %v567
      %v569 = vpop.f32.mrb[0].mxu0
      %570 = vmatprep.mubr.f32.mxu0 0.0
      %571 = vmatmul.mubr.f32.gmra.mrb[0].mxu0 %v361
      %v572 = vpop.f32.mrb[0].mxu0
      %v573 = vadd.f32 %v306, %v572
      %v574 = vpop.f32.mrb[0].mxu0
      %575 = vmatprep.mubr.f32.mxu0 0.0
      %576 = vmatmul.mubr.f32.gmra.mrb[0].mxu0 %v364
      %v577 = vpop.f32.mrb[0].mxu0
      %v578 = vadd.f32 %v306, %v577
      %v579 = vpop.f32.mrb[0].mxu0
      %580 = vmatprep.mubr.f32.mxu0 0.0
      %581 = vmatmul.mubr.f32.gmra.mrb[0].mxu0 %v367
      %v582 = vpop.f32.mrb[0].mxu0
      %v583 = vadd.f32 %v306, %v582
      %v584 = vpop.f32.mrb[0].mxu0
      %585 = vmatprep.mubr.f32.mxu0 0.0
      %586 = vmatmul.mubr.f32.gmra.mrb[0].mxu0 %v370
      %v587 = vpop.f32.mrb[0].mxu0
      %v588 = vadd.f32 %v306, %v587
      %v589 = vpop.f32.mrb[0].mxu0
      %590 = vmatprep.mubr.f32.mxu0 0.0
      %591 = vmatmul.mubr.f32.gmra.mrb[0].mxu0 %v373
      %v592 = vpop.f32.mrb[0].mxu0
      %v593 = vadd.f32 %v306, %v592
      %v594 = vpop.f32.mrb[0].mxu0
      %595 = vmatprep.mubr.f32.mxu0 0.0
      %596 = vmatmul.mubr.f32.gmra.mrb[0].mxu0 %v376
      %v597 = vpop.f32.mrb[0].mxu0
      %v598 = vadd.f32 %v306, %v597
      %v599 = vpop.f32.mrb[0].mxu0
      %600 = vmatprep.mubr.f32.mxu0 0.0
      %601 = vmatmul.mubr.f32.gmra.mrb[0].mxu0 %v379
      %v602 = vpop.f32.mrb[0].mxu0
      %v603 = vadd.f32 %v306, %v602
      %v604 = vpop.f32.mrb[0].mxu0
      %605 = vmatprep.mubr.f32.mxu0 0.0
      %606 = vmatmul.mubr.f32.gmra.mrb[0].mxu0 %v382
      %v607 = vpop.f32.mrb[0].mxu0
      %v608 = vadd.f32 %v306, %v607
      %v609 = vpop.f32.mrb[0].mxu0
      %610 = vmatprep.mubr.f32.mxu0 0.0
      %611 = vmatmul.mubr.f32.gmra.mrb[0].mxu0 %v385
      %v612 = vpop.f32.mrb[0].mxu0
      %v613 = vadd.f32 %v306, %v612
      %v614 = vpop.f32.mrb[0].mxu0
      %615 = vmatprep.mubr.f32.mxu0 0.0
      %616 = vmatmul.mubr.f32.gmra.mrb[0].mxu0 %v388
      %v617 = vpop.f32.mrb[0].mxu0
      %v618 = vadd.f32 %v306, %v617
      %v619 = vpop.f32.mrb[0].mxu0
      %620 = vmatprep.mubr.f32.mxu0 0.0
      %621 = vmatmul.mubr.f32.gmra.mrb[0].mxu0 %v391
      %v622 = vpop.f32.mrb[0].mxu0
      %v623 = vadd.f32 %v306, %v622
      %v624 = vpop.f32.mrb[0].mxu0
      %625 = vmatprep.mubr.f32.mxu0 0.0
      %626 = vmatmul.mubr.f32.gmra.mrb[0].mxu0 %v394
      %v627 = vpop.f32.mrb[0].mxu0
      %v628 = vadd.f32 %v306, %v627
      %v629 = vpop.f32.mrb[0].mxu0
      %630 = vmatprep.mubr.f32.mxu0 0.0
      %631 = vmatmul.mubr.f32.gmra.mrb[0].mxu0 %v397
      %v632 = vpop.f32.mrb[0].mxu0
      %v633 = vadd.f32 %v306, %v632
      %v634 = vpop.f32.mrb[0].mxu0
      %635 = vmatprep.mubr.f32.mxu0 0.0
      %636 = vmatmul.mubr.f32.gmra.mrb[0].mxu0 %v400
      %v637 = vpop.f32.mrb[0].mxu0
      %v638 = vadd.f32 %v306, %v637
      %v639 = vpop.f32.mrb[0].mxu0
      %640 = vmatprep.mubr.f32.mxu0 0.0
      %641 = vmatmul.mubr.f32.gmra.mrb[0].mxu0 %v403
      %v642 = vpop.f32.mrb[0].mxu0
      %v643 = vadd.f32 %v306, %v642
      %v644 = vpop.f32.mrb[0].mxu0
      %645 = vmatprep.mubr.f32.mxu0 0.0
      %646 = vmatmul.mubr.f32.gmra.mrb[0].mxu0 %v406
      %v647 = vpop.f32.mrb[0].mxu0
      %v648 = vadd.f32 %v306, %v647
      %v649 = vpop.f32.mrb[0].mxu0
      %650 = vmatprep.mubr.f32.mxu0 0.0
      %651 = vmatmul.mubr.f32.gmra.mrb[0].mxu0 %v409
      %v652 = vpop.f32.mrb[0].mxu0
      %v653 = vadd.f32 %v306, %v652
      %v654 = vpop.f32.mrb[0].mxu0
      %655 = vmatprep.mubr.f32.mxu0 0.0
      %656 = vmatmul.mubr.f32.gmra.mrb[0].mxu0 %v412
      %v657 = vpop.f32.mrb[0].mxu0
      %v658 = vadd.f32 %v306, %v657
      %v659 = vpop.f32.mrb[0].mxu0
      %660 = vmatprep.mubr.f32.mxu0 0.0
      %661 = vmatmul.mubr.f32.gmra.mrb[0].mxu0 %v415
      %v662 = vpop.f32.mrb[0].mxu0
      %v663 = vadd.f32 %v306, %v662
      %v664 = vpop.f32.mrb[0].mxu0
      %665 = vdwg.mxu0
      %v666 = vmax.f32 %v488, 0.0
      %v667 = vmax.f32 %v493, 0.0
      %v668 = vmax.f32 %v498, 0.0
      %v669 = vmax.f32 %v503, 0.0
      %v670 = vmax.f32 %v508, 0.0
      %v671 = vmax.f32 %v513, 0.0
      %v672 = vmax.f32 %v518, 0.0
      %v673 = vmax.f32 %v523, 0.0
      %v674 = vmax.f32 %v528, 0.0
      %v675 = vmax.f32 %v533, 0.0
      %v676 = vmax.f32 %v538, 0.0
      %v677 = vmax.f32 %v543, 0.0
      %v678 = vmax.f32 %v548, 0.0
      %v679 = vmax.f32 %v553, 0.0
      %v680 = vmax.f32 %v558, 0.0
      %v681 = vmax.f32 %v563, 0.0
      %v682 = vmax.f32 %v568, 0.0
      %v683 = vmax.f32 %v573, 0.0
      %v684 = vmax.f32 %v578, 0.0
      %v685 = vmax.f32 %v583, 0.0
      %v686 = vmax.f32 %v588, 0.0
      %v687 = vmax.f32 %v593, 0.0
      %v688 = vmax.f32 %v598, 0.0
      %v689 = vmax.f32 %v603, 0.0
      %v690 = vmax.f32 %v608, 0.0
      %v691 = vmax.f32 %v613, 0.0
      %v692 = vmax.f32 %v618, 0.0
      %v693 = vmax.f32 %v623, 0.0
      %v694 = vmax.f32 %v628, 0.0
      %v695 = vmax.f32 %v633, 0.0
      %v696 = vmax.f32 %v638, 0.0
      %v697 = vmax.f32 %v643, 0.0
      %v698 = vmax.f32 %v648, 0.0
      %v699 = vmax.f32 %v653, 0.0
      %v700 = vmax.f32 %v658, 0.0
      %v701 = vmax.f32 %v663, 0.0
      %vm702 = vcmask 130048
      %703 = vst.msk [vmem:[#allocation2 + $0x1] sm:$0xff] %vm702, %v666
      %704 = vst.msk [vmem:[#allocation2 + $0x9] sm:$0xff] %vm702, %v667
      %705 = vst.msk [vmem:[#allocation2 + $0x19] sm:$0xff] %vm702, %v668
      %706 = vst.msk [vmem:[#allocation2 + $0x21] sm:$0xff] %vm702, %v669
      %707 = vst.msk [vmem:[#allocation2 + $0x31] sm:$0xff] %vm702, %v670
      %708 = vst.msk [vmem:[#allocation2 + $0x39] sm:$0xff] %vm702, %v671
      %709 = vst.msk [vmem:[#allocation2 + $0x49] sm:$0xff] %vm702, %v672
      %710 = vst.msk [vmem:[#allocation2 + $0x51] sm:$0xff] %vm702, %v673
      %711 = vst.msk [vmem:[#allocation2 + $0x61] sm:$0xff] %vm702, %v674
      %712 = vst.msk [vmem:[#allocation2 + $0x69] sm:$0xff] %vm702, %v675
      %713 = vst.msk [vmem:[#allocation2 + $0x79] sm:$0xff] %vm702, %v676
      %714 = vst.msk [vmem:[#allocation2 + $0x81] sm:$0xff] %vm702, %v677
      %715 = vst.msk [vmem:[#allocation2 + $0x91] sm:$0xff] %vm702, %v678
      %716 = vst.msk [vmem:[#allocation2 + $0x99] sm:$0xff] %vm702, %v679
      %717 = vst.msk [vmem:[#allocation2 + $0xa9] sm:$0xff] %vm702, %v680
      %718 = vst.msk [vmem:[#allocation2 + $0xb1] sm:$0xff] %vm702, %v681
      %719 = vst.msk [vmem:[#allocation2 + $0xc1] sm:$0xff] %vm702, %v682
      %720 = vst.msk [vmem:[#allocation2 + $0xc9] sm:$0xff] %vm702, %v683
      %721 = vst.msk [vmem:[#allocation2 + $0xd9] sm:$0xff] %vm702, %v684
      %722 = vst.msk [vmem:[#allocation2 + $0xe1] sm:$0xff] %vm702, %v685
      %723 = vst.msk [vmem:[#allocation2 + $0xf1] sm:$0xff] %vm702, %v686
      %724 = vst.msk [vmem:[#allocation2 + $0xf9] sm:$0xff] %vm702, %v687
      %725 = vst.msk [vmem:[#allocation2 + $0x109] sm:$0xff] %vm702, %v688
      %726 = vst.msk [vmem:[#allocation2 + $0x111] sm:$0xff] %vm702, %v689
      %727 = vst.msk [vmem:[#allocation2 + $0x121] sm:$0xff] %vm702, %v690
      %728 = vst.msk [vmem:[#allocation2 + $0x129] sm:$0xff] %vm702, %v691
      %729 = vst.msk [vmem:[#allocation2 + $0x139] sm:$0xff] %vm702, %v692
      %730 = vst.msk [vmem:[#allocation2 + $0x141] sm:$0xff] %vm702, %v693
      %731 = vst.msk [vmem:[#allocation2 + $0x151] sm:$0xff] %vm702, %v694
      %732 = vst.msk [vmem:[#allocation2 + $0x159] sm:$0xff] %vm702, %v695
      %733 = vst.msk [vmem:[#allocation2 + $0x169] sm:$0xff] %vm702, %v696
      %734 = vst.msk [vmem:[#allocation2 + $0x171] sm:$0xff] %vm702, %v697
      %735 = vst.msk [vmem:[#allocation2 + $0x181] sm:$0xff] %vm702, %v698
      %736 = vst.msk [vmem:[#allocation2 + $0x189] sm:$0xff] %vm702, %v699
      %737 = vst.msk [vmem:[#allocation2 + $0x199] sm:$0xff] %vm702, %v700
      %738 = vst.msk [vmem:[#allocation2 + $0x1a1] sm:$0xff] %vm702, %v701
      %vm739 = vcmask 122880
      %740 = vst.msk [vmem:[#allocation2] sm:$0x1] %vm739, 0.0
      %741 = vst.msk [vmem:[#allocation2 + $0x18] sm:$0x1] %vm739, 0.0
      %742 = vst.msk [vmem:[#allocation2 + $0x30] sm:$0x1] %vm739, 0.0
      %743 = vst.msk [vmem:[#allocation2 + $0x48] sm:$0x1] %vm739, 0.0
      %744 = vst.msk [vmem:[#allocation2 + $0x60] sm:$0x1] %vm739, 0.0
      %745 = vst.msk [vmem:[#allocation2 + $0x78] sm:$0x1] %vm739, 0.0
      %746 = vst.msk [vmem:[#allocation2 + $0x90] sm:$0x1] %vm739, 0.0
      %747 = vst.msk [vmem:[#allocation2 + $0xa8] sm:$0x1] %vm739, 0.0
      %748 = vst.msk [vmem:[#allocation2 + $0xc0] sm:$0x1] %vm739, 0.0
      %749 = vst.msk [vmem:[#allocation2 + $0xd8] sm:$0x1] %vm739, 0.0
      %750 = vst.msk [vmem:[#allocation2 + $0xf0] sm:$0x1] %vm739, 0.0
      %751 = vst.msk [vmem:[#allocation2 + $0x108] sm:$0x1] %vm739, 0.0
      %752 = vst.msk [vmem:[#allocation2 + $0x120] sm:$0x1] %vm739, 0.0
      %753 = vst.msk [vmem:[#allocation2 + $0x138] sm:$0x1] %vm739, 0.0
      %754 = vst.msk [vmem:[#allocation2 + $0x150] sm:$0x1] %vm739, 0.0
      %755 = vst.msk [vmem:[#allocation2 + $0x168] sm:$0x1] %vm739, 0.0
      %756 = vst.msk [vmem:[#allocation2 + $0x180] sm:$0x1] %vm739, 0.0
      %757 = vst.msk [vmem:[#allocation2 + $0x198] sm:$0x1] %vm739, 0.0
      %758 = vst.msk [vmem:[#allocation2 + $0x11] sm:$0x1] %vm739, 0.0
      %759 = vst.msk [vmem:[#allocation2 + $0x29] sm:$0x1] %vm739, 0.0
      %760 = vst.msk [vmem:[#allocation2 + $0x41] sm:$0x1] %vm739, 0.0
      %761 = vst.msk [vmem:[#allocation2 + $0x59] sm:$0x1] %vm739, 0.0
      %762 = vst.msk [vmem:[#allocation2 + $0x71] sm:$0x1] %vm739, 0.0
      %763 = vst.msk [vmem:[#allocation2 + $0x89] sm:$0x1] %vm739, 0.0
      %764 = vst.msk [vmem:[#allocation2 + $0xa1] sm:$0x1] %vm739, 0.0
      %765 = vst.msk [vmem:[#allocation2 + $0xb9] sm:$0x1] %vm739, 0.0
      %766 = vst.msk [vmem:[#allocation2 + $0xd1] sm:$0x1] %vm739, 0.0
      %767 = vst.msk [vmem:[#allocation2 + $0xe9] sm:$0x1] %vm739, 0.0
      %768 = vst.msk [vmem:[#allocation2 + $0x101] sm:$0x1] %vm739, 0.0
      %769 = vst.msk [vmem:[#allocation2 + $0x119] sm:$0x1] %vm739, 0.0
      %770 = vst.msk [vmem:[#allocation2 + $0x131] sm:$0x1] %vm739, 0.0
      %771 = vst.msk [vmem:[#allocation2 + $0x149] sm:$0x1] %vm739, 0.0
      %772 = vst.msk [vmem:[#allocation2 + $0x161] sm:$0x1] %vm739, 0.0
      %773 = vst.msk [vmem:[#allocation2 + $0x179] sm:$0x1] %vm739, 0.0
      %774 = vst.msk [vmem:[#allocation2 + $0x191] sm:$0x1] %vm739, 0.0
      %775 = vst.msk [vmem:[#allocation2 + $0x1a9] sm:$0x1] %vm739, 0.0
      %p776 = scmp.eq.s32.totalorder %s21, 0
      // Predicated region
      $region41: #{tpu_custom_call.1} parent=39 // pred_check
        %p777 = pneg %p776
      $region42: #{tpu_custom_call.1} parent=39 // pred_check_branch
        %779 = sbr.rel (%p777) target = $region44
      $region43: #{tpu_custom_call.1} parent=39 // pred_region
        %780 = vst.msk [vmem:[#allocation2] sm:$0xff] %vm702, 0.0
        %781 = vst.msk [vmem:[#allocation2 + $0x8] sm:$0xff] %vm702, 0.0
        %vm782 = vcmask 123904
        %783 = vst.msk [vmem:[#allocation2 + $0x10] sm:$0x3] %vm782, 0.0
        %s784 = scalar_lea.vmem [#allocation2], 408
        %785 = vst.msk [vmem:[%s784] sm:$0xff] %vm702, 0.0
        %786 = vst.msk [vmem:[%s784 + $0x8] sm:$0xff] %vm702, 0.0
        %787 = vst.msk [vmem:[%s784 + $0x10] sm:$0x3] %vm782, 0.0
      $region44: #{tpu_custom_call.1} parent=39 // pred_fallthru
        _
      %v788 = vld [vmem:[%s4] sm:$0x1]
      %v790 = vlaneseq
      %v791 = vshrl.u32 %v790, 7
      %v792 = vsub.s32 0, %v791
      %v793 = vrot.slane %v788, %v792
      %v795 = vadd.f32 %v266, %v793
      %v796 = vadd.f32 %v267, %v793
      %v797 = vadd.f32 %v268, %v793
      %v798 = vadd.f32 %v269, %v793
      %v799 = vadd.f32 %v270, %v793
      %v800 = vadd.f32 %v271, %v793
      %v801 = vadd.f32 %v272, %v793
      %v802 = vadd.f32 %v273, %v793
      %v803 = vadd.f32 %v274, %v793
      %v804 = vadd.f32 %v275, %v793
      %v805 = vadd.f32 %v276, %v793
      %v806 = vadd.f32 %v277, %v793
      %v807 = vadd.f32 %v278, %v793
      %v808 = vadd.f32 %v279, %v793
      %v809 = vadd.f32 %v280, %v793
      %v810 = vadd.f32 %v281, %v793
      %v811 = vadd.f32 %v282, %v793
      %v812 = vadd.f32 %v283, %v793
      %v813 = vadd.f32 %v284, %v793
      %v814 = vadd.f32 %v285, %v793
      %v815 = vadd.f32 %v286, %v793
      %v816 = vadd.f32 %v287, %v793
      %v817 = vadd.f32 %v288, %v793
      %v818 = vadd.f32 %v289, %v793
      %v819 = vadd.f32 %v290, %v793
      %v820 = vadd.f32 %v291, %v793
      %v821 = vadd.f32 %v292, %v793
      %v822 = vadd.f32 %v293, %v793
      %v823 = vadd.f32 %v294, %v793
      %v824 = vadd.f32 %v295, %v793
      %v825 = vadd.f32 %v296, %v793
      %v826 = vadd.f32 %v297, %v793
      %859 = vrot.lane.b32.xlu0 %v795, 4
      %v860 = vpop.permute.xlu0 %859
      %861 = vrot.lane.b32.xlu0 %v796, 4
      %v862 = vpop.permute.xlu0 %861
      %863 = vrot.lane.b32.xlu0 %v797, 4
      %v864 = vpop.permute.xlu0 %863
      %865 = vrot.lane.b32.xlu0 %v798, 4
      %v866 = vpop.permute.xlu0 %865
      %867 = vrot.lane.b32.xlu0 %v799, 4
      %v868 = vpop.permute.xlu0 %867
      %869 = vrot.lane.b32.xlu0 %v800, 4
      %v870 = vpop.permute.xlu0 %869
      %871 = vrot.lane.b32.xlu0 %v801, 4
      %v872 = vpop.permute.xlu0 %871
      %873 = vrot.lane.b32.xlu0 %v802, 4
      %v874 = vpop.permute.xlu0 %873
      %875 = vrot.lane.b32.xlu0 %v803, 4
      %v876 = vpop.permute.xlu0 %875
      %877 = vrot.lane.b32.xlu0 %v804, 4
      %v878 = vpop.permute.xlu0 %877
      %879 = vrot.lane.b32.xlu0 %v805, 4
      %v880 = vpop.permute.xlu0 %879
      %881 = vrot.lane.b32.xlu0 %v806, 4
      %v882 = vpop.permute.xlu0 %881
      %883 = vrot.lane.b32.xlu0 %v807, 4
      %v884 = vpop.permute.xlu0 %883
      %885 = vrot.lane.b32.xlu0 %v808, 4
      %v886 = vpop.permute.xlu0 %885
      %887 = vrot.lane.b32.xlu0 %v809, 4
      %v888 = vpop.permute.xlu0 %887
      %889 = vrot.lane.b32.xlu0 %v810, 4
      %v890 = vpop.permute.xlu0 %889
      %891 = vrot.lane.b32.xlu0 %v811, 4
      %v892 = vpop.permute.xlu0 %891
      %893 = vrot.lane.b32.xlu0 %v812, 4
      %v894 = vpop.permute.xlu0 %893
      %895 = vrot.lane.b32.xlu0 %v813, 4
      %v896 = vpop.permute.xlu0 %895
      %897 = vrot.lane.b32.xlu0 %v814, 4
      %v898 = vpop.permute.xlu0 %897
      %899 = vrot.lane.b32.xlu0 %v815, 4
      %v900 = vpop.permute.xlu0 %899
      %901 = vrot.lane.b32.xlu0 %v816, 4
      %v902 = vpop.permute.xlu0 %901
      %903 = vrot.lane.b32.xlu0 %v817, 4
      %v904 = vpop.permute.xlu0 %903
      %905 = vrot.lane.b32.xlu0 %v818, 4
      %v906 = vpop.permute.xlu0 %905
      %907 = vrot.lane.b32.xlu0 %v819, 4
      %v908 = vpop.permute.xlu0 %907
      %909 = vrot.lane.b32.xlu0 %v820, 4
      %v910 = vpop.permute.xlu0 %909
      %911 = vrot.lane.b32.xlu0 %v821, 4
      %v912 = vpop.permute.xlu0 %911
      %913 = vrot.lane.b32.xlu0 %v822, 4
      %v914 = vpop.permute.xlu0 %913
      %915 = vrot.lane.b32.xlu0 %v823, 4
      %v916 = vpop.permute.xlu0 %915
      %917 = vrot.lane.b32.xlu0 %v824, 4
      %v918 = vpop.permute.xlu0 %917
      %919 = vrot.lane.b32.xlu0 %v825, 4
      %v920 = vpop.permute.xlu0 %919
      %921 = vrot.lane.b32.xlu0 %v826, 4
      %v922 = vpop.permute.xlu0 %921
      %v955 = vsel %vm308, %v795, %v860
      %v956 = vsel %vm308, %v796, %v862
      %v957 = vsel %vm308, %v797, %v864
      %v958 = vsel %vm308, %v798, %v866
      %v959 = vsel %vm308, %v799, %v868
      %v960 = vsel %vm308, %v800, %v870
      %v961 = vsel %vm308, %v801, %v872
      %v962 = vsel %vm308, %v802, %v874
      %v963 = vsel %vm308, %v803, %v876
      %v964 = vsel %vm308, %v804, %v878
      %v965 = vsel %vm308, %v805, %v880
      %v966 = vsel %vm308, %v806, %v882
      %v967 = vsel %vm308, %v807, %v884
      %v968 = vsel %vm308, %v808, %v886
      %v969 = vsel %vm308, %v809, %v888
      %v970 = vsel %vm308, %v810, %v890
      %v971 = vsel %vm308, %v811, %v892
      %v972 = vsel %vm308, %v812, %v894
      %v973 = vsel %vm308, %v813, %v896
      %v974 = vsel %vm308, %v814, %v898
      %v975 = vsel %vm308, %v815, %v900
      %v976 = vsel %vm308, %v816, %v902
      %v977 = vsel %vm308, %v817, %v904
      %v978 = vsel %vm308, %v818, %v906
      %v979 = vsel %vm308, %v819, %v908
      %v980 = vsel %vm308, %v820, %v910
      %v981 = vsel %vm308, %v821, %v912
      %v982 = vsel %vm308, %v822, %v914
      %v983 = vsel %vm308, %v823, %v916
      %v984 = vsel %vm308, %v824, %v918
      %v985 = vsel %vm308, %v825, %v920
      %v986 = vsel %vm308, %v826, %v922
      %v987 = vld [vmem:[#allocation2] sm:$0xff]
      %v988 = vld [vmem:[#allocation2 + $0x8] sm:$0xff]
      %v989 = vld [vmem:[#allocation2 + $0x18] sm:$0xff]
      %v990 = vld [vmem:[#allocation2 + $0x20] sm:$0xff]
      %v991 = vld [vmem:[#allocation2 + $0x30] sm:$0xff]
      %v992 = vld [vmem:[#allocation2 + $0x38] sm:$0xff]
      %v993 = vld [vmem:[#allocation2 + $0x48] sm:$0xff]
      %v994 = vld [vmem:[#allocation2 + $0x50] sm:$0xff]
      %v995 = vld [vmem:[#allocation2 + $0x60] sm:$0xff]
      %v996 = vld [vmem:[#allocation2 + $0x68] sm:$0xff]
      %v997 = vld [vmem:[#allocation2 + $0x78] sm:$0xff]
      %v998 = vld [vmem:[#allocation2 + $0x80] sm:$0xff]
      %v999 = vld [vmem:[#allocation2 + $0x90] sm:$0xff]
      %v1000 = vld [vmem:[#allocation2 + $0x98] sm:$0xff]
      %v1001 = vld [vmem:[#allocation2 + $0xa8] sm:$0xff]
      %v1002 = vld [vmem:[#allocation2 + $0xb0] sm:$0xff]
      %v1003 = vld [vmem:[#allocation2 + $0xc0] sm:$0xff]
      %v1004 = vld [vmem:[#allocation2 + $0xc8] sm:$0xff]
      %v1005 = vld [vmem:[#allocation2 + $0xd8] sm:$0xff]
      %v1006 = vld [vmem:[#allocation2 + $0xe0] sm:$0xff]
      %v1007 = vld [vmem:[#allocation2 + $0xf0] sm:$0xff]
      %v1008 = vld [vmem:[#allocation2 + $0xf8] sm:$0xff]
      %v1009 = vld [vmem:[#allocation2 + $0x108] sm:$0xff]
      %v1010 = vld [vmem:[#allocation2 + $0x110] sm:$0xff]
      %v1011 = vld [vmem:[#allocation2 + $0x120] sm:$0xff]
      %v1012 = vld [vmem:[#allocation2 + $0x128] sm:$0xff]
      %v1013 = vld [vmem:[#allocation2 + $0x138] sm:$0xff]
      %v1014 = vld [vmem:[#allocation2 + $0x140] sm:$0xff]
      %v1015 = vld [vmem:[#allocation2 + $0x150] sm:$0xff]
      %v1016 = vld [vmem:[#allocation2 + $0x158] sm:$0xff]
      %v1017 = vld [vmem:[#allocation2 + $0x168] sm:$0xff]
      %v1018 = vld [vmem:[#allocation2 + $0x170] sm:$0xff]
      %v1019 = vld [vmem:[#allocation2 + $0x1] sm:$0xff]
      %v1020 = vld [vmem:[#allocation2 + $0x9] sm:$0xff]
      %v1021 = vld [vmem:[#allocation2 + $0x19] sm:$0xff]
      %v1022 = vld [vmem:[#allocation2 + $0x21] sm:$0xff]
      %v1023 = vld [vmem:[#allocation2 + $0x31] sm:$0xff]
      %v1024 = vld [vmem:[#allocation2 + $0x39] sm:$0xff]
      %v1025 = vld [vmem:[#allocation2 + $0x49] sm:$0xff]
      %v1026 = vld [vmem:[#allocation2 + $0x51] sm:$0xff]
      %v1027 = vld [vmem:[#allocation2 + $0x61] sm:$0xff]
      %v1028 = vld [vmem:[#allocation2 + $0x69] sm:$0xff]
      %v1029 = vld [vmem:[#allocation2 + $0x79] sm:$0xff]
      %v1030 = vld [vmem:[#allocation2 + $0x81] sm:$0xff]
      %v1031 = vld [vmem:[#allocation2 + $0x91] sm:$0xff]
      %v1032 = vld [vmem:[#allocation2 + $0x99] sm:$0xff]
      %v1033 = vld [vmem:[#allocation2 + $0xa9] sm:$0xff]
      %v1034 = vld [vmem:[#allocation2 + $0xb1] sm:$0xff]
      %v1035 = vld [vmem:[#allocation2 + $0xc1] sm:$0xff]
      %v1036 = vld [vmem:[#allocation2 + $0xc9] sm:$0xff]
      %v1037 = vld [vmem:[#allocation2 + $0xd9] sm:$0xff]
      %v1038 = vld [vmem:[#allocation2 + $0xe1] sm:$0xff]
      %v1039 = vld [vmem:[#allocation2 + $0xf1] sm:$0xff]
      %v1040 = vld [vmem:[#allocation2 + $0xf9] sm:$0xff]
      %v1041 = vld [vmem:[#allocation2 + $0x109] sm:$0xff]
      %v1042 = vld [vmem:[#allocation2 + $0x111] sm:$0xff]
      %v1043 = vld [vmem:[#allocation2 + $0x121] sm:$0xff]
      %v1044 = vld [vmem:[#allocation2 + $0x129] sm:$0xff]
      %v1045 = vld [vmem:[#allocation2 + $0x139] sm:$0xff]
      %v1046 = vld [vmem:[#allocation2 + $0x141] sm:$0xff]
      %v1047 = vld [vmem:[#allocation2 + $0x151] sm:$0xff]
      %v1048 = vld [vmem:[#allocation2 + $0x159] sm:$0xff]
      %v1049 = vld [vmem:[#allocation2 + $0x169] sm:$0xff]
      %v1050 = vld [vmem:[#allocation2 + $0x171] sm:$0xff]
      %s1051 = scalar_lea.vmem [#allocation2], 24
      %v1052 = vld [vmem:[%s1051] sm:$0xff]
      %v1053 = vld [vmem:[%s1051 + $0x8] sm:$0xff]
      %v1054 = vld [vmem:[%s1051 + $0x18] sm:$0xff]
      %v1055 = vld [vmem:[%s1051 + $0x20] sm:$0xff]
      %v1056 = vld [vmem:[%s1051 + $0x30] sm:$0xff]
      %v1057 = vld [vmem:[%s1051 + $0x38] sm:$0xff]
      %v1058 = vld [vmem:[%s1051 + $0x48] sm:$0xff]
      %v1059 = vld [vmem:[%s1051 + $0x50] sm:$0xff]
      %v1060 = vld [vmem:[%s1051 + $0x60] sm:$0xff]
      %v1061 = vld [vmem:[%s1051 + $0x68] sm:$0xff]
      %v1062 = vld [vmem:[%s1051 + $0x78] sm:$0xff]
      %v1063 = vld [vmem:[%s1051 + $0x80] sm:$0xff]
      %v1064 = vld [vmem:[%s1051 + $0x90] sm:$0xff]
      %v1065 = vld [vmem:[%s1051 + $0x98] sm:$0xff]
      %v1066 = vld [vmem:[%s1051 + $0xa8] sm:$0xff]
      %v1067 = vld [vmem:[%s1051 + $0xb0] sm:$0xff]
      %v1068 = vld [vmem:[%s1051 + $0xc0] sm:$0xff]
      %v1069 = vld [vmem:[%s1051 + $0xc8] sm:$0xff]
      %v1070 = vld [vmem:[%s1051 + $0xd8] sm:$0xff]
      %v1071 = vld [vmem:[%s1051 + $0xe0] sm:$0xff]
      %v1072 = vld [vmem:[%s1051 + $0xf0] sm:$0xff]
      %v1073 = vld [vmem:[%s1051 + $0xf8] sm:$0xff]
      %v1074 = vld [vmem:[%s1051 + $0x108] sm:$0xff]
      %v1075 = vld [vmem:[%s1051 + $0x110] sm:$0xff]
      %v1076 = vld [vmem:[%s1051 + $0x120] sm:$0xff]
      %v1077 = vld [vmem:[%s1051 + $0x128] sm:$0xff]
      %v1078 = vld [vmem:[%s1051 + $0x138] sm:$0xff]
      %v1079 = vld [vmem:[%s1051 + $0x140] sm:$0xff]
      %v1080 = vld [vmem:[%s1051 + $0x150] sm:$0xff]
      %v1081 = vld [vmem:[%s1051 + $0x158] sm:$0xff]
      %v1082 = vld [vmem:[%s1051 + $0x168] sm:$0xff]
      %v1083 = vld [vmem:[%s1051 + $0x170] sm:$0xff]
      %v1084 = vld [vmem:[%s1051 + $0x1] sm:$0xff]
      %v1085 = vld [vmem:[%s1051 + $0x9] sm:$0xff]
      %v1086 = vld [vmem:[%s1051 + $0x19] sm:$0xff]
      %v1087 = vld [vmem:[%s1051 + $0x21] sm:$0xff]
      %v1088 = vld [vmem:[%s1051 + $0x31] sm:$0xff]
      %v1089 = vld [vmem:[%s1051 + $0x39] sm:$0xff]
      %v1090 = vld [vmem:[%s1051 + $0x49] sm:$0xff]
      %v1091 = vld [vmem:[%s1051 + $0x51] sm:$0xff]
      %v1092 = vld [vmem:[%s1051 + $0x61] sm:$0xff]
      %v1093 = vld [vmem:[%s1051 + $0x69] sm:$0xff]
      %v1094 = vld [vmem:[%s1051 + $0x79] sm:$0xff]
      %v1095 = vld [vmem:[%s1051 + $0x81] sm:$0xff]
      %v1096 = vld [vmem:[%s1051 + $0x91] sm:$0xff]
      %v1097 = vld [vmem:[%s1051 + $0x99] sm:$0xff]
      %v1098 = vld [vmem:[%s1051 + $0xa9] sm:$0xff]
      %v1099 = vld [vmem:[%s1051 + $0xb1] sm:$0xff]
      %v1100 = vld [vmem:[%s1051 + $0xc1] sm:$0xff]
      %v1101 = vld [vmem:[%s1051 + $0xc9] sm:$0xff]
      %v1102 = vld [vmem:[%s1051 + $0xd9] sm:$0xff]
      %v1103 = vld [vmem:[%s1051 + $0xe1] sm:$0xff]
      %v1104 = vld [vmem:[%s1051 + $0xf1] sm:$0xff]
      %v1105 = vld [vmem:[%s1051 + $0xf9] sm:$0xff]
      %v1106 = vld [vmem:[%s1051 + $0x109] sm:$0xff]
      %v1107 = vld [vmem:[%s1051 + $0x111] sm:$0xff]
      %v1108 = vld [vmem:[%s1051 + $0x121] sm:$0xff]
      %v1109 = vld [vmem:[%s1051 + $0x129] sm:$0xff]
      %v1110 = vld [vmem:[%s1051 + $0x139] sm:$0xff]
      %v1111 = vld [vmem:[%s1051 + $0x141] sm:$0xff]
      %v1112 = vld [vmem:[%s1051 + $0x151] sm:$0xff]
      %v1113 = vld [vmem:[%s1051 + $0x159] sm:$0xff]
      %v1114 = vld [vmem:[%s1051 + $0x169] sm:$0xff]
      %v1115 = vld [vmem:[%s1051 + $0x171] sm:$0xff]
      %1148 = vrot.lane.b32.xlu0 %v987, 116
      %v1149 = vpop.permute.xlu0 %1148
      %1150 = vrot.lane.b32.xlu0 %v988, 116
      %v1151 = vpop.permute.xlu0 %1150
      %1152 = vrot.lane.b32.xlu0 %v989, 116
      %v1153 = vpop.permute.xlu0 %1152
      %1154 = vrot.lane.b32.xlu0 %v990, 116
      %v1155 = vpop.permute.xlu0 %1154
      %1156 = vrot.lane.b32.xlu0 %v991, 116
      %v1157 = vpop.permute.xlu0 %1156
      %1158 = vrot.lane.b32.xlu0 %v992, 116
      %v1159 = vpop.permute.xlu0 %1158
      %1160 = vrot.lane.b32.xlu0 %v993, 116
      %v1161 = vpop.permute.xlu0 %1160
      %1162 = vrot.lane.b32.xlu0 %v994, 116
      %v1163 = vpop.permute.xlu0 %1162
      %1164 = vrot.lane.b32.xlu0 %v995, 116
      %v1165 = vpop.permute.xlu0 %1164
      %1166 = vrot.lane.b32.xlu0 %v996, 116
      %v1167 = vpop.permute.xlu0 %1166
      %1168 = vrot.lane.b32.xlu0 %v997, 116
      %v1169 = vpop.permute.xlu0 %1168
      %1170 = vrot.lane.b32.xlu0 %v998, 116
      %v1171 = vpop.permute.xlu0 %1170
      %1172 = vrot.lane.b32.xlu0 %v999, 116
      %v1173 = vpop.permute.xlu0 %1172
      %1174 = vrot.lane.b32.xlu0 %v1000, 116
      %v1175 = vpop.permute.xlu0 %1174
      %1176 = vrot.lane.b32.xlu0 %v1001, 116
      %v1177 = vpop.permute.xlu0 %1176
      %1178 = vrot.lane.b32.xlu0 %v1002, 116
      %v1179 = vpop.permute.xlu0 %1178
      %1180 = vrot.lane.b32.xlu0 %v1003, 116
      %v1181 = vpop.permute.xlu0 %1180
      %1182 = vrot.lane.b32.xlu0 %v1004, 116
      %v1183 = vpop.permute.xlu0 %1182
      %1184 = vrot.lane.b32.xlu0 %v1005, 116
      %v1185 = vpop.permute.xlu0 %1184
      %1186 = vrot.lane.b32.xlu0 %v1006, 116
      %v1187 = vpop.permute.xlu0 %1186
      %1188 = vrot.lane.b32.xlu0 %v1007, 116
      %v1189 = vpop.permute.xlu0 %1188
      %1190 = vrot.lane.b32.xlu0 %v1008, 116
      %v1191 = vpop.permute.xlu0 %1190
      %1192 = vrot.lane.b32.xlu0 %v1009, 116
      %v1193 = vpop.permute.xlu0 %1192
      %1194 = vrot.lane.b32.xlu0 %v1010, 116
      %v1195 = vpop.permute.xlu0 %1194
      %1196 = vrot.lane.b32.xlu0 %v1011, 116
      %v1197 = vpop.permute.xlu0 %1196
      %1198 = vrot.lane.b32.xlu0 %v1012, 116
      %v1199 = vpop.permute.xlu0 %1198
      %1200 = vrot.lane.b32.xlu0 %v1013, 116
      %v1201 = vpop.permute.xlu0 %1200
      %1202 = vrot.lane.b32.xlu0 %v1014, 116
      %v1203 = vpop.permute.xlu0 %1202
      %1204 = vrot.lane.b32.xlu0 %v1015, 116
      %v1205 = vpop.permute.xlu0 %1204
      %1206 = vrot.lane.b32.xlu0 %v1016, 116
      %v1207 = vpop.permute.xlu0 %1206
      %1208 = vrot.lane.b32.xlu0 %v1017, 116
      %v1209 = vpop.permute.xlu0 %1208
      %1210 = vrot.lane.b32.xlu0 %v1018, 116
      %v1211 = vpop.permute.xlu0 %1210
      %1276 = vrot.lane.b32.xlu0 %v1019, 124
      %v1277 = vpop.permute.xlu0 %1276
      %1278 = vrot.lane.b32.xlu0 %v1020, 124
      %v1279 = vpop.permute.xlu0 %1278
      %1280 = vrot.lane.b32.xlu0 %v1021, 124
      %v1281 = vpop.permute.xlu0 %1280
      %1282 = vrot.lane.b32.xlu0 %v1022, 124
      %v1283 = vpop.permute.xlu0 %1282
      %1284 = vrot.lane.b32.xlu0 %v1023, 124
      %v1285 = vpop.permute.xlu0 %1284
      %1286 = vrot.lane.b32.xlu0 %v1024, 124
      %v1287 = vpop.permute.xlu0 %1286
      %1288 = vrot.lane.b32.xlu0 %v1025, 124
      %v1289 = vpop.permute.xlu0 %1288
      %1290 = vrot.lane.b32.xlu0 %v1026, 124
      %v1291 = vpop.permute.xlu0 %1290
      %1292 = vrot.lane.b32.xlu0 %v1027, 124
      %v1293 = vpop.permute.xlu0 %1292
      %1294 = vrot.lane.b32.xlu0 %v1028, 124
      %v1295 = vpop.permute.xlu0 %1294
      %1296 = vrot.lane.b32.xlu0 %v1029, 124
      %v1297 = vpop.permute.xlu0 %1296
      %1298 = vrot.lane.b32.xlu0 %v1030, 124
      %v1299 = vpop.permute.xlu0 %1298
      %1300 = vrot.lane.b32.xlu0 %v1031, 124
      %v1301 = vpop.permute.xlu0 %1300
      %1302 = vrot.lane.b32.xlu0 %v1032, 124
      %v1303 = vpop.permute.xlu0 %1302
      %1304 = vrot.lane.b32.xlu0 %v1033, 124
      %v1305 = vpop.permute.xlu0 %1304
      %1306 = vrot.lane.b32.xlu0 %v1034, 124
      %v1307 = vpop.permute.xlu0 %1306
      %1308 = vrot.lane.b32.xlu0 %v1035, 124
      %v1309 = vpop.permute.xlu0 %1308
      %1310 = vrot.lane.b32.xlu0 %v1036, 124
      %v1311 = vpop.permute.xlu0 %1310
      %1312 = vrot.lane.b32.xlu0 %v1037, 124
      %v1313 = vpop.permute.xlu0 %1312
      %1314 = vrot.lane.b32.xlu0 %v1038, 124
      %v1315 = vpop.permute.xlu0 %1314
      %1316 = vrot.lane.b32.xlu0 %v1039, 124
      %v1317 = vpop.permute.xlu0 %1316
      %1318 = vrot.lane.b32.xlu0 %v1040, 124
      %v1319 = vpop.permute.xlu0 %1318
      %1320 = vrot.lane.b32.xlu0 %v1041, 124
      %v1321 = vpop.permute.xlu0 %1320
      %1322 = vrot.lane.b32.xlu0 %v1042, 124
      %v1323 = vpop.permute.xlu0 %1322
      %1324 = vrot.lane.b32.xlu0 %v1043, 124
      %v1325 = vpop.permute.xlu0 %1324
      %1326 = vrot.lane.b32.xlu0 %v1044, 124
      %v1327 = vpop.permute.xlu0 %1326
      %1328 = vrot.lane.b32.xlu0 %v1045, 124
      %v1329 = vpop.permute.xlu0 %1328
      %1330 = vrot.lane.b32.xlu0 %v1046, 124
      %v1331 = vpop.permute.xlu0 %1330
      %1332 = vrot.lane.b32.xlu0 %v1047, 124
      %v1333 = vpop.permute.xlu0 %1332
      %1334 = vrot.lane.b32.xlu0 %v1048, 124
      %v1335 = vpop.permute.xlu0 %1334
      %1336 = vrot.lane.b32.xlu0 %v1049, 124
      %v1337 = vpop.permute.xlu0 %1336
      %1338 = vrot.lane.b32.xlu0 %v1050, 124
      %v1339 = vpop.permute.xlu0 %1338
      %1404 = vrot.lane.b32.xlu0 %v1052, 8
      %v1405 = vpop.permute.xlu0 %1404
      %1406 = vrot.lane.b32.xlu0 %v1053, 8
      %v1407 = vpop.permute.xlu0 %1406
      %1408 = vrot.lane.b32.xlu0 %v1054, 8
      %v1409 = vpop.permute.xlu0 %1408
      %1410 = vrot.lane.b32.xlu0 %v1055, 8
      %v1411 = vpop.permute.xlu0 %1410
      %1412 = vrot.lane.b32.xlu0 %v1056, 8
      %v1413 = vpop.permute.xlu0 %1412
      %1414 = vrot.lane.b32.xlu0 %v1057, 8
      %v1415 = vpop.permute.xlu0 %1414
      %1416 = vrot.lane.b32.xlu0 %v1058, 8
      %v1417 = vpop.permute.xlu0 %1416
      %1418 = vrot.lane.b32.xlu0 %v1059, 8
      %v1419 = vpop.permute.xlu0 %1418
      %1420 = vrot.lane.b32.xlu0 %v1060, 8
      %v1421 = vpop.permute.xlu0 %1420
      %1422 = vrot.lane.b32.xlu0 %v1061, 8
      %v1423 = vpop.permute.xlu0 %1422
      %1424 = vrot.lane.b32.xlu0 %v1062, 8
      %v1425 = vpop.permute.xlu0 %1424
      %1426 = vrot.lane.b32.xlu0 %v1063, 8
      %v1427 = vpop.permute.xlu0 %1426
      %1428 = vrot.lane.b32.xlu0 %v1064, 8
      %v1429 = vpop.permute.xlu0 %1428
      %1430 = vrot.lane.b32.xlu0 %v1065, 8
      %v1431 = vpop.permute.xlu0 %1430
      %1432 = vrot.lane.b32.xlu0 %v1066, 8
      %v1433 = vpop.permute.xlu0 %1432
      %1434 = vrot.lane.b32.xlu0 %v1067, 8
      %v1435 = vpop.permute.xlu0 %1434
      %1436 = vrot.lane.b32.xlu0 %v1068, 8
      %v1437 = vpop.permute.xlu0 %1436
      %1438 = vrot.lane.b32.xlu0 %v1069, 8
      %v1439 = vpop.permute.xlu0 %1438
      %1440 = vrot.lane.b32.xlu0 %v1070, 8
      %v1441 = vpop.permute.xlu0 %1440
      %1442 = vrot.lane.b32.xlu0 %v1071, 8
      %v1443 = vpop.permute.xlu0 %1442
      %1444 = vrot.lane.b32.xlu0 %v1072, 8
      %v1445 = vpop.permute.xlu0 %1444
      %1446 = vrot.lane.b32.xlu0 %v1073, 8
      %v1447 = vpop.permute.xlu0 %1446
      %1448 = vrot.lane.b32.xlu0 %v1074, 8
      %v1449 = vpop.permute.xlu0 %1448
      %1450 = vrot.lane.b32.xlu0 %v1075, 8
      %v1451 = vpop.permute.xlu0 %1450
      %1452 = vrot.lane.b32.xlu0 %v1076, 8
      %v1453 = vpop.permute.xlu0 %1452
      %1454 = vrot.lane.b32.xlu0 %v1077, 8
      %v1455 = vpop.permute.xlu0 %1454
      %1456 = vrot.lane.b32.xlu0 %v1078, 8
      %v1457 = vpop.permute.xlu0 %1456
      %1458 = vrot.lane.b32.xlu0 %v1079, 8
      %v1459 = vpop.permute.xlu0 %1458
      %1460 = vrot.lane.b32.xlu0 %v1080, 8
      %v1461 = vpop.permute.xlu0 %1460
      %1462 = vrot.lane.b32.xlu0 %v1081, 8
      %v1463 = vpop.permute.xlu0 %1462
      %1464 = vrot.lane.b32.xlu0 %v1082, 8
      %v1465 = vpop.permute.xlu0 %1464
      %1466 = vrot.lane.b32.xlu0 %v1083, 8
      %v1467 = vpop.permute.xlu0 %1466
      %1532 = vrot.lane.b32.xlu0 %v1084, 16
      %v1533 = vpop.permute.xlu0 %1532
      %1534 = vrot.lane.b32.xlu0 %v1085, 16
      %v1535 = vpop.permute.xlu0 %1534
      %1536 = vrot.lane.b32.xlu0 %v1086, 16
      %v1537 = vpop.permute.xlu0 %1536
      %1538 = vrot.lane.b32.xlu0 %v1087, 16
      %v1539 = vpop.permute.xlu0 %1538
      %1540 = vrot.lane.b32.xlu0 %v1088, 16
      %v1541 = vpop.permute.xlu0 %1540
      %1542 = vrot.lane.b32.xlu0 %v1089, 16
      %v1543 = vpop.permute.xlu0 %1542
      %1544 = vrot.lane.b32.xlu0 %v1090, 16
      %v1545 = vpop.permute.xlu0 %1544
      %1546 = vrot.lane.b32.xlu0 %v1091, 16
      %v1547 = vpop.permute.xlu0 %1546
      %1548 = vrot.lane.b32.xlu0 %v1092, 16
      %v1549 = vpop.permute.xlu0 %1548
      %1550 = vrot.lane.b32.xlu0 %v1093, 16
      %v1551 = vpop.permute.xlu0 %1550
      %1552 = vrot.lane.b32.xlu0 %v1094, 16
      %v1553 = vpop.permute.xlu0 %1552
      %1554 = vrot.lane.b32.xlu0 %v1095, 16
      %v1555 = vpop.permute.xlu0 %1554
      %1556 = vrot.lane.b32.xlu0 %v1096, 16
      %v1557 = vpop.permute.xlu0 %1556
      %1558 = vrot.lane.b32.xlu0 %v1097, 16
      %v1559 = vpop.permute.xlu0 %1558
      %1560 = vrot.lane.b32.xlu0 %v1098, 16
      %v1561 = vpop.permute.xlu0 %1560
      %1562 = vrot.lane.b32.xlu0 %v1099, 16
      %v1563 = vpop.permute.xlu0 %1562
      %1564 = vrot.lane.b32.xlu0 %v1100, 16
      %v1565 = vpop.permute.xlu0 %1564
      %1566 = vrot.lane.b32.xlu0 %v1101, 16
      %v1567 = vpop.permute.xlu0 %1566
      %1568 = vrot.lane.b32.xlu0 %v1102, 16
      %v1569 = vpop.permute.xlu0 %1568
      %1570 = vrot.lane.b32.xlu0 %v1103, 16
      %v1571 = vpop.permute.xlu0 %1570
      %1572 = vrot.lane.b32.xlu0 %v1104, 16
      %v1573 = vpop.permute.xlu0 %1572
      %1574 = vrot.lane.b32.xlu0 %v1105, 16
      %v1575 = vpop.permute.xlu0 %1574
      %1576 = vrot.lane.b32.xlu0 %v1106, 16
      %v1577 = vpop.permute.xlu0 %1576
      %1578 = vrot.lane.b32.xlu0 %v1107, 16
      %v1579 = vpop.permute.xlu0 %1578
      %1580 = vrot.lane.b32.xlu0 %v1108, 16
      %v1581 = vpop.permute.xlu0 %1580
      %1582 = vrot.lane.b32.xlu0 %v1109, 16
      %v1583 = vpop.permute.xlu0 %1582
      %1584 = vrot.lane.b32.xlu0 %v1110, 16
      %v1585 = vpop.permute.xlu0 %1584
      %1586 = vrot.lane.b32.xlu0 %v1111, 16
      %v1587 = vpop.permute.xlu0 %1586
      %1588 = vrot.lane.b32.xlu0 %v1112, 16
      %v1589 = vpop.permute.xlu0 %1588
      %1590 = vrot.lane.b32.xlu0 %v1113, 16
      %v1591 = vpop.permute.xlu0 %1590
      %1592 = vrot.lane.b32.xlu0 %v1114, 16
      %v1593 = vpop.permute.xlu0 %1592
      %1594 = vrot.lane.b32.xlu0 %v1115, 16
      %v1595 = vpop.permute.xlu0 %1594
      %1628 = vrot.lane.b32.xlu0 %v1052, 12
      %v1629 = vpop.permute.xlu0 %1628
      %1630 = vrot.lane.b32.xlu0 %v1053, 12
      %v1631 = vpop.permute.xlu0 %1630
      %1632 = vrot.lane.b32.xlu0 %v1054, 12
      %v1633 = vpop.permute.xlu0 %1632
      %1634 = vrot.lane.b32.xlu0 %v1055, 12
      %v1635 = vpop.permute.xlu0 %1634
      %1636 = vrot.lane.b32.xlu0 %v1056, 12
      %v1637 = vpop.permute.xlu0 %1636
      %1638 = vrot.lane.b32.xlu0 %v1057, 12
      %v1639 = vpop.permute.xlu0 %1638
      %1640 = vrot.lane.b32.xlu0 %v1058, 12
      %v1641 = vpop.permute.xlu0 %1640
      %1642 = vrot.lane.b32.xlu0 %v1059, 12
      %v1643 = vpop.permute.xlu0 %1642
      %1644 = vrot.lane.b32.xlu0 %v1060, 12
      %v1645 = vpop.permute.xlu0 %1644
      %1646 = vrot.lane.b32.xlu0 %v1061, 12
      %v1647 = vpop.permute.xlu0 %1646
      %1648 = vrot.lane.b32.xlu0 %v1062, 12
      %v1649 = vpop.permute.xlu0 %1648
      %1650 = vrot.lane.b32.xlu0 %v1063, 12
      %v1651 = vpop.permute.xlu0 %1650
      %1652 = vrot.lane.b32.xlu0 %v1064, 12
      %v1653 = vpop.permute.xlu0 %1652
      %1654 = vrot.lane.b32.xlu0 %v1065, 12
      %v1655 = vpop.permute.xlu0 %1654
      %1656 = vrot.lane.b32.xlu0 %v1066, 12
      %v1657 = vpop.permute.xlu0 %1656
      %1658 = vrot.lane.b32.xlu0 %v1067, 12
      %v1659 = vpop.permute.xlu0 %1658
      %1660 = vrot.lane.b32.xlu0 %v1068, 12
      %v1661 = vpop.permute.xlu0 %1660
      %1662 = vrot.lane.b32.xlu0 %v1069, 12
      %v1663 = vpop.permute.xlu0 %1662
      %1664 = vrot.lane.b32.xlu0 %v1070, 12
      %v1665 = vpop.permute.xlu0 %1664
      %1666 = vrot.lane.b32.xlu0 %v1071, 12
      %v1667 = vpop.permute.xlu0 %1666
      %1668 = vrot.lane.b32.xlu0 %v1072, 12
      %v1669 = vpop.permute.xlu0 %1668
      %1670 = vrot.lane.b32.xlu0 %v1073, 12
      %v1671 = vpop.permute.xlu0 %1670
      %1672 = vrot.lane.b32.xlu0 %v1074, 12
      %v1673 = vpop.permute.xlu0 %1672
      %1674 = vrot.lane.b32.xlu0 %v1075, 12
      %v1675 = vpop.permute.xlu0 %1674
      %1676 = vrot.lane.b32.xlu0 %v1076, 12
      %v1677 = vpop.permute.xlu0 %1676
      %1678 = vrot.lane.b32.xlu0 %v1077, 12
      %v1679 = vpop.permute.xlu0 %1678
      %1680 = vrot.lane.b32.xlu0 %v1078, 12
      %v1681 = vpop.permute.xlu0 %1680
      %1682 = vrot.lane.b32.xlu0 %v1079, 12
      %v1683 = vpop.permute.xlu0 %1682
      %1684 = vrot.lane.b32.xlu0 %v1080, 12
      %v1685 = vpop.permute.xlu0 %1684
      %1686 = vrot.lane.b32.xlu0 %v1081, 12
      %v1687 = vpop.permute.xlu0 %1686
      %1688 = vrot.lane.b32.xlu0 %v1082, 12
      %v1689 = vpop.permute.xlu0 %1688
      %1690 = vrot.lane.b32.xlu0 %v1083, 12
      %v1691 = vpop.permute.xlu0 %1690
      %1724 = vrot.lane.b32.xlu0 %v1084, 20
      %v1725 = vpop.permute.xlu0 %1724
      %1726 = vrot.lane.b32.xlu0 %v1085, 20
      %v1727 = vpop.permute.xlu0 %1726
      %1728 = vrot.lane.b32.xlu0 %v1086, 20
      %v1729 = vpop.permute.xlu0 %1728
      %1730 = vrot.lane.b32.xlu0 %v1087, 20
      %v1731 = vpop.permute.xlu0 %1730
      %1732 = vrot.lane.b32.xlu0 %v1088, 20
      %v1733 = vpop.permute.xlu0 %1732
      %1734 = vrot.lane.b32.xlu0 %v1089, 20
      %v1735 = vpop.permute.xlu0 %1734
      %1736 = vrot.lane.b32.xlu0 %v1090, 20
      %v1737 = vpop.permute.xlu0 %1736
      %1738 = vrot.lane.b32.xlu0 %v1091, 20
      %v1739 = vpop.permute.xlu0 %1738
      %1740 = vrot.lane.b32.xlu0 %v1092, 20
      %v1741 = vpop.permute.xlu0 %1740
      %1742 = vrot.lane.b32.xlu0 %v1093, 20
      %v1743 = vpop.permute.xlu0 %1742
      %1744 = vrot.lane.b32.xlu0 %v1094, 20
      %v1745 = vpop.permute.xlu0 %1744
      %1746 = vrot.lane.b32.xlu0 %v1095, 20
      %v1747 = vpop.permute.xlu0 %1746
      %1748 = vrot.lane.b32.xlu0 %v1096, 20
      %v1749 = vpop.permute.xlu0 %1748
      %1750 = vrot.lane.b32.xlu0 %v1097, 20
      %v1751 = vpop.permute.xlu0 %1750
      %1752 = vrot.lane.b32.xlu0 %v1098, 20
      %v1753 = vpop.permute.xlu0 %1752
      %1754 = vrot.lane.b32.xlu0 %v1099, 20
      %v1755 = vpop.permute.xlu0 %1754
      %1756 = vrot.lane.b32.xlu0 %v1100, 20
      %v1757 = vpop.permute.xlu0 %1756
      %1758 = vrot.lane.b32.xlu0 %v1101, 20
      %v1759 = vpop.permute.xlu0 %1758
      %1760 = vrot.lane.b32.xlu0 %v1102, 20
      %v1761 = vpop.permute.xlu0 %1760
      %1762 = vrot.lane.b32.xlu0 %v1103, 20
      %v1763 = vpop.permute.xlu0 %1762
      %1764 = vrot.lane.b32.xlu0 %v1104, 20
      %v1765 = vpop.permute.xlu0 %1764
      %1766 = vrot.lane.b32.xlu0 %v1105, 20
      %v1767 = vpop.permute.xlu0 %1766
      %1768 = vrot.lane.b32.xlu0 %v1106, 20
      %v1769 = vpop.permute.xlu0 %1768
      %1770 = vrot.lane.b32.xlu0 %v1107, 20
      %v1771 = vpop.permute.xlu0 %1770
      %1772 = vrot.lane.b32.xlu0 %v1108, 20
      %v1773 = vpop.permute.xlu0 %1772
      %1774 = vrot.lane.b32.xlu0 %v1109, 20
      %v1775 = vpop.permute.xlu0 %1774
      %1776 = vrot.lane.b32.xlu0 %v1110, 20
      %v1777 = vpop.permute.xlu0 %1776
      %1778 = vrot.lane.b32.xlu0 %v1111, 20
      %v1779 = vpop.permute.xlu0 %1778
      %1780 = vrot.lane.b32.xlu0 %v1112, 20
      %v1781 = vpop.permute.xlu0 %1780
      %1782 = vrot.lane.b32.xlu0 %v1113, 20
      %v1783 = vpop.permute.xlu0 %1782
      %1784 = vrot.lane.b32.xlu0 %v1114, 20
      %v1785 = vpop.permute.xlu0 %1784
      %1786 = vrot.lane.b32.xlu0 %v1115, 20
      %v1787 = vpop.permute.xlu0 %1786
      %v1820 = vsel %vm308, %v1149, %v1277
      %v1821 = vsel %vm308, %v1151, %v1279
      %v1822 = vsel %vm308, %v1153, %v1281
      %v1823 = vsel %vm308, %v1155, %v1283
      %v1824 = vsel %vm308, %v1157, %v1285
      %v1825 = vsel %vm308, %v1159, %v1287
      %v1826 = vsel %vm308, %v1161, %v1289
      %v1827 = vsel %vm308, %v1163, %v1291
      %v1828 = vsel %vm308, %v1165, %v1293
      %v1829 = vsel %vm308, %v1167, %v1295
      %v1830 = vsel %vm308, %v1169, %v1297
      %v1831 = vsel %vm308, %v1171, %v1299
      %v1832 = vsel %vm308, %v1173, %v1301
      %v1833 = vsel %vm308, %v1175, %v1303
      %v1834 = vsel %vm308, %v1177, %v1305
      %v1835 = vsel %vm308, %v1179, %v1307
      %v1836 = vsel %vm308, %v1181, %v1309
      %v1837 = vsel %vm308, %v1183, %v1311
      %v1838 = vsel %vm308, %v1185, %v1313
      %v1839 = vsel %vm308, %v1187, %v1315
      %v1840 = vsel %vm308, %v1189, %v1317
      %v1841 = vsel %vm308, %v1191, %v1319
      %v1842 = vsel %vm308, %v1193, %v1321
      %v1843 = vsel %vm308, %v1195, %v1323
      %v1844 = vsel %vm308, %v1197, %v1325
      %v1845 = vsel %vm308, %v1199, %v1327
      %v1846 = vsel %vm308, %v1201, %v1329
      %v1847 = vsel %vm308, %v1203, %v1331
      %v1848 = vsel %vm308, %v1205, %v1333
      %v1849 = vsel %vm308, %v1207, %v1335
      %v1850 = vsel %vm308, %v1209, %v1337
      %v1851 = vsel %vm308, %v1211, %v1339
      %vm1852 = vcmask 64512
      %v1853 = vsel %vm1852, %v1820, %v1277
      %v1854 = vsel %vm1852, %v1821, %v1279
      %v1855 = vsel %vm1852, %v1822, %v1281
      %v1856 = vsel %vm1852, %v1823, %v1283
      %v1857 = vsel %vm1852, %v1824, %v1285
      %v1858 = vsel %vm1852, %v1825, %v1287
      %v1859 = vsel %vm1852, %v1826, %v1289
      %v1860 = vsel %vm1852, %v1827, %v1291
      %v1861 = vsel %vm1852, %v1828, %v1293
      %v1862 = vsel %vm1852, %v1829, %v1295
      %v1863 = vsel %vm1852, %v1830, %v1297
      %v1864 = vsel %vm1852, %v1831, %v1299
      %v1865 = vsel %vm1852, %v1832, %v1301
      %v1866 = vsel %vm1852, %v1833, %v1303
      %v1867 = vsel %vm1852, %v1834, %v1305
      %v1868 = vsel %vm1852, %v1835, %v1307
      %v1869 = vsel %vm1852, %v1836, %v1309
      %v1870 = vsel %vm1852, %v1837, %v1311
      %v1871 = vsel %vm1852, %v1838, %v1313
      %v1872 = vsel %vm1852, %v1839, %v1315
      %v1873 = vsel %vm1852, %v1840, %v1317
      %v1874 = vsel %vm1852, %v1841, %v1319
      %v1875 = vsel %vm1852, %v1842, %v1321
      %v1876 = vsel %vm1852, %v1843, %v1323
      %v1877 = vsel %vm1852, %v1844, %v1325
      %v1878 = vsel %vm1852, %v1845, %v1327
      %v1879 = vsel %vm1852, %v1846, %v1329
      %v1880 = vsel %vm1852, %v1847, %v1331
      %v1881 = vsel %vm1852, %v1848, %v1333
      %v1882 = vsel %vm1852, %v1849, %v1335
      %v1883 = vsel %vm1852, %v1850, %v1337
      %v1884 = vsel %vm1852, %v1851, %v1339
      %vm1885 = vcmask 97280
      %v1886 = vsel %vm1885, %v1853, %v1405
      %v1887 = vsel %vm1885, %v1854, %v1407
      %v1888 = vsel %vm1885, %v1855, %v1409
      %v1889 = vsel %vm1885, %v1856, %v1411
      %v1890 = vsel %vm1885, %v1857, %v1413
      %v1891 = vsel %vm1885, %v1858, %v1415
      %v1892 = vsel %vm1885, %v1859, %v1417
      %v1893 = vsel %vm1885, %v1860, %v1419
      %v1894 = vsel %vm1885, %v1861, %v1421
      %v1895 = vsel %vm1885, %v1862, %v1423
      %v1896 = vsel %vm1885, %v1863, %v1425
      %v1897 = vsel %vm1885, %v1864, %v1427
      %v1898 = vsel %vm1885, %v1865, %v1429
      %v1899 = vsel %vm1885, %v1866, %v1431
      %v1900 = vsel %vm1885, %v1867, %v1433
      %v1901 = vsel %vm1885, %v1868, %v1435
      %v1902 = vsel %vm1885, %v1869, %v1437
      %v1903 = vsel %vm1885, %v1870, %v1439
      %v1904 = vsel %vm1885, %v1871, %v1441
      %v1905 = vsel %vm1885, %v1872, %v1443
      %v1906 = vsel %vm1885, %v1873, %v1445
      %v1907 = vsel %vm1885, %v1874, %v1447
      %v1908 = vsel %vm1885, %v1875, %v1449
      %v1909 = vsel %vm1885, %v1876, %v1451
      %v1910 = vsel %vm1885, %v1877, %v1453
      %v1911 = vsel %vm1885, %v1878, %v1455
      %v1912 = vsel %vm1885, %v1879, %v1457
      %v1913 = vsel %vm1885, %v1880, %v1459
      %v1914 = vsel %vm1885, %v1881, %v1461
      %v1915 = vsel %vm1885, %v1882, %v1463
      %v1916 = vsel %vm1885, %v1883, %v1465
      %v1917 = vsel %vm1885, %v1884, %v1467
      %v1918 = vsel %vm702, %v1886, %v1533
      %v1919 = vsel %vm702, %v1887, %v1535
      %v1920 = vsel %vm702, %v1888, %v1537
      %v1921 = vsel %vm702, %v1889, %v1539
      %v1922 = vsel %vm702, %v1890, %v1541
      %v1923 = vsel %vm702, %v1891, %v1543
      %v1924 = vsel %vm702, %v1892, %v1545
      %v1925 = vsel %vm702, %v1893, %v1547
      %v1926 = vsel %vm702, %v1894, %v1549
      %v1927 = vsel %vm702, %v1895, %v1551
      %v1928 = vsel %vm702, %v1896, %v1553
      %v1929 = vsel %vm702, %v1897, %v1555
      %v1930 = vsel %vm702, %v1898, %v1557
      %v1931 = vsel %vm702, %v1899, %v1559
      %v1932 = vsel %vm702, %v1900, %v1561
      %v1933 = vsel %vm702, %v1901, %v1563
      %v1934 = vsel %vm702, %v1902, %v1565
      %v1935 = vsel %vm702, %v1903, %v1567
      %v1936 = vsel %vm702, %v1904, %v1569
      %v1937 = vsel %vm702, %v1905, %v1571
      %v1938 = vsel %vm702, %v1906, %v1573
      %v1939 = vsel %vm702, %v1907, %v1575
      %v1940 = vsel %vm702, %v1908, %v1577
      %v1941 = vsel %vm702, %v1909, %v1579
      %v1942 = vsel %vm702, %v1910, %v1581
      %v1943 = vsel %vm702, %v1911, %v1583
      %v1944 = vsel %vm702, %v1912, %v1585
      %v1945 = vsel %vm702, %v1913, %v1587
      %v1946 = vsel %vm702, %v1914, %v1589
      %v1947 = vsel %vm702, %v1915, %v1591
      %v1948 = vsel %vm702, %v1916, %v1593
      %v1949 = vsel %vm702, %v1917, %v1595
      %vm1950 = vcmask 162816
      %v1951 = vsel %vm1950, %v1918, %v1533
      %v1952 = vsel %vm1950, %v1919, %v1535
      %v1953 = vsel %vm1950, %v1920, %v1537
      %v1954 = vsel %vm1950, %v1921, %v1539
      %v1955 = vsel %vm1950, %v1922, %v1541
      %v1956 = vsel %vm1950, %v1923, %v1543
      %v1957 = vsel %vm1950, %v1924, %v1545
      %v1958 = vsel %vm1950, %v1925, %v1547
      %v1959 = vsel %vm1950, %v1926, %v1549
      %v1960 = vsel %vm1950, %v1927, %v1551
      %v1961 = vsel %vm1950, %v1928, %v1553
      %v1962 = vsel %vm1950, %v1929, %v1555
      %v1963 = vsel %vm1950, %v1930, %v1557
      %v1964 = vsel %vm1950, %v1931, %v1559
      %v1965 = vsel %vm1950, %v1932, %v1561
      %v1966 = vsel %vm1950, %v1933, %v1563
      %v1967 = vsel %vm1950, %v1934, %v1565
      %v1968 = vsel %vm1950, %v1935, %v1567
      %v1969 = vsel %vm1950, %v1936, %v1569
      %v1970 = vsel %vm1950, %v1937, %v1571
      %v1971 = vsel %vm1950, %v1938, %v1573
      %v1972 = vsel %vm1950, %v1939, %v1575
      %v1973 = vsel %vm1950, %v1940, %v1577
      %v1974 = vsel %vm1950, %v1941, %v1579
      %v1975 = vsel %vm1950, %v1942, %v1581
      %v1976 = vsel %vm1950, %v1943, %v1583
      %v1977 = vsel %vm1950, %v1944, %v1585
      %v1978 = vsel %vm1950, %v1945, %v1587
      %v1979 = vsel %vm1950, %v1946, %v1589
      %v1980 = vsel %vm1950, %v1947, %v1591
      %v1981 = vsel %vm1950, %v1948, %v1593
      %v1982 = vsel %vm1950, %v1949, %v1595
      %vm1983 = vcmask 195584
      %v1984 = vsel %vm1983, %v1951, %v1629
      %v1985 = vsel %vm1983, %v1952, %v1631
      %v1986 = vsel %vm1983, %v1953, %v1633
      %v1987 = vsel %vm1983, %v1954, %v1635
      %v1988 = vsel %vm1983, %v1955, %v1637
      %v1989 = vsel %vm1983, %v1956, %v1639
      %v1990 = vsel %vm1983, %v1957, %v1641
      %v1991 = vsel %vm1983, %v1958, %v1643
      %v1992 = vsel %vm1983, %v1959, %v1645
      %v1993 = vsel %vm1983, %v1960, %v1647
      %v1994 = vsel %vm1983, %v1961, %v1649
      %v1995 = vsel %vm1983, %v1962, %v1651
      %v1996 = vsel %vm1983, %v1963, %v1653
      %v1997 = vsel %vm1983, %v1964, %v1655
      %v1998 = vsel %vm1983, %v1965, %v1657
      %v1999 = vsel %vm1983, %v1966, %v1659
      %v2000 = vsel %vm1983, %v1967, %v1661
      %v2001 = vsel %vm1983, %v1968, %v1663
      %v2002 = vsel %vm1983, %v1969, %v1665
      %v2003 = vsel %vm1983, %v1970, %v1667
      %v2004 = vsel %vm1983, %v1971, %v1669
      %v2005 = vsel %vm1983, %v1972, %v1671
      %v2006 = vsel %vm1983, %v1973, %v1673
      %v2007 = vsel %vm1983, %v1974, %v1675
      %v2008 = vsel %vm1983, %v1975, %v1677
      %v2009 = vsel %vm1983, %v1976, %v1679
      %v2010 = vsel %vm1983, %v1977, %v1681
      %v2011 = vsel %vm1983, %v1978, %v1683
      %v2012 = vsel %vm1983, %v1979, %v1685
      %v2013 = vsel %vm1983, %v1980, %v1687
      %v2014 = vsel %vm1983, %v1981, %v1689
      %v2015 = vsel %vm1983, %v1982, %v1691
      %vm2016 = vcmask 228352
      %v2017 = vsel %vm2016, %v1984, %v1725
      %v2018 = vsel %vm2016, %v1985, %v1727
      %v2019 = vsel %vm2016, %v1986, %v1729
      %v2020 = vsel %vm2016, %v1987, %v1731
      %v2021 = vsel %vm2016, %v1988, %v1733
      %v2022 = vsel %vm2016, %v1989, %v1735
      %v2023 = vsel %vm2016, %v1990, %v1737
      %v2024 = vsel %vm2016, %v1991, %v1739
      %v2025 = vsel %vm2016, %v1992, %v1741
      %v2026 = vsel %vm2016, %v1993, %v1743
      %v2027 = vsel %vm2016, %v1994, %v1745
      %v2028 = vsel %vm2016, %v1995, %v1747
      %v2029 = vsel %vm2016, %v1996, %v1749
      %v2030 = vsel %vm2016, %v1997, %v1751
      %v2031 = vsel %vm2016, %v1998, %v1753
      %v2032 = vsel %vm2016, %v1999, %v1755
      %v2033 = vsel %vm2016, %v2000, %v1757
      %v2034 = vsel %vm2016, %v2001, %v1759
      %v2035 = vsel %vm2016, %v2002, %v1761
      %v2036 = vsel %vm2016, %v2003, %v1763
      %v2037 = vsel %vm2016, %v2004, %v1765
      %v2038 = vsel %vm2016, %v2005, %v1767
      %v2039 = vsel %vm2016, %v2006, %v1769
      %v2040 = vsel %vm2016, %v2007, %v1771
      %v2041 = vsel %vm2016, %v2008, %v1773
      %v2042 = vsel %vm2016, %v2009, %v1775
      %v2043 = vsel %vm2016, %v2010, %v1777
      %v2044 = vsel %vm2016, %v2011, %v1779
      %v2045 = vsel %vm2016, %v2012, %v1781
      %v2046 = vsel %vm2016, %v2013, %v1783
      %v2047 = vsel %vm2016, %v2014, %v1785
      %v2048 = vsel %vm2016, %v2015, %v1787
      %vm2049 = vcmask 261120
      %v2050 = vsel %vm2049, %v2017, %v1725
      %v2051 = vsel %vm2049, %v2018, %v1727
      %v2052 = vsel %vm2049, %v2019, %v1729
      %v2053 = vsel %vm2049, %v2020, %v1731
      %v2054 = vsel %vm2049, %v2021, %v1733
      %v2055 = vsel %vm2049, %v2022, %v1735
      %v2056 = vsel %vm2049, %v2023, %v1737
      %v2057 = vsel %vm2049, %v2024, %v1739
      %v2058 = vsel %vm2049, %v2025, %v1741
      %v2059 = vsel %vm2049, %v2026, %v1743
      %v2060 = vsel %vm2049, %v2027, %v1745
      %v2061 = vsel %vm2049, %v2028, %v1747
      %v2062 = vsel %vm2049, %v2029, %v1749
      %v2063 = vsel %vm2049, %v2030, %v1751
      %v2064 = vsel %vm2049, %v2031, %v1753
      %v2065 = vsel %vm2049, %v2032, %v1755
      %v2066 = vsel %vm2049, %v2033, %v1757
      %v2067 = vsel %vm2049, %v2034, %v1759
      %v2068 = vsel %vm2049, %v2035, %v1761
      %v2069 = vsel %vm2049, %v2036, %v1763
      %v2070 = vsel %vm2049, %v2037, %v1765
      %v2071 = vsel %vm2049, %v2038, %v1767
      %v2072 = vsel %vm2049, %v2039, %v1769
      %v2073 = vsel %vm2049, %v2040, %v1771
      %v2074 = vsel %vm2049, %v2041, %v1773
      %v2075 = vsel %vm2049, %v2042, %v1775
      %v2076 = vsel %vm2049, %v2043, %v1777
      %v2077 = vsel %vm2049, %v2044, %v1779
      %v2078 = vsel %vm2049, %v2045, %v1781
      %v2079 = vsel %vm2049, %v2046, %v1783
      %v2080 = vsel %vm2049, %v2047, %v1785
      %v2081 = vsel %vm2049, %v2048, %v1787
      %v2082 = vld [vmem:[%s3] sm:$0xff]
      %v2083 = vld [vmem:[%s3 + $0x8] sm:$0xff]
      %v2084 = vld [vmem:[%s3 + $0x10] sm:$0xff]
      %v2085 = vld [vmem:[%s3 + $0x18] sm:$0xff]
      %v2086 = vld [vmem:[%s3 + $0x20] sm:$0xf]
      %vm2087 = vcmask 293888
      %v2089 = vsel %vm2087, %v2050, 0
      %v2092 = vsel %vm2087, %v2051, 0
      %v2095 = vsel %vm2087, %v2052, 0
      %v2098 = vsel %vm2087, %v2053, 0
      %v2101 = vsel %vm2087, %v2054, 0
      %v2104 = vsel %vm2087, %v2055, 0
      %v2107 = vsel %vm2087, %v2056, 0
      %v2110 = vsel %vm2087, %v2057, 0
      %v2113 = vsel %vm2087, %v2058, 0
      %v2116 = vsel %vm2087, %v2059, 0
      %v2119 = vsel %vm2087, %v2060, 0
      %v2122 = vsel %vm2087, %v2061, 0
      %v2125 = vsel %vm2087, %v2062, 0
      %v2128 = vsel %vm2087, %v2063, 0
      %v2131 = vsel %vm2087, %v2064, 0
      %v2134 = vsel %vm2087, %v2065, 0
      %v2137 = vsel %vm2087, %v2066, 0
      %v2140 = vsel %vm2087, %v2067, 0
      %v2143 = vsel %vm2087, %v2068, 0
      %v2146 = vsel %vm2087, %v2069, 0
      %v2149 = vsel %vm2087, %v2070, 0
      %v2152 = vsel %vm2087, %v2071, 0
      %v2155 = vsel %vm2087, %v2072, 0
      %v2158 = vsel %vm2087, %v2073, 0
      %v2161 = vsel %vm2087, %v2074, 0
      %v2164 = vsel %vm2087, %v2075, 0
      %v2167 = vsel %vm2087, %v2076, 0
      %v2170 = vsel %vm2087, %v2077, 0
      %v2173 = vsel %vm2087, %v2078, 0
      %v2176 = vsel %vm2087, %v2079, 0
      %v2179 = vsel %vm2087, %v2080, 0
      %v2182 = vsel %vm2087, %v2081, 0
      %v2185 = vsel %vm417, %v2086, 0
      %2187 = vmatprep.subr.mxu0 0.0
      %2188 = vmatpush1.msra.mxu0 %v2082
      %2189 = vmatprep.subr.mxu0 0.0
      %2190 = vmatpush1.msra.mxu0 %v2083
      %2191 = vmatprep.subr.mxu0 0.0
      %2192 = vmatpush1.msra.mxu0 %v2084
      %2193 = vmatprep.subr.mxu0 0.0
      %2194 = vmatpush1.msra.mxu0 %v2085
      %2195 = vmatprep.subr.mxu0 0.0
      %2196 = vmatpush1.msra.mxu0 %v2185
      %2197 = vmatprep.subr.mxu0 0.0
      %2198 = vmatpush1.msra.mxu0 0.0
      %2199 = vmatprep.subr.mxu0 0.0
      %2200 = vmatpush1.msra.mxu0 0.0
      %2201 = vmatprep.subr.mxu0 0.0
      %2202 = vmatpush1.msra.mxu0 0.0
      %2203 = vmatprep.subr.mxu0 0.0
      %2204 = vmatpush1.msra.mxu0 0.0
      %2205 = vmatprep.subr.mxu0 0.0
      %2206 = vmatpush1.msra.mxu0 0.0
      %2207 = vmatprep.subr.mxu0 0.0
      %2208 = vmatpush1.msra.mxu0 0.0
      %2209 = vmatprep.subr.mxu0 0.0
      %2210 = vmatpush1.msra.mxu0 0.0
      %2211 = vmatprep.subr.mxu0 0.0
      %2212 = vmatpush1.msra.mxu0 0.0
      %2213 = vmatprep.subr.mxu0 0.0
      %2214 = vmatpush1.msra.mxu0 0.0
      %2215 = vmatprep.subr.mxu0 0.0
      %2216 = vmatpush1.msra.mxu0 0.0
      %2217 = vmatprep.subr.mxu0 0.0
      %2218 = vmatpush1.msra.mxu0 0.0
      %2219 = vmatprep.subr.mxu0 0.0
      %2220 = vmatpush1.msra.mxu0 0.0
      %2221 = vmatprep.subr.mxu0 0.0
      %2222 = vmatpush1.msra.mxu0 0.0
      %2223 = vmatprep.subr.mxu0 0.0
      %2224 = vmatpush1.msra.mxu0 0.0
      %2225 = vmatprep.subr.mxu0 0.0
      %2226 = vmatpush1.msra.mxu0 0.0
      %2227 = vmatprep.subr.mxu0 0.0
      %2228 = vmatpush1.msra.mxu0 0.0
      %2229 = vmatprep.subr.mxu0 0.0
      %2230 = vmatpush1.msra.mxu0 0.0
      %2231 = vmatprep.subr.mxu0 0.0
      %2232 = vmatpush1.msra.mxu0 0.0
      %2233 = vmatprep.subr.mxu0 0.0
      %2234 = vmatpush1.msra.mxu0 0.0
      %2235 = vmatprep.subr.mxu0 0.0
      %2236 = vmatpush1.msra.mxu0 0.0
      %2237 = vmatprep.subr.mxu0 0.0
      %2238 = vmatpush1.msra.mxu0 0.0
      %2239 = vmatprep.subr.mxu0 0.0
      %2240 = vmatpush1.msra.mxu0 0.0
      %2241 = vmatprep.subr.mxu0 0.0
      %2242 = vmatpush1.msra.mxu0 0.0
      %2243 = vmatprep.subr.mxu0 0.0
      %2244 = vmatpush1.msra.mxu0 0.0
      %2245 = vmatprep.subr.mxu0 0.0
      %2246 = vmatpush1.msra.mxu0 0.0
      %2247 = vmatprep.subr.mxu0 0.0
      %2248 = vmatpush1.msra.mxu0 0.0
      %2249 = vmatprep.subr.mxu0 0.0
      %2250 = vmatpush1.msra.mxu0 0.0
      %2251 = vmatprep.mubr.f32.mxu0 0.0
      %2252 = vmatmul.mubr.f32.gmra.mrb[0].mxu0 %v2089
      %v2253 = vpop.f32.mrb[0].mxu0
      %v2254 = vadd.f32 0.0, %v2253
      %v2255 = vpop.f32.mrb[0].mxu0
      %2256 = vmatprep.mubr.f32.mxu0 0.0
      %2257 = vmatmul.mubr.f32.gmra.mrb[0].mxu0 %v2092
      %v2258 = vpop.f32.mrb[0].mxu0
      %v2259 = vadd.f32 0.0, %v2258
      %v2260 = vpop.f32.mrb[0].mxu0
      %2261 = vmatprep.mubr.f32.mxu0 0.0
      %2262 = vmatmul.mubr.f32.gmra.mrb[0].mxu0 %v2095
      %v2263 = vpop.f32.mrb[0].mxu0
      %v2264 = vadd.f32 0.0, %v2263
      %v2265 = vpop.f32.mrb[0].mxu0
      %2266 = vmatprep.mubr.f32.mxu0 0.0
      %2267 = vmatmul.mubr.f32.gmra.mrb[0].mxu0 %v2098
      %v2268 = vpop.f32.mrb[0].mxu0
      %v2269 = vadd.f32 0.0, %v2268
      %v2270 = vpop.f32.mrb[0].mxu0
      %2271 = vmatprep.mubr.f32.mxu0 0.0
      %2272 = vmatmul.mubr.f32.gmra.mrb[0].mxu0 %v2101
      %v2273 = vpop.f32.mrb[0].mxu0
      %v2274 = vadd.f32 0.0, %v2273
      %v2275 = vpop.f32.mrb[0].mxu0
      %2276 = vmatprep.mubr.f32.mxu0 0.0
      %2277 = vmatmul.mubr.f32.gmra.mrb[0].mxu0 %v2104
      %v2278 = vpop.f32.mrb[0].mxu0
      %v2279 = vadd.f32 0.0, %v2278
      %v2280 = vpop.f32.mrb[0].mxu0
      %2281 = vmatprep.mubr.f32.mxu0 0.0
      %2282 = vmatmul.mubr.f32.gmra.mrb[0].mxu0 %v2107
      %v2283 = vpop.f32.mrb[0].mxu0
      %v2284 = vadd.f32 0.0, %v2283
      %v2285 = vpop.f32.mrb[0].mxu0
      %2286 = vmatprep.mubr.f32.mxu0 0.0
      %2287 = vmatmul.mubr.f32.gmra.mrb[0].mxu0 %v2110
      %v2288 = vpop.f32.mrb[0].mxu0
      %v2289 = vadd.f32 0.0, %v2288
      %v2290 = vpop.f32.mrb[0].mxu0
      %2291 = vmatprep.mubr.f32.mxu0 0.0
      %2292 = vmatmul.mubr.f32.gmra.mrb[0].mxu0 %v2113
      %v2293 = vpop.f32.mrb[0].mxu0
      %v2294 = vadd.f32 0.0, %v2293
      %v2295 = vpop.f32.mrb[0].mxu0
      %2296 = vmatprep.mubr.f32.mxu0 0.0
      %2297 = vmatmul.mubr.f32.gmra.mrb[0].mxu0 %v2116
      %v2298 = vpop.f32.mrb[0].mxu0
      %v2299 = vadd.f32 0.0, %v2298
      %v2300 = vpop.f32.mrb[0].mxu0
      %2301 = vmatprep.mubr.f32.mxu0 0.0
      %2302 = vmatmul.mubr.f32.gmra.mrb[0].mxu0 %v2119
      %v2303 = vpop.f32.mrb[0].mxu0
      %v2304 = vadd.f32 0.0, %v2303
      %v2305 = vpop.f32.mrb[0].mxu0
      %2306 = vmatprep.mubr.f32.mxu0 0.0
      %2307 = vmatmul.mubr.f32.gmra.mrb[0].mxu0 %v2122
      %v2308 = vpop.f32.mrb[0].mxu0
      %v2309 = vadd.f32 0.0, %v2308
      %v2310 = vpop.f32.mrb[0].mxu0
      %2311 = vmatprep.mubr.f32.mxu0 0.0
      %2312 = vmatmul.mubr.f32.gmra.mrb[0].mxu0 %v2125
      %v2313 = vpop.f32.mrb[0].mxu0
      %v2314 = vadd.f32 0.0, %v2313
      %v2315 = vpop.f32.mrb[0].mxu0
      %2316 = vmatprep.mubr.f32.mxu0 0.0
      %2317 = vmatmul.mubr.f32.gmra.mrb[0].mxu0 %v2128
      %v2318 = vpop.f32.mrb[0].mxu0
      %v2319 = vadd.f32 0.0, %v2318
      %v2320 = vpop.f32.mrb[0].mxu0
      %2321 = vmatprep.mubr.f32.mxu0 0.0
      %2322 = vmatmul.mubr.f32.gmra.mrb[0].mxu0 %v2131
      %v2323 = vpop.f32.mrb[0].mxu0
      %v2324 = vadd.f32 0.0, %v2323
      %v2325 = vpop.f32.mrb[0].mxu0
      %2326 = vmatprep.mubr.f32.mxu0 0.0
      %2327 = vmatmul.mubr.f32.gmra.mrb[0].mxu0 %v2134
      %v2328 = vpop.f32.mrb[0].mxu0
      %v2329 = vadd.f32 0.0, %v2328
      %v2330 = vpop.f32.mrb[0].mxu0
      %2331 = vmatprep.mubr.f32.mxu0 0.0
      %2332 = vmatmul.mubr.f32.gmra.mrb[0].mxu0 %v2137
      %v2333 = vpop.f32.mrb[0].mxu0
      %v2334 = vadd.f32 0.0, %v2333
      %v2335 = vpop.f32.mrb[0].mxu0
      %2336 = vmatprep.mubr.f32.mxu0 0.0
      %2337 = vmatmul.mubr.f32.gmra.mrb[0].mxu0 %v2140
      %v2338 = vpop.f32.mrb[0].mxu0
      %v2339 = vadd.f32 0.0, %v2338
      %v2340 = vpop.f32.mrb[0].mxu0
      %2341 = vmatprep.mubr.f32.mxu0 0.0
      %2342 = vmatmul.mubr.f32.gmra.mrb[0].mxu0 %v2143
      %v2343 = vpop.f32.mrb[0].mxu0
      %v2344 = vadd.f32 0.0, %v2343
      %v2345 = vpop.f32.mrb[0].mxu0
      %2346 = vmatprep.mubr.f32.mxu0 0.0
      %2347 = vmatmul.mubr.f32.gmra.mrb[0].mxu0 %v2146
      %v2348 = vpop.f32.mrb[0].mxu0
      %v2349 = vadd.f32 0.0, %v2348
      %v2350 = vpop.f32.mrb[0].mxu0
      %2351 = vmatprep.mubr.f32.mxu0 0.0
      %2352 = vmatmul.mubr.f32.gmra.mrb[0].mxu0 %v2149
      %v2353 = vpop.f32.mrb[0].mxu0
      %v2354 = vadd.f32 0.0, %v2353
      %v2355 = vpop.f32.mrb[0].mxu0
      %2356 = vmatprep.mubr.f32.mxu0 0.0
      %2357 = vmatmul.mubr.f32.gmra.mrb[0].mxu0 %v2152
      %v2358 = vpop.f32.mrb[0].mxu0
      %v2359 = vadd.f32 0.0, %v2358
      %v2360 = vpop.f32.mrb[0].mxu0
      %2361 = vmatprep.mubr.f32.mxu0 0.0
      %2362 = vmatmul.mubr.f32.gmra.mrb[0].mxu0 %v2155
      %v2363 = vpop.f32.mrb[0].mxu0
      %v2364 = vadd.f32 0.0, %v2363
      %v2365 = vpop.f32.mrb[0].mxu0
      %2366 = vmatprep.mubr.f32.mxu0 0.0
      %2367 = vmatmul.mubr.f32.gmra.mrb[0].mxu0 %v2158
      %v2368 = vpop.f32.mrb[0].mxu0
      %v2369 = vadd.f32 0.0, %v2368
      %v2370 = vpop.f32.mrb[0].mxu0
      %2371 = vmatprep.mubr.f32.mxu0 0.0
      %2372 = vmatmul.mubr.f32.gmra.mrb[0].mxu0 %v2161
      %v2373 = vpop.f32.mrb[0].mxu0
      %v2374 = vadd.f32 0.0, %v2373
      %v2375 = vpop.f32.mrb[0].mxu0
      %2376 = vmatprep.mubr.f32.mxu0 0.0
      %2377 = vmatmul.mubr.f32.gmra.mrb[0].mxu0 %v2164
      %v2378 = vpop.f32.mrb[0].mxu0
      %v2379 = vadd.f32 0.0, %v2378
      %v2380 = vpop.f32.mrb[0].mxu0
      %2381 = vmatprep.mubr.f32.mxu0 0.0
      %2382 = vmatmul.mubr.f32.gmra.mrb[0].mxu0 %v2167
      %v2383 = vpop.f32.mrb[0].mxu0
      %v2384 = vadd.f32 0.0, %v2383
      %v2385 = vpop.f32.mrb[0].mxu0
      %2386 = vmatprep.mubr.f32.mxu0 0.0
      %2387 = vmatmul.mubr.f32.gmra.mrb[0].mxu0 %v2170
      %v2388 = vpop.f32.mrb[0].mxu0
      %v2389 = vadd.f32 0.0, %v2388
      %v2390 = vpop.f32.mrb[0].mxu0
      %2391 = vmatprep.mubr.f32.mxu0 0.0
      %2392 = vmatmul.mubr.f32.gmra.mrb[0].mxu0 %v2173
      %v2393 = vpop.f32.mrb[0].mxu0
      %v2394 = vadd.f32 0.0, %v2393
      %v2395 = vpop.f32.mrb[0].mxu0
      %2396 = vmatprep.mubr.f32.mxu0 0.0
      %2397 = vmatmul.mubr.f32.gmra.mrb[0].mxu0 %v2176
      %v2398 = vpop.f32.mrb[0].mxu0
      %v2399 = vadd.f32 0.0, %v2398
      %v2400 = vpop.f32.mrb[0].mxu0
      %2401 = vmatprep.mubr.f32.mxu0 0.0
      %2402 = vmatmul.mubr.f32.gmra.mrb[0].mxu0 %v2179
      %v2403 = vpop.f32.mrb[0].mxu0
      %v2404 = vadd.f32 0.0, %v2403
      %v2405 = vpop.f32.mrb[0].mxu0
      %2406 = vmatprep.mubr.f32.mxu0 0.0
      %2407 = vmatmul.mubr.f32.gmra.mrb[0].mxu0 %v2182
      %v2408 = vpop.f32.mrb[0].mxu0
      %v2409 = vadd.f32 0.0, %v2408
      %v2410 = vpop.f32.mrb[0].mxu0
      %2411 = vdwg.mxu0
      %v2412 = vld [vmem:[#allocation2 + $0x2] sm:$0xff]
      %v2413 = vld [vmem:[#allocation2 + $0xa] sm:$0xff]
      %v2414 = vld [vmem:[#allocation2 + $0x1a] sm:$0xff]
      %v2415 = vld [vmem:[#allocation2 + $0x22] sm:$0xff]
      %v2416 = vld [vmem:[#allocation2 + $0x32] sm:$0xff]
      %v2417 = vld [vmem:[#allocation2 + $0x3a] sm:$0xff]
      %v2418 = vld [vmem:[#allocation2 + $0x4a] sm:$0xff]
      %v2419 = vld [vmem:[#allocation2 + $0x52] sm:$0xff]
      %v2420 = vld [vmem:[#allocation2 + $0x62] sm:$0xff]
      %v2421 = vld [vmem:[#allocation2 + $0x6a] sm:$0xff]
      %v2422 = vld [vmem:[#allocation2 + $0x7a] sm:$0xff]
      %v2423 = vld [vmem:[#allocation2 + $0x82] sm:$0xff]
      %v2424 = vld [vmem:[#allocation2 + $0x92] sm:$0xff]
      %v2425 = vld [vmem:[#allocation2 + $0x9a] sm:$0xff]
      %v2426 = vld [vmem:[#allocation2 + $0xaa] sm:$0xff]
      %v2427 = vld [vmem:[#allocation2 + $0xb2] sm:$0xff]
      %v2428 = vld [vmem:[#allocation2 + $0xc2] sm:$0xff]
      %v2429 = vld [vmem:[#allocation2 + $0xca] sm:$0xff]
      %v2430 = vld [vmem:[#allocation2 + $0xda] sm:$0xff]
      %v2431 = vld [vmem:[#allocation2 + $0xe2] sm:$0xff]
      %v2432 = vld [vmem:[#allocation2 + $0xf2] sm:$0xff]
      %v2433 = vld [vmem:[#allocation2 + $0xfa] sm:$0xff]
      %v2434 = vld [vmem:[#allocation2 + $0x10a] sm:$0xff]
      %v2435 = vld [vmem:[#allocation2 + $0x112] sm:$0xff]
      %v2436 = vld [vmem:[#allocation2 + $0x122] sm:$0xff]
      %v2437 = vld [vmem:[#allocation2 + $0x12a] sm:$0xff]
      %v2438 = vld [vmem:[#allocation2 + $0x13a] sm:$0xff]
      %v2439 = vld [vmem:[#allocation2 + $0x142] sm:$0xff]
      %v2440 = vld [vmem:[#allocation2 + $0x152] sm:$0xff]
      %v2441 = vld [vmem:[#allocation2 + $0x15a] sm:$0xff]
      %v2442 = vld [vmem:[#allocation2 + $0x16a] sm:$0xff]
      %v2443 = vld [vmem:[#allocation2 + $0x172] sm:$0xff]
      %v2444 = vld [vmem:[%s1051 + $0x2] sm:$0xff]
      %v2445 = vld [vmem:[%s1051 + $0xa] sm:$0xff]
      %v2446 = vld [vmem:[%s1051 + $0x1a] sm:$0xff]
      %v2447 = vld [vmem:[%s1051 + $0x22] sm:$0xff]
      %v2448 = vld [vmem:[%s1051 + $0x32] sm:$0xff]
      %v2449 = vld [vmem:[%s1051 + $0x3a] sm:$0xff]
      %v2450 = vld [vmem:[%s1051 + $0x4a] sm:$0xff]
      %v2451 = vld [vmem:[%s1051 + $0x52] sm:$0xff]
      %v2452 = vld [vmem:[%s1051 + $0x62] sm:$0xff]
      %v2453 = vld [vmem:[%s1051 + $0x6a] sm:$0xff]
      %v2454 = vld [vmem:[%s1051 + $0x7a] sm:$0xff]
      %v2455 = vld [vmem:[%s1051 + $0x82] sm:$0xff]
      %v2456 = vld [vmem:[%s1051 + $0x92] sm:$0xff]
      %v2457 = vld [vmem:[%s1051 + $0x9a] sm:$0xff]
      %v2458 = vld [vmem:[%s1051 + $0xaa] sm:$0xff]
      %v2459 = vld [vmem:[%s1051 + $0xb2] sm:$0xff]
      %v2460 = vld [vmem:[%s1051 + $0xc2] sm:$0xff]
      %v2461 = vld [vmem:[%s1051 + $0xca] sm:$0xff]
      %v2462 = vld [vmem:[%s1051 + $0xda] sm:$0xff]
      %v2463 = vld [vmem:[%s1051 + $0xe2] sm:$0xff]
      %v2464 = vld [vmem:[%s1051 + $0xf2] sm:$0xff]
      %v2465 = vld [vmem:[%s1051 + $0xfa] sm:$0xff]
      %v2466 = vld [vmem:[%s1051 + $0x10a] sm:$0xff]
      %v2467 = vld [vmem:[%s1051 + $0x112] sm:$0xff]
      %v2468 = vld [vmem:[%s1051 + $0x122] sm:$0xff]
      %v2469 = vld [vmem:[%s1051 + $0x12a] sm:$0xff]
      %v2470 = vld [vmem:[%s1051 + $0x13a] sm:$0xff]
      %v2471 = vld [vmem:[%s1051 + $0x142] sm:$0xff]
      %v2472 = vld [vmem:[%s1051 + $0x152] sm:$0xff]
      %v2473 = vld [vmem:[%s1051 + $0x15a] sm:$0xff]
      %v2474 = vld [vmem:[%s1051 + $0x16a] sm:$0xff]
      %v2475 = vld [vmem:[%s1051 + $0x172] sm:$0xff]
      %2476 = vrot.lane.b32.xlu0 %v1019, 120
      %v2477 = vpop.permute.xlu0 %2476
      %2478 = vrot.lane.b32.xlu0 %v1020, 120
      %v2479 = vpop.permute.xlu0 %2478
      %2480 = vrot.lane.b32.xlu0 %v1021, 120
      %v2481 = vpop.permute.xlu0 %2480
      %2482 = vrot.lane.b32.xlu0 %v1022, 120
      %v2483 = vpop.permute.xlu0 %2482
      %2484 = vrot.lane.b32.xlu0 %v1023, 120
      %v2485 = vpop.permute.xlu0 %2484
      %2486 = vrot.lane.b32.xlu0 %v1024, 120
      %v2487 = vpop.permute.xlu0 %2486
      %2488 = vrot.lane.b32.xlu0 %v1025, 120
      %v2489 = vpop.permute.xlu0 %2488
      %2490 = vrot.lane.b32.xlu0 %v1026, 120
      %v2491 = vpop.permute.xlu0 %2490
      %2492 = vrot.lane.b32.xlu0 %v1027, 120
      %v2493 = vpop.permute.xlu0 %2492
      %2494 = vrot.lane.b32.xlu0 %v1028, 120
      %v2495 = vpop.permute.xlu0 %2494
      %2496 = vrot.lane.b32.xlu0 %v1029, 120
      %v2497 = vpop.permute.xlu0 %2496
      %2498 = vrot.lane.b32.xlu0 %v1030, 120
      %v2499 = vpop.permute.xlu0 %2498
      %2500 = vrot.lane.b32.xlu0 %v1031, 120
      %v2501 = vpop.permute.xlu0 %2500
      %2502 = vrot.lane.b32.xlu0 %v1032, 120
      %v2503 = vpop.permute.xlu0 %2502
      %2504 = vrot.lane.b32.xlu0 %v1033, 120
      %v2505 = vpop.permute.xlu0 %2504
      %2506 = vrot.lane.b32.xlu0 %v1034, 120
      %v2507 = vpop.permute.xlu0 %2506
      %2508 = vrot.lane.b32.xlu0 %v1035, 120
      %v2509 = vpop.permute.xlu0 %2508
      %2510 = vrot.lane.b32.xlu0 %v1036, 120
      %v2511 = vpop.permute.xlu0 %2510
      %2512 = vrot.lane.b32.xlu0 %v1037, 120
      %v2513 = vpop.permute.xlu0 %2512
      %2514 = vrot.lane.b32.xlu0 %v1038, 120
      %v2515 = vpop.permute.xlu0 %2514
      %2516 = vrot.lane.b32.xlu0 %v1039, 120
      %v2517 = vpop.permute.xlu0 %2516
      %2518 = vrot.lane.b32.xlu0 %v1040, 120
      %v2519 = vpop.permute.xlu0 %2518
      %2520 = vrot.lane.b32.xlu0 %v1041, 120
      %v2521 = vpop.permute.xlu0 %2520
      %2522 = vrot.lane.b32.xlu0 %v1042, 120
      %v2523 = vpop.permute.xlu0 %2522
      %2524 = vrot.lane.b32.xlu0 %v1043, 120
      %v2525 = vpop.permute.xlu0 %2524
      %2526 = vrot.lane.b32.xlu0 %v1044, 120
      %v2527 = vpop.permute.xlu0 %2526
      %2528 = vrot.lane.b32.xlu0 %v1045, 120
      %v2529 = vpop.permute.xlu0 %2528
      %2530 = vrot.lane.b32.xlu0 %v1046, 120
      %v2531 = vpop.permute.xlu0 %2530
      %2532 = vrot.lane.b32.xlu0 %v1047, 120
      %v2533 = vpop.permute.xlu0 %2532
      %2534 = vrot.lane.b32.xlu0 %v1048, 120
      %v2535 = vpop.permute.xlu0 %2534
      %2536 = vrot.lane.b32.xlu0 %v1049, 120
      %v2537 = vpop.permute.xlu0 %2536
      %2538 = vrot.lane.b32.xlu0 %v1050, 120
      %v2539 = vpop.permute.xlu0 %2538
      %2572 = vrot.lane.b32.xlu0 %v1084, 12
      %v2573 = vpop.permute.xlu0 %2572
      %2574 = vrot.lane.b32.xlu0 %v1085, 12
      %v2575 = vpop.permute.xlu0 %2574
      %2576 = vrot.lane.b32.xlu0 %v1086, 12
      %v2577 = vpop.permute.xlu0 %2576
      %2578 = vrot.lane.b32.xlu0 %v1087, 12
      %v2579 = vpop.permute.xlu0 %2578
      %2580 = vrot.lane.b32.xlu0 %v1088, 12
      %v2581 = vpop.permute.xlu0 %2580
      %2582 = vrot.lane.b32.xlu0 %v1089, 12
      %v2583 = vpop.permute.xlu0 %2582
      %2584 = vrot.lane.b32.xlu0 %v1090, 12
      %v2585 = vpop.permute.xlu0 %2584
      %2586 = vrot.lane.b32.xlu0 %v1091, 12
      %v2587 = vpop.permute.xlu0 %2586
      %2588 = vrot.lane.b32.xlu0 %v1092, 12
      %v2589 = vpop.permute.xlu0 %2588
      %2590 = vrot.lane.b32.xlu0 %v1093, 12
      %v2591 = vpop.permute.xlu0 %2590
      %2592 = vrot.lane.b32.xlu0 %v1094, 12
      %v2593 = vpop.permute.xlu0 %2592
      %2594 = vrot.lane.b32.xlu0 %v1095, 12
      %v2595 = vpop.permute.xlu0 %2594
      %2596 = vrot.lane.b32.xlu0 %v1096, 12
      %v2597 = vpop.permute.xlu0 %2596
      %2598 = vrot.lane.b32.xlu0 %v1097, 12
      %v2599 = vpop.permute.xlu0 %2598
      %2600 = vrot.lane.b32.xlu0 %v1098, 12
      %v2601 = vpop.permute.xlu0 %2600
      %2602 = vrot.lane.b32.xlu0 %v1099, 12
      %v2603 = vpop.permute.xlu0 %2602
      %2604 = vrot.lane.b32.xlu0 %v1100, 12
      %v2605 = vpop.permute.xlu0 %2604
      %2606 = vrot.lane.b32.xlu0 %v1101, 12
      %v2607 = vpop.permute.xlu0 %2606
      %2608 = vrot.lane.b32.xlu0 %v1102, 12
      %v2609 = vpop.permute.xlu0 %2608
      %2610 = vrot.lane.b32.xlu0 %v1103, 12
      %v2611 = vpop.permute.xlu0 %2610
      %2612 = vrot.lane.b32.xlu0 %v1104, 12
      %v2613 = vpop.permute.xlu0 %2612
      %2614 = vrot.lane.b32.xlu0 %v1105, 12
      %v2615 = vpop.permute.xlu0 %2614
      %2616 = vrot.lane.b32.xlu0 %v1106, 12
      %v2617 = vpop.permute.xlu0 %2616
      %2618 = vrot.lane.b32.xlu0 %v1107, 12
      %v2619 = vpop.permute.xlu0 %2618
      %2620 = vrot.lane.b32.xlu0 %v1108, 12
      %v2621 = vpop.permute.xlu0 %2620
      %2622 = vrot.lane.b32.xlu0 %v1109, 12
      %v2623 = vpop.permute.xlu0 %2622
      %2624 = vrot.lane.b32.xlu0 %v1110, 12
      %v2625 = vpop.permute.xlu0 %2624
      %2626 = vrot.lane.b32.xlu0 %v1111, 12
      %v2627 = vpop.permute.xlu0 %2626
      %2628 = vrot.lane.b32.xlu0 %v1112, 12
      %v2629 = vpop.permute.xlu0 %2628
      %2630 = vrot.lane.b32.xlu0 %v1113, 12
      %v2631 = vpop.permute.xlu0 %2630
      %2632 = vrot.lane.b32.xlu0 %v1114, 12
      %v2633 = vpop.permute.xlu0 %2632
      %2634 = vrot.lane.b32.xlu0 %v1115, 12
      %v2635 = vpop.permute.xlu0 %2634
      %2700 = vrot.lane.b32.xlu0 %v2444, 20
      %v2701 = vpop.permute.xlu0 %2700
      %2702 = vrot.lane.b32.xlu0 %v2445, 20
      %v2703 = vpop.permute.xlu0 %2702
      %2704 = vrot.lane.b32.xlu0 %v2446, 20
      %v2705 = vpop.permute.xlu0 %2704
      %2706 = vrot.lane.b32.xlu0 %v2447, 20
      %v2707 = vpop.permute.xlu0 %2706
      %2708 = vrot.lane.b32.xlu0 %v2448, 20
      %v2709 = vpop.permute.xlu0 %2708
      %2710 = vrot.lane.b32.xlu0 %v2449, 20
      %v2711 = vpop.permute.xlu0 %2710
      %2712 = vrot.lane.b32.xlu0 %v2450, 20
      %v2713 = vpop.permute.xlu0 %2712
      %2714 = vrot.lane.b32.xlu0 %v2451, 20
      %v2715 = vpop.permute.xlu0 %2714
      %2716 = vrot.lane.b32.xlu0 %v2452, 20
      %v2717 = vpop.permute.xlu0 %2716
      %2718 = vrot.lane.b32.xlu0 %v2453, 20
      %v2719 = vpop.permute.xlu0 %2718
      %2720 = vrot.lane.b32.xlu0 %v2454, 20
      %v2721 = vpop.permute.xlu0 %2720
      %2722 = vrot.lane.b32.xlu0 %v2455, 20
      %v2723 = vpop.permute.xlu0 %2722
      %2724 = vrot.lane.b32.xlu0 %v2456, 20
      %v2725 = vpop.permute.xlu0 %2724
      %2726 = vrot.lane.b32.xlu0 %v2457, 20
      %v2727 = vpop.permute.xlu0 %2726
      %2728 = vrot.lane.b32.xlu0 %v2458, 20
      %v2729 = vpop.permute.xlu0 %2728
      %2730 = vrot.lane.b32.xlu0 %v2459, 20
      %v2731 = vpop.permute.xlu0 %2730
      %2732 = vrot.lane.b32.xlu0 %v2460, 20
      %v2733 = vpop.permute.xlu0 %2732
      %2734 = vrot.lane.b32.xlu0 %v2461, 20
      %v2735 = vpop.permute.xlu0 %2734
      %2736 = vrot.lane.b32.xlu0 %v2462, 20
      %v2737 = vpop.permute.xlu0 %2736
      %2738 = vrot.lane.b32.xlu0 %v2463, 20
      %v2739 = vpop.permute.xlu0 %2738
      %2740 = vrot.lane.b32.xlu0 %v2464, 20
      %v2741 = vpop.permute.xlu0 %2740
      %2742 = vrot.lane.b32.xlu0 %v2465, 20
      %v2743 = vpop.permute.xlu0 %2742
      %2744 = vrot.lane.b32.xlu0 %v2466, 20
      %v2745 = vpop.permute.xlu0 %2744
      %2746 = vrot.lane.b32.xlu0 %v2467, 20
      %v2747 = vpop.permute.xlu0 %2746
      %2748 = vrot.lane.b32.xlu0 %v2468, 20
      %v2749 = vpop.permute.xlu0 %2748
      %2750 = vrot.lane.b32.xlu0 %v2469, 20
      %v2751 = vpop.permute.xlu0 %2750
      %2752 = vrot.lane.b32.xlu0 %v2470, 20
      %v2753 = vpop.permute.xlu0 %2752
      %2754 = vrot.lane.b32.xlu0 %v2471, 20
      %v2755 = vpop.permute.xlu0 %2754
      %2756 = vrot.lane.b32.xlu0 %v2472, 20
      %v2757 = vpop.permute.xlu0 %2756
      %2758 = vrot.lane.b32.xlu0 %v2473, 20
      %v2759 = vpop.permute.xlu0 %2758
      %2760 = vrot.lane.b32.xlu0 %v2474, 20
      %v2761 = vpop.permute.xlu0 %2760
      %2762 = vrot.lane.b32.xlu0 %v2475, 20
      %v2763 = vpop.permute.xlu0 %2762
      %2796 = vrot.lane.b32.xlu0 %v2444, 24
      %v2797 = vpop.permute.xlu0 %2796
      %2798 = vrot.lane.b32.xlu0 %v2445, 24
      %v2799 = vpop.permute.xlu0 %2798
      %2800 = vrot.lane.b32.xlu0 %v2446, 24
      %v2801 = vpop.permute.xlu0 %2800
      %2802 = vrot.lane.b32.xlu0 %v2447, 24
      %v2803 = vpop.permute.xlu0 %2802
      %2804 = vrot.lane.b32.xlu0 %v2448, 24
      %v2805 = vpop.permute.xlu0 %2804
      %2806 = vrot.lane.b32.xlu0 %v2449, 24
      %v2807 = vpop.permute.xlu0 %2806
      %2808 = vrot.lane.b32.xlu0 %v2450, 24
      %v2809 = vpop.permute.xlu0 %2808
      %2810 = vrot.lane.b32.xlu0 %v2451, 24
      %v2811 = vpop.permute.xlu0 %2810
      %2812 = vrot.lane.b32.xlu0 %v2452, 24
      %v2813 = vpop.permute.xlu0 %2812
      %2814 = vrot.lane.b32.xlu0 %v2453, 24
      %v2815 = vpop.permute.xlu0 %2814
      %2816 = vrot.lane.b32.xlu0 %v2454, 24
      %v2817 = vpop.permute.xlu0 %2816
      %2818 = vrot.lane.b32.xlu0 %v2455, 24
      %v2819 = vpop.permute.xlu0 %2818
      %2820 = vrot.lane.b32.xlu0 %v2456, 24
      %v2821 = vpop.permute.xlu0 %2820
      %2822 = vrot.lane.b32.xlu0 %v2457, 24
      %v2823 = vpop.permute.xlu0 %2822
      %2824 = vrot.lane.b32.xlu0 %v2458, 24
      %v2825 = vpop.permute.xlu0 %2824
      %2826 = vrot.lane.b32.xlu0 %v2459, 24
      %v2827 = vpop.permute.xlu0 %2826
      %2828 = vrot.lane.b32.xlu0 %v2460, 24
      %v2829 = vpop.permute.xlu0 %2828
      %2830 = vrot.lane.b32.xlu0 %v2461, 24
      %v2831 = vpop.permute.xlu0 %2830
      %2832 = vrot.lane.b32.xlu0 %v2462, 24
      %v2833 = vpop.permute.xlu0 %2832
      %2834 = vrot.lane.b32.xlu0 %v2463, 24
      %v2835 = vpop.permute.xlu0 %2834
      %2836 = vrot.lane.b32.xlu0 %v2464, 24
      %v2837 = vpop.permute.xlu0 %2836
      %2838 = vrot.lane.b32.xlu0 %v2465, 24
      %v2839 = vpop.permute.xlu0 %2838
      %2840 = vrot.lane.b32.xlu0 %v2466, 24
      %v2841 = vpop.permute.xlu0 %2840
      %2842 = vrot.lane.b32.xlu0 %v2467, 24
      %v2843 = vpop.permute.xlu0 %2842
      %2844 = vrot.lane.b32.xlu0 %v2468, 24
      %v2845 = vpop.permute.xlu0 %2844
      %2846 = vrot.lane.b32.xlu0 %v2469, 24
      %v2847 = vpop.permute.xlu0 %2846
      %2848 = vrot.lane.b32.xlu0 %v2470, 24
      %v2849 = vpop.permute.xlu0 %2848
      %2850 = vrot.lane.b32.xlu0 %v2471, 24
      %v2851 = vpop.permute.xlu0 %2850
      %2852 = vrot.lane.b32.xlu0 %v2472, 24
      %v2853 = vpop.permute.xlu0 %2852
      %2854 = vrot.lane.b32.xlu0 %v2473, 24
      %v2855 = vpop.permute.xlu0 %2854
      %2856 = vrot.lane.b32.xlu0 %v2474, 24
      %v2857 = vpop.permute.xlu0 %2856
      %2858 = vrot.lane.b32.xlu0 %v2475, 24
      %v2859 = vpop.permute.xlu0 %2858
      %v2892 = vsel %vm1852, %v2477, %v2412
      %v2893 = vsel %vm1852, %v2479, %v2413
      %v2894 = vsel %vm1852, %v2481, %v2414
      %v2895 = vsel %vm1852, %v2483, %v2415
      %v2896 = vsel %vm1852, %v2485, %v2416
      %v2897 = vsel %vm1852, %v2487, %v2417
      %v2898 = vsel %vm1852, %v2489, %v2418
      %v2899 = vsel %vm1852, %v2491, %v2419
      %v2900 = vsel %vm1852, %v2493, %v2420
      %v2901 = vsel %vm1852, %v2495, %v2421
      %v2902 = vsel %vm1852, %v2497, %v2422
      %v2903 = vsel %vm1852, %v2499, %v2423
      %v2904 = vsel %vm1852, %v2501, %v2424
      %v2905 = vsel %vm1852, %v2503, %v2425
      %v2906 = vsel %vm1852, %v2505, %v2426
      %v2907 = vsel %vm1852, %v2507, %v2427
      %v2908 = vsel %vm1852, %v2509, %v2428
      %v2909 = vsel %vm1852, %v2511, %v2429
      %v2910 = vsel %vm1852, %v2513, %v2430
      %v2911 = vsel %vm1852, %v2515, %v2431
      %v2912 = vsel %vm1852, %v2517, %v2432
      %v2913 = vsel %vm1852, %v2519, %v2433
      %v2914 = vsel %vm1852, %v2521, %v2434
      %v2915 = vsel %vm1852, %v2523, %v2435
      %v2916 = vsel %vm1852, %v2525, %v2436
      %v2917 = vsel %vm1852, %v2527, %v2437
      %v2918 = vsel %vm1852, %v2529, %v2438
      %v2919 = vsel %vm1852, %v2531, %v2439
      %v2920 = vsel %vm1852, %v2533, %v2440
      %v2921 = vsel %vm1852, %v2535, %v2441
      %v2922 = vsel %vm1852, %v2537, %v2442
      %v2923 = vsel %vm1852, %v2539, %v2443
      %v2924 = vsel %vm1885, %v2892, %v2573
      %v2925 = vsel %vm1885, %v2893, %v2575
      %v2926 = vsel %vm1885, %v2894, %v2577
      %v2927 = vsel %vm1885, %v2895, %v2579
      %v2928 = vsel %vm1885, %v2896, %v2581
      %v2929 = vsel %vm1885, %v2897, %v2583
      %v2930 = vsel %vm1885, %v2898, %v2585
      %v2931 = vsel %vm1885, %v2899, %v2587
      %v2932 = vsel %vm1885, %v2900, %v2589
      %v2933 = vsel %vm1885, %v2901, %v2591
      %v2934 = vsel %vm1885, %v2902, %v2593
      %v2935 = vsel %vm1885, %v2903, %v2595
      %v2936 = vsel %vm1885, %v2904, %v2597
      %v2937 = vsel %vm1885, %v2905, %v2599
      %v2938 = vsel %vm1885, %v2906, %v2601
      %v2939 = vsel %vm1885, %v2907, %v2603
      %v2940 = vsel %vm1885, %v2908, %v2605
      %v2941 = vsel %vm1885, %v2909, %v2607
      %v2942 = vsel %vm1885, %v2910, %v2609
      %v2943 = vsel %vm1885, %v2911, %v2611
      %v2944 = vsel %vm1885, %v2912, %v2613
      %v2945 = vsel %vm1885, %v2913, %v2615
      %v2946 = vsel %vm1885, %v2914, %v2617
      %v2947 = vsel %vm1885, %v2915, %v2619
      %v2948 = vsel %vm1885, %v2916, %v2621
      %v2949 = vsel %vm1885, %v2917, %v2623
      %v2950 = vsel %vm1885, %v2918, %v2625
      %v2951 = vsel %vm1885, %v2919, %v2627
      %v2952 = vsel %vm1885, %v2920, %v2629
      %v2953 = vsel %vm1885, %v2921, %v2631
      %v2954 = vsel %vm1885, %v2922, %v2633
      %v2955 = vsel %vm1885, %v2923, %v2635
      %v2956 = vsel %vm702, %v2924, %v2573
      %v2957 = vsel %vm702, %v2925, %v2575
      %v2958 = vsel %vm702, %v2926, %v2577
      %v2959 = vsel %vm702, %v2927, %v2579
      %v2960 = vsel %vm702, %v2928, %v2581
      %v2961 = vsel %vm702, %v2929, %v2583
      %v2962 = vsel %vm702, %v2930, %v2585
      %v2963 = vsel %vm702, %v2931, %v2587
      %v2964 = vsel %vm702, %v2932, %v2589
      %v2965 = vsel %vm702, %v2933, %v2591
      %v2966 = vsel %vm702, %v2934, %v2593
      %v2967 = vsel %vm702, %v2935, %v2595
      %v2968 = vsel %vm702, %v2936, %v2597
      %v2969 = vsel %vm702, %v2937, %v2599
      %v2970 = vsel %vm702, %v2938, %v2601
      %v2971 = vsel %vm702, %v2939, %v2603
      %v2972 = vsel %vm702, %v2940, %v2605
      %v2973 = vsel %vm702, %v2941, %v2607
      %v2974 = vsel %vm702, %v2942, %v2609
      %v2975 = vsel %vm702, %v2943, %v2611
      %v2976 = vsel %vm702, %v2944, %v2613
      %v2977 = vsel %vm702, %v2945, %v2615
      %v2978 = vsel %vm702, %v2946, %v2617
      %v2979 = vsel %vm702, %v2947, %v2619
      %v2980 = vsel %vm702, %v2948, %v2621
      %v2981 = vsel %vm702, %v2949, %v2623
      %v2982 = vsel %vm702, %v2950, %v2625
      %v2983 = vsel %vm702, %v2951, %v2627
      %v2984 = vsel %vm702, %v2952, %v2629
      %v2985 = vsel %vm702, %v2953, %v2631
      %v2986 = vsel %vm702, %v2954, %v2633
      %v2987 = vsel %vm702, %v2955, %v2635
      %v2988 = vsel %vm1950, %v2956, %v2701
      %v2989 = vsel %vm1950, %v2957, %v2703
      %v2990 = vsel %vm1950, %v2958, %v2705
      %v2991 = vsel %vm1950, %v2959, %v2707
      %v2992 = vsel %vm1950, %v2960, %v2709
      %v2993 = vsel %vm1950, %v2961, %v2711
      %v2994 = vsel %vm1950, %v2962, %v2713
      %v2995 = vsel %vm1950, %v2963, %v2715
      %v2996 = vsel %vm1950, %v2964, %v2717
      %v2997 = vsel %vm1950, %v2965, %v2719
      %v2998 = vsel %vm1950, %v2966, %v2721
      %v2999 = vsel %vm1950, %v2967, %v2723
      %v3000 = vsel %vm1950, %v2968, %v2725
      %v3001 = vsel %vm1950, %v2969, %v2727
      %v3002 = vsel %vm1950, %v2970, %v2729
      %v3003 = vsel %vm1950, %v2971, %v2731
      %v3004 = vsel %vm1950, %v2972, %v2733
      %v3005 = vsel %vm1950, %v2973, %v2735
      %v3006 = vsel %vm1950, %v2974, %v2737
      %v3007 = vsel %vm1950, %v2975, %v2739
      %v3008 = vsel %vm1950, %v2976, %v2741
      %v3009 = vsel %vm1950, %v2977, %v2743
      %v3010 = vsel %vm1950, %v2978, %v2745
      %v3011 = vsel %vm1950, %v2979, %v2747
      %v3012 = vsel %vm1950, %v2980, %v2749
      %v3013 = vsel %vm1950, %v2981, %v2751
      %v3014 = vsel %vm1950, %v2982, %v2753
      %v3015 = vsel %vm1950, %v2983, %v2755
      %v3016 = vsel %vm1950, %v2984, %v2757
      %v3017 = vsel %vm1950, %v2985, %v2759
      %v3018 = vsel %vm1950, %v2986, %v2761
      %v3019 = vsel %vm1950, %v2987, %v2763
      %v3020 = vsel %vm1983, %v2988, %v1533
      %v3021 = vsel %vm1983, %v2989, %v1535
      %v3022 = vsel %vm1983, %v2990, %v1537
      %v3023 = vsel %vm1983, %v2991, %v1539
      %v3024 = vsel %vm1983, %v2992, %v1541
      %v3025 = vsel %vm1983, %v2993, %v1543
      %v3026 = vsel %vm1983, %v2994, %v1545
      %v3027 = vsel %vm1983, %v2995, %v1547
      %v3028 = vsel %vm1983, %v2996, %v1549
      %v3029 = vsel %vm1983, %v2997, %v1551
      %v3030 = vsel %vm1983, %v2998, %v1553
      %v3031 = vsel %vm1983, %v2999, %v1555
      %v3032 = vsel %vm1983, %v3000, %v1557
      %v3033 = vsel %vm1983, %v3001, %v1559
      %v3034 = vsel %vm1983, %v3002, %v1561
      %v3035 = vsel %vm1983, %v3003, %v1563
      %v3036 = vsel %vm1983, %v3004, %v1565
      %v3037 = vsel %vm1983, %v3005, %v1567
      %v3038 = vsel %vm1983, %v3006, %v1569
      %v3039 = vsel %vm1983, %v3007, %v1571
      %v3040 = vsel %vm1983, %v3008, %v1573
      %v3041 = vsel %vm1983, %v3009, %v1575
      %v3042 = vsel %vm1983, %v3010, %v1577
      %v3043 = vsel %vm1983, %v3011, %v1579
      %v3044 = vsel %vm1983, %v3012, %v1581
      %v3045 = vsel %vm1983, %v3013, %v1583
      %v3046 = vsel %vm1983, %v3014, %v1585
      %v3047 = vsel %vm1983, %v3015, %v1587
      %v3048 = vsel %vm1983, %v3016, %v1589
      %v3049 = vsel %vm1983, %v3017, %v1591
      %v3050 = vsel %vm1983, %v3018, %v1593
      %v3051 = vsel %vm1983, %v3019, %v1595
      %v3052 = vsel %vm2016, %v3020, %v1533
      %v3053 = vsel %vm2016, %v3021, %v1535
      %v3054 = vsel %vm2016, %v3022, %v1537
      %v3055 = vsel %vm2016, %v3023, %v1539
      %v3056 = vsel %vm2016, %v3024, %v1541
      %v3057 = vsel %vm2016, %v3025, %v1543
      %v3058 = vsel %vm2016, %v3026, %v1545
      %v3059 = vsel %vm2016, %v3027, %v1547
      %v3060 = vsel %vm2016, %v3028, %v1549
      %v3061 = vsel %vm2016, %v3029, %v1551
      %v3062 = vsel %vm2016, %v3030, %v1553
      %v3063 = vsel %vm2016, %v3031, %v1555
      %v3064 = vsel %vm2016, %v3032, %v1557
      %v3065 = vsel %vm2016, %v3033, %v1559
      %v3066 = vsel %vm2016, %v3034, %v1561
      %v3067 = vsel %vm2016, %v3035, %v1563
      %v3068 = vsel %vm2016, %v3036, %v1565
      %v3069 = vsel %vm2016, %v3037, %v1567
      %v3070 = vsel %vm2016, %v3038, %v1569
      %v3071 = vsel %vm2016, %v3039, %v1571
      %v3072 = vsel %vm2016, %v3040, %v1573
      %v3073 = vsel %vm2016, %v3041, %v1575
      %v3074 = vsel %vm2016, %v3042, %v1577
      %v3075 = vsel %vm2016, %v3043, %v1579
      %v3076 = vsel %vm2016, %v3044, %v1581
      %v3077 = vsel %vm2016, %v3045, %v1583
      %v3078 = vsel %vm2016, %v3046, %v1585
      %v3079 = vsel %vm2016, %v3047, %v1587
      %v3080 = vsel %vm2016, %v3048, %v1589
      %v3081 = vsel %vm2016, %v3049, %v1591
      %v3082 = vsel %vm2016, %v3050, %v1593
      %v3083 = vsel %vm2016, %v3051, %v1595
      %v3084 = vsel %vm2049, %v3052, %v2797
      %v3085 = vsel %vm2049, %v3053, %v2799
      %v3086 = vsel %vm2049, %v3054, %v2801
      %v3087 = vsel %vm2049, %v3055, %v2803
      %v3088 = vsel %vm2049, %v3056, %v2805
      %v3089 = vsel %vm2049, %v3057, %v2807
      %v3090 = vsel %vm2049, %v3058, %v2809
      %v3091 = vsel %vm2049, %v3059, %v2811
      %v3092 = vsel %vm2049, %v3060, %v2813
      %v3093 = vsel %vm2049, %v3061, %v2815
      %v3094 = vsel %vm2049, %v3062, %v2817
      %v3095 = vsel %vm2049, %v3063, %v2819
      %v3096 = vsel %vm2049, %v3064, %v2821
      %v3097 = vsel %vm2049, %v3065, %v2823
      %v3098 = vsel %vm2049, %v3066, %v2825
      %v3099 = vsel %vm2049, %v3067, %v2827
      %v3100 = vsel %vm2049, %v3068, %v2829
      %v3101 = vsel %vm2049, %v3069, %v2831
      %v3102 = vsel %vm2049, %v3070, %v2833
      %v3103 = vsel %vm2049, %v3071, %v2835
      %v3104 = vsel %vm2049, %v3072, %v2837
      %v3105 = vsel %vm2049, %v3073, %v2839
      %v3106 = vsel %vm2049, %v3074, %v2841
      %v3107 = vsel %vm2049, %v3075, %v2843
      %v3108 = vsel %vm2049, %v3076, %v2845
      %v3109 = vsel %vm2049, %v3077, %v2847
      %v3110 = vsel %vm2049, %v3078, %v2849
      %v3111 = vsel %vm2049, %v3079, %v2851
      %v3112 = vsel %vm2049, %v3080, %v2853
      %v3113 = vsel %vm2049, %v3081, %v2855
      %v3114 = vsel %vm2049, %v3082, %v2857
      %v3115 = vsel %vm2049, %v3083, %v2859
      %v3117 = vsel %vm2087, %v3084, 0
      %v3120 = vsel %vm2087, %v3085, 0
      %v3123 = vsel %vm2087, %v3086, 0
      %v3126 = vsel %vm2087, %v3087, 0
      %v3129 = vsel %vm2087, %v3088, 0
      %v3132 = vsel %vm2087, %v3089, 0
      %v3135 = vsel %vm2087, %v3090, 0
      %v3138 = vsel %vm2087, %v3091, 0
      %v3141 = vsel %vm2087, %v3092, 0
      %v3144 = vsel %vm2087, %v3093, 0
      %v3147 = vsel %vm2087, %v3094, 0
      %v3150 = vsel %vm2087, %v3095, 0
      %v3153 = vsel %vm2087, %v3096, 0
      %v3156 = vsel %vm2087, %v3097, 0
      %v3159 = vsel %vm2087, %v3098, 0
      %v3162 = vsel %vm2087, %v3099, 0
      %v3165 = vsel %vm2087, %v3100, 0
      %v3168 = vsel %vm2087, %v3101, 0
      %v3171 = vsel %vm2087, %v3102, 0
      %v3174 = vsel %vm2087, %v3103, 0
      %v3177 = vsel %vm2087, %v3104, 0
      %v3180 = vsel %vm2087, %v3105, 0
      %v3183 = vsel %vm2087, %v3106, 0
      %v3186 = vsel %vm2087, %v3107, 0
      %v3189 = vsel %vm2087, %v3108, 0
      %v3192 = vsel %vm2087, %v3109, 0
      %v3195 = vsel %vm2087, %v3110, 0
      %v3198 = vsel %vm2087, %v3111, 0
      %v3201 = vsel %vm2087, %v3112, 0
      %v3204 = vsel %vm2087, %v3113, 0
      %v3207 = vsel %vm2087, %v3114, 0
      %v3210 = vsel %vm2087, %v3115, 0
      %3212 = vmatprep.subr.mxu0 0.0
      %3213 = vmatpush1.msra.mxu0 %v2082
      %3214 = vmatprep.subr.mxu0 0.0
      %3215 = vmatpush1.msra.mxu0 %v2083
      %3216 = vmatprep.subr.mxu0 0.0
      %3217 = vmatpush1.msra.mxu0 %v2084
      %3218 = vmatprep.subr.mxu0 0.0
      %3219 = vmatpush1.msra.mxu0 %v2085
      %3220 = vmatprep.subr.mxu0 0.0
      %3221 = vmatpush1.msra.mxu0 %v2185
      %3222 = vmatprep.subr.mxu0 0.0
      %3223 = vmatpush1.msra.mxu0 0.0
      %3224 = vmatprep.subr.mxu0 0.0
      %3225 = vmatpush1.msra.mxu0 0.0
      %3226 = vmatprep.subr.mxu0 0.0
      %3227 = vmatpush1.msra.mxu0 0.0
      %3228 = vmatprep.subr.mxu0 0.0
      %3229 = vmatpush1.msra.mxu0 0.0
      %3230 = vmatprep.subr.mxu0 0.0
      %3231 = vmatpush1.msra.mxu0 0.0
      %3232 = vmatprep.subr.mxu0 0.0
      %3233 = vmatpush1.msra.mxu0 0.0
      %3234 = vmatprep.subr.mxu0 0.0
      %3235 = vmatpush1.msra.mxu0 0.0
      %3236 = vmatprep.subr.mxu0 0.0
      %3237 = vmatpush1.msra.mxu0 0.0
      %3238 = vmatprep.subr.mxu0 0.0
      %3239 = vmatpush1.msra.mxu0 0.0
      %3240 = vmatprep.subr.mxu0 0.0
      %3241 = vmatpush1.msra.mxu0 0.0
      %3242 = vmatprep.subr.mxu0 0.0
      %3243 = vmatpush1.msra.mxu0 0.0
      %3244 = vmatprep.subr.mxu0 0.0
      %3245 = vmatpush1.msra.mxu0 0.0
      %3246 = vmatprep.subr.mxu0 0.0
      %3247 = vmatpush1.msra.mxu0 0.0
      %3248 = vmatprep.subr.mxu0 0.0
      %3249 = vmatpush1.msra.mxu0 0.0
      %3250 = vmatprep.subr.mxu0 0.0
      %3251 = vmatpush1.msra.mxu0 0.0
      %3252 = vmatprep.subr.mxu0 0.0
      %3253 = vmatpush1.msra.mxu0 0.0
      %3254 = vmatprep.subr.mxu0 0.0
      %3255 = vmatpush1.msra.mxu0 0.0
      %3256 = vmatprep.subr.mxu0 0.0
      %3257 = vmatpush1.msra.mxu0 0.0
      %3258 = vmatprep.subr.mxu0 0.0
      %3259 = vmatpush1.msra.mxu0 0.0
      %3260 = vmatprep.subr.mxu0 0.0
      %3261 = vmatpush1.msra.mxu0 0.0
      %3262 = vmatprep.subr.mxu0 0.0
      %3263 = vmatpush1.msra.mxu0 0.0
      %3264 = vmatprep.subr.mxu0 0.0
      %3265 = vmatpush1.msra.mxu0 0.0
      %3266 = vmatprep.subr.mxu0 0.0
      %3267 = vmatpush1.msra.mxu0 0.0
      %3268 = vmatprep.subr.mxu0 0.0
      %3269 = vmatpush1.msra.mxu0 0.0
      %3270 = vmatprep.subr.mxu0 0.0
      %3271 = vmatpush1.msra.mxu0 0.0
      %3272 = vmatprep.subr.mxu0 0.0
      %3273 = vmatpush1.msra.mxu0 0.0
      %3274 = vmatprep.subr.mxu0 0.0
      %3275 = vmatpush1.msra.mxu0 0.0
      %3276 = vmatprep.mubr.f32.mxu0 0.0
      %3277 = vmatmul.mubr.f32.gmra.mrb[0].mxu0 %v3117
      %v3278 = vpop.f32.mrb[0].mxu0
      %v3279 = vadd.f32 0.0, %v3278
      %v3280 = vpop.f32.mrb[0].mxu0
      %3281 = vmatprep.mubr.f32.mxu0 0.0
      %3282 = vmatmul.mubr.f32.gmra.mrb[0].mxu0 %v3120
      %v3283 = vpop.f32.mrb[0].mxu0
      %v3284 = vadd.f32 0.0, %v3283
      %v3285 = vpop.f32.mrb[0].mxu0
      %3286 = vmatprep.mubr.f32.mxu0 0.0
      %3287 = vmatmul.mubr.f32.gmra.mrb[0].mxu0 %v3123
      %v3288 = vpop.f32.mrb[0].mxu0
      %v3289 = vadd.f32 0.0, %v3288
      %v3290 = vpop.f32.mrb[0].mxu0
      %3291 = vmatprep.mubr.f32.mxu0 0.0
      %3292 = vmatmul.mubr.f32.gmra.mrb[0].mxu0 %v3126
      %v3293 = vpop.f32.mrb[0].mxu0
      %v3294 = vadd.f32 0.0, %v3293
      %v3295 = vpop.f32.mrb[0].mxu0
      %3296 = vmatprep.mubr.f32.mxu0 0.0
      %3297 = vmatmul.mubr.f32.gmra.mrb[0].mxu0 %v3129
      %v3298 = vpop.f32.mrb[0].mxu0
      %v3299 = vadd.f32 0.0, %v3298
      %v3300 = vpop.f32.mrb[0].mxu0
      %3301 = vmatprep.mubr.f32.mxu0 0.0
      %3302 = vmatmul.mubr.f32.gmra.mrb[0].mxu0 %v3132
      %v3303 = vpop.f32.mrb[0].mxu0
      %v3304 = vadd.f32 0.0, %v3303
      %v3305 = vpop.f32.mrb[0].mxu0
      %3306 = vmatprep.mubr.f32.mxu0 0.0
      %3307 = vmatmul.mubr.f32.gmra.mrb[0].mxu0 %v3135
      %v3308 = vpop.f32.mrb[0].mxu0
      %v3309 = vadd.f32 0.0, %v3308
      %v3310 = vpop.f32.mrb[0].mxu0
      %3311 = vmatprep.mubr.f32.mxu0 0.0
      %3312 = vmatmul.mubr.f32.gmra.mrb[0].mxu0 %v3138
      %v3313 = vpop.f32.mrb[0].mxu0
      %v3314 = vadd.f32 0.0, %v3313
      %v3315 = vpop.f32.mrb[0].mxu0
      %3316 = vmatprep.mubr.f32.mxu0 0.0
      %3317 = vmatmul.mubr.f32.gmra.mrb[0].mxu0 %v3141
      %v3318 = vpop.f32.mrb[0].mxu0
      %v3319 = vadd.f32 0.0, %v3318
      %v3320 = vpop.f32.mrb[0].mxu0
      %3321 = vmatprep.mubr.f32.mxu0 0.0
      %3322 = vmatmul.mubr.f32.gmra.mrb[0].mxu0 %v3144
      %v3323 = vpop.f32.mrb[0].mxu0
      %v3324 = vadd.f32 0.0, %v3323
      %v3325 = vpop.f32.mrb[0].mxu0
      %3326 = vmatprep.mubr.f32.mxu0 0.0
      %3327 = vmatmul.mubr.f32.gmra.mrb[0].mxu0 %v3147
      %v3328 = vpop.f32.mrb[0].mxu0
      %v3329 = vadd.f32 0.0, %v3328
      %v3330 = vpop.f32.mrb[0].mxu0
      %3331 = vmatprep.mubr.f32.mxu0 0.0
      %3332 = vmatmul.mubr.f32.gmra.mrb[0].mxu0 %v3150
      %v3333 = vpop.f32.mrb[0].mxu0
      %v3334 = vadd.f32 0.0, %v3333
      %v3335 = vpop.f32.mrb[0].mxu0
      %3336 = vmatprep.mubr.f32.mxu0 0.0
      %3337 = vmatmul.mubr.f32.gmra.mrb[0].mxu0 %v3153
      %v3338 = vpop.f32.mrb[0].mxu0
      %v3339 = vadd.f32 0.0, %v3338
      %v3340 = vpop.f32.mrb[0].mxu0
      %3341 = vmatprep.mubr.f32.mxu0 0.0
      %3342 = vmatmul.mubr.f32.gmra.mrb[0].mxu0 %v3156
      %v3343 = vpop.f32.mrb[0].mxu0
      %v3344 = vadd.f32 0.0, %v3343
      %v3345 = vpop.f32.mrb[0].mxu0
      %3346 = vmatprep.mubr.f32.mxu0 0.0
      %3347 = vmatmul.mubr.f32.gmra.mrb[0].mxu0 %v3159
      %v3348 = vpop.f32.mrb[0].mxu0
      %v3349 = vadd.f32 0.0, %v3348
      %v3350 = vpop.f32.mrb[0].mxu0
      %3351 = vmatprep.mubr.f32.mxu0 0.0
      %3352 = vmatmul.mubr.f32.gmra.mrb[0].mxu0 %v3162
      %v3353 = vpop.f32.mrb[0].mxu0
      %v3354 = vadd.f32 0.0, %v3353
      %v3355 = vpop.f32.mrb[0].mxu0
      %3356 = vmatprep.mubr.f32.mxu0 0.0
      %3357 = vmatmul.mubr.f32.gmra.mrb[0].mxu0 %v3165
      %v3358 = vpop.f32.mrb[0].mxu0
      %v3359 = vadd.f32 0.0, %v3358
      %v3360 = vpop.f32.mrb[0].mxu0
      %3361 = vmatprep.mubr.f32.mxu0 0.0
      %3362 = vmatmul.mubr.f32.gmra.mrb[0].mxu0 %v3168
      %v3363 = vpop.f32.mrb[0].mxu0
      %v3364 = vadd.f32 0.0, %v3363
      %v3365 = vpop.f32.mrb[0].mxu0
      %3366 = vmatprep.mubr.f32.mxu0 0.0
      %3367 = vmatmul.mubr.f32.gmra.mrb[0].mxu0 %v3171
      %v3368 = vpop.f32.mrb[0].mxu0
      %v3369 = vadd.f32 0.0, %v3368
      %v3370 = vpop.f32.mrb[0].mxu0
      %3371 = vmatprep.mubr.f32.mxu0 0.0
      %3372 = vmatmul.mubr.f32.gmra.mrb[0].mxu0 %v3174
      %v3373 = vpop.f32.mrb[0].mxu0
      %v3374 = vadd.f32 0.0, %v3373
      %v3375 = vpop.f32.mrb[0].mxu0
      %3376 = vmatprep.mubr.f32.mxu0 0.0
      %3377 = vmatmul.mubr.f32.gmra.mrb[0].mxu0 %v3177
      %v3378 = vpop.f32.mrb[0].mxu0
      %v3379 = vadd.f32 0.0, %v3378
      %v3380 = vpop.f32.mrb[0].mxu0
      %3381 = vmatprep.mubr.f32.mxu0 0.0
      %3382 = vmatmul.mubr.f32.gmra.mrb[0].mxu0 %v3180
      %v3383 = vpop.f32.mrb[0].mxu0
      %v3384 = vadd.f32 0.0, %v3383
      %v3385 = vpop.f32.mrb[0].mxu0
      %3386 = vmatprep.mubr.f32.mxu0 0.0
      %3387 = vmatmul.mubr.f32.gmra.mrb[0].mxu0 %v3183
      %v3388 = vpop.f32.mrb[0].mxu0
      %v3389 = vadd.f32 0.0, %v3388
      %v3390 = vpop.f32.mrb[0].mxu0
      %3391 = vmatprep.mubr.f32.mxu0 0.0
      %3392 = vmatmul.mubr.f32.gmra.mrb[0].mxu0 %v3186
      %v3393 = vpop.f32.mrb[0].mxu0
      %v3394 = vadd.f32 0.0, %v3393
      %v3395 = vpop.f32.mrb[0].mxu0
      %3396 = vmatprep.mubr.f32.mxu0 0.0
      %3397 = vmatmul.mubr.f32.gmra.mrb[0].mxu0 %v3189
      %v3398 = vpop.f32.mrb[0].mxu0
      %v3399 = vadd.f32 0.0, %v3398
      %v3400 = vpop.f32.mrb[0].mxu0
      %3401 = vmatprep.mubr.f32.mxu0 0.0
      %3402 = vmatmul.mubr.f32.gmra.mrb[0].mxu0 %v3192
      %v3403 = vpop.f32.mrb[0].mxu0
      %v3404 = vadd.f32 0.0, %v3403
      %v3405 = vpop.f32.mrb[0].mxu0
      %3406 = vmatprep.mubr.f32.mxu0 0.0
      %3407 = vmatmul.mubr.f32.gmra.mrb[0].mxu0 %v3195
      %v3408 = vpop.f32.mrb[0].mxu0
      %v3409 = vadd.f32 0.0, %v3408
      %v3410 = vpop.f32.mrb[0].mxu0
      %3411 = vmatprep.mubr.f32.mxu0 0.0
      %3412 = vmatmul.mubr.f32.gmra.mrb[0].mxu0 %v3198
      %v3413 = vpop.f32.mrb[0].mxu0
      %v3414 = vadd.f32 0.0, %v3413
      %v3415 = vpop.f32.mrb[0].mxu0
      %3416 = vmatprep.mubr.f32.mxu0 0.0
      %3417 = vmatmul.mubr.f32.gmra.mrb[0].mxu0 %v3201
      %v3418 = vpop.f32.mrb[0].mxu0
      %v3419 = vadd.f32 0.0, %v3418
      %v3420 = vpop.f32.mrb[0].mxu0
      %3421 = vmatprep.mubr.f32.mxu0 0.0
      %3422 = vmatmul.mubr.f32.gmra.mrb[0].mxu0 %v3204
      %v3423 = vpop.f32.mrb[0].mxu0
      %v3424 = vadd.f32 0.0, %v3423
      %v3425 = vpop.f32.mrb[0].mxu0
      %3426 = vmatprep.mubr.f32.mxu0 0.0
      %3427 = vmatmul.mubr.f32.gmra.mrb[0].mxu0 %v3207
      %v3428 = vpop.f32.mrb[0].mxu0
      %v3429 = vadd.f32 0.0, %v3428
      %v3430 = vpop.f32.mrb[0].mxu0
      %3431 = vmatprep.mubr.f32.mxu0 0.0
      %3432 = vmatmul.mubr.f32.gmra.mrb[0].mxu0 %v3210
      %v3433 = vpop.f32.mrb[0].mxu0
      %v3434 = vadd.f32 0.0, %v3433
      %v3435 = vpop.f32.mrb[0].mxu0
      %3436 = vdwg.mxu0
      %3469 = vrot.lane.b32.xlu0 %v3279, 4
      %v3470 = vpop.permute.xlu0 %3469
      %3471 = vrot.lane.b32.xlu0 %v3284, 4
      %v3472 = vpop.permute.xlu0 %3471
      %3473 = vrot.lane.b32.xlu0 %v3289, 4
      %v3474 = vpop.permute.xlu0 %3473
      %3475 = vrot.lane.b32.xlu0 %v3294, 4
      %v3476 = vpop.permute.xlu0 %3475
      %3477 = vrot.lane.b32.xlu0 %v3299, 4
      %v3478 = vpop.permute.xlu0 %3477
      %3479 = vrot.lane.b32.xlu0 %v3304, 4
      %v3480 = vpop.permute.xlu0 %3479
      %3481 = vrot.lane.b32.xlu0 %v3309, 4
      %v3482 = vpop.permute.xlu0 %3481
      %3483 = vrot.lane.b32.xlu0 %v3314, 4
      %v3484 = vpop.permute.xlu0 %3483
      %3485 = vrot.lane.b32.xlu0 %v3319, 4
      %v3486 = vpop.permute.xlu0 %3485
      %3487 = vrot.lane.b32.xlu0 %v3324, 4
      %v3488 = vpop.permute.xlu0 %3487
      %3489 = vrot.lane.b32.xlu0 %v3329, 4
      %v3490 = vpop.permute.xlu0 %3489
      %3491 = vrot.lane.b32.xlu0 %v3334, 4
      %v3492 = vpop.permute.xlu0 %3491
      %3493 = vrot.lane.b32.xlu0 %v3339, 4
      %v3494 = vpop.permute.xlu0 %3493
      %3495 = vrot.lane.b32.xlu0 %v3344, 4
      %v3496 = vpop.permute.xlu0 %3495
      %3497 = vrot.lane.b32.xlu0 %v3349, 4
      %v3498 = vpop.permute.xlu0 %3497
      %3499 = vrot.lane.b32.xlu0 %v3354, 4
      %v3500 = vpop.permute.xlu0 %3499
      %3501 = vrot.lane.b32.xlu0 %v3359, 4
      %v3502 = vpop.permute.xlu0 %3501
      %3503 = vrot.lane.b32.xlu0 %v3364, 4
      %v3504 = vpop.permute.xlu0 %3503
      %3505 = vrot.lane.b32.xlu0 %v3369, 4
      %v3506 = vpop.permute.xlu0 %3505
      %3507 = vrot.lane.b32.xlu0 %v3374, 4
      %v3508 = vpop.permute.xlu0 %3507
      %3509 = vrot.lane.b32.xlu0 %v3379, 4
      %v3510 = vpop.permute.xlu0 %3509
      %3511 = vrot.lane.b32.xlu0 %v3384, 4
      %v3512 = vpop.permute.xlu0 %3511
      %3513 = vrot.lane.b32.xlu0 %v3389, 4
      %v3514 = vpop.permute.xlu0 %3513
      %3515 = vrot.lane.b32.xlu0 %v3394, 4
      %v3516 = vpop.permute.xlu0 %3515
      %3517 = vrot.lane.b32.xlu0 %v3399, 4
      %v3518 = vpop.permute.xlu0 %3517
      %3519 = vrot.lane.b32.xlu0 %v3404, 4
      %v3520 = vpop.permute.xlu0 %3519
      %3521 = vrot.lane.b32.xlu0 %v3409, 4
      %v3522 = vpop.permute.xlu0 %3521
      %3523 = vrot.lane.b32.xlu0 %v3414, 4
      %v3524 = vpop.permute.xlu0 %3523
      %3525 = vrot.lane.b32.xlu0 %v3419, 4
      %v3526 = vpop.permute.xlu0 %3525
      %3527 = vrot.lane.b32.xlu0 %v3424, 4
      %v3528 = vpop.permute.xlu0 %3527
      %3529 = vrot.lane.b32.xlu0 %v3429, 4
      %v3530 = vpop.permute.xlu0 %3529
      %3531 = vrot.lane.b32.xlu0 %v3434, 4
      %v3532 = vpop.permute.xlu0 %3531
      %v3565 = vsel %vm308, %v2254, %v3470
      %v3566 = vsel %vm308, %v2259, %v3472
      %v3567 = vsel %vm308, %v2264, %v3474
      %v3568 = vsel %vm308, %v2269, %v3476
      %v3569 = vsel %vm308, %v2274, %v3478
      %v3570 = vsel %vm308, %v2279, %v3480
      %v3571 = vsel %vm308, %v2284, %v3482
      %v3572 = vsel %vm308, %v2289, %v3484
      %v3573 = vsel %vm308, %v2294, %v3486
      %v3574 = vsel %vm308, %v2299, %v3488
      %v3575 = vsel %vm308, %v2304, %v3490
      %v3576 = vsel %vm308, %v2309, %v3492
      %v3577 = vsel %vm308, %v2314, %v3494
      %v3578 = vsel %vm308, %v2319, %v3496
      %v3579 = vsel %vm308, %v2324, %v3498
      %v3580 = vsel %vm308, %v2329, %v3500
      %v3581 = vsel %vm308, %v2334, %v3502
      %v3582 = vsel %vm308, %v2339, %v3504
      %v3583 = vsel %vm308, %v2344, %v3506
      %v3584 = vsel %vm308, %v2349, %v3508
      %v3585 = vsel %vm308, %v2354, %v3510
      %v3586 = vsel %vm308, %v2359, %v3512
      %v3587 = vsel %vm308, %v2364, %v3514
      %v3588 = vsel %vm308, %v2369, %v3516
      %v3589 = vsel %vm308, %v2374, %v3518
      %v3590 = vsel %vm308, %v2379, %v3520
      %v3591 = vsel %vm308, %v2384, %v3522
      %v3592 = vsel %vm308, %v2389, %v3524
      %v3593 = vsel %vm308, %v2394, %v3526
      %v3594 = vsel %vm308, %v2399, %v3528
      %v3595 = vsel %vm308, %v2404, %v3530
      %v3596 = vsel %vm308, %v2409, %v3532
      %v3597 = vadd.f32 %v3565, %v955
      %v3598 = vadd.f32 %v3566, %v956
      %v3599 = vadd.f32 %v3567, %v957
      %v3600 = vadd.f32 %v3568, %v958
      %v3601 = vadd.f32 %v3569, %v959
      %v3602 = vadd.f32 %v3570, %v960
      %v3603 = vadd.f32 %v3571, %v961
      %v3604 = vadd.f32 %v3572, %v962
      %v3605 = vadd.f32 %v3573, %v963
      %v3606 = vadd.f32 %v3574, %v964
      %v3607 = vadd.f32 %v3575, %v965
      %v3608 = vadd.f32 %v3576, %v966
      %v3609 = vadd.f32 %v3577, %v967
      %v3610 = vadd.f32 %v3578, %v968
      %v3611 = vadd.f32 %v3579, %v969
      %v3612 = vadd.f32 %v3580, %v970
      %v3613 = vadd.f32 %v3581, %v971
      %v3614 = vadd.f32 %v3582, %v972
      %v3615 = vadd.f32 %v3583, %v973
      %v3616 = vadd.f32 %v3584, %v974
      %v3617 = vadd.f32 %v3585, %v975
      %v3618 = vadd.f32 %v3586, %v976
      %v3619 = vadd.f32 %v3587, %v977
      %v3620 = vadd.f32 %v3588, %v978
      %v3621 = vadd.f32 %v3589, %v979
      %v3622 = vadd.f32 %v3590, %v980
      %v3623 = vadd.f32 %v3591, %v981
      %v3624 = vadd.f32 %v3592, %v982
      %v3625 = vadd.f32 %v3593, %v983
      %v3626 = vadd.f32 %v3594, %v984
      %v3627 = vadd.f32 %v3595, %v985
      %v3628 = vadd.f32 %v3596, %v986
      %v3629 = vmax.f32 %v3597, 0.0
      %v3630 = vmax.f32 %v3598, 0.0
      %v3631 = vmax.f32 %v3599, 0.0
      %v3632 = vmax.f32 %v3600, 0.0
      %v3633 = vmax.f32 %v3601, 0.0
      %v3634 = vmax.f32 %v3602, 0.0
      %v3635 = vmax.f32 %v3603, 0.0
      %v3636 = vmax.f32 %v3604, 0.0
      %v3637 = vmax.f32 %v3605, 0.0
      %v3638 = vmax.f32 %v3606, 0.0
      %v3639 = vmax.f32 %v3607, 0.0
      %v3640 = vmax.f32 %v3608, 0.0
      %v3641 = vmax.f32 %v3609, 0.0
      %v3642 = vmax.f32 %v3610, 0.0
      %v3643 = vmax.f32 %v3611, 0.0
      %v3644 = vmax.f32 %v3612, 0.0
      %v3645 = vmax.f32 %v3613, 0.0
      %v3646 = vmax.f32 %v3614, 0.0
      %v3647 = vmax.f32 %v3615, 0.0
      %v3648 = vmax.f32 %v3616, 0.0
      %v3649 = vmax.f32 %v3617, 0.0
      %v3650 = vmax.f32 %v3618, 0.0
      %v3651 = vmax.f32 %v3619, 0.0
      %v3652 = vmax.f32 %v3620, 0.0
      %v3653 = vmax.f32 %v3621, 0.0
      %v3654 = vmax.f32 %v3622, 0.0
      %v3655 = vmax.f32 %v3623, 0.0
      %v3656 = vmax.f32 %v3624, 0.0
      %v3657 = vmax.f32 %v3625, 0.0
      %v3658 = vmax.f32 %v3626, 0.0
      %v3659 = vmax.f32 %v3627, 0.0
      %v3660 = vmax.f32 %v3628, 0.0
      %3661 = vst.msk [vmem:[%s262] sm:$0xff] %vm1852, %v3629
      %3662 = vst.msk [vmem:[%s262 + $0x8] sm:$0xff] %vm1852, %v3630
      %3663 = vst.msk [vmem:[%s262 + $0x20] sm:$0xff] %vm1852, %v3631
      %3664 = vst.msk [vmem:[%s262 + $0x28] sm:$0xff] %vm1852, %v3632
      %3665 = vst.msk [vmem:[%s262 + $0x40] sm:$0xff] %vm1852, %v3633
      %3666 = vst.msk [vmem:[%s262 + $0x48] sm:$0xff] %vm1852, %v3634
      %3667 = vst.msk [vmem:[%s262 + $0x60] sm:$0xff] %vm1852, %v3635
      %3668 = vst.msk [vmem:[%s262 + $0x68] sm:$0xff] %vm1852, %v3636
      %3669 = vst.msk [vmem:[%s262 + $0x80] sm:$0xff] %vm1852, %v3637
      %3670 = vst.msk [vmem:[%s262 + $0x88] sm:$0xff] %vm1852, %v3638
      %3671 = vst.msk [vmem:[%s262 + $0xa0] sm:$0xff] %vm1852, %v3639
      %3672 = vst.msk [vmem:[%s262 + $0xa8] sm:$0xff] %vm1852, %v3640
      %3673 = vst.msk [vmem:[%s262 + $0xc0] sm:$0xff] %vm1852, %v3641
      %3674 = vst.msk [vmem:[%s262 + $0xc8] sm:$0xff] %vm1852, %v3642
      %3675 = vst.msk [vmem:[%s262 + $0xe0] sm:$0xff] %vm1852, %v3643
      %3676 = vst.msk [vmem:[%s262 + $0xe8] sm:$0xff] %vm1852, %v3644
      %3677 = vst.msk [vmem:[%s262 + $0x100] sm:$0xff] %vm1852, %v3645
      %3678 = vst.msk [vmem:[%s262 + $0x108] sm:$0xff] %vm1852, %v3646
      %3679 = vst.msk [vmem:[%s262 + $0x120] sm:$0xff] %vm1852, %v3647
      %3680 = vst.msk [vmem:[%s262 + $0x128] sm:$0xff] %vm1852, %v3648
      %3681 = vst.msk [vmem:[%s262 + $0x140] sm:$0xff] %vm1852, %v3649
      %3682 = vst.msk [vmem:[%s262 + $0x148] sm:$0xff] %vm1852, %v3650
      %3683 = vst.msk [vmem:[%s262 + $0x160] sm:$0xff] %vm1852, %v3651
      %3684 = vst.msk [vmem:[%s262 + $0x168] sm:$0xff] %vm1852, %v3652
      %3685 = vst.msk [vmem:[%s262 + $0x180] sm:$0xff] %vm1852, %v3653
      %3686 = vst.msk [vmem:[%s262 + $0x188] sm:$0xff] %vm1852, %v3654
      %3687 = vst.msk [vmem:[%s262 + $0x1a0] sm:$0xff] %vm1852, %v3655
      %3688 = vst.msk [vmem:[%s262 + $0x1a8] sm:$0xff] %vm1852, %v3656
      %3689 = vst.msk [vmem:[%s262 + $0x1c0] sm:$0xff] %vm1852, %v3657
      %3690 = vst.msk [vmem:[%s262 + $0x1c8] sm:$0xff] %vm1852, %v3658
      %3691 = vst.msk [vmem:[%s262 + $0x1e0] sm:$0xff] %vm1852, %v3659
      %3692 = vst.msk [vmem:[%s262 + $0x1e8] sm:$0xff] %vm1852, %v3660
      %v3693 = vld [vmem:[%s1051] sm:$0xff]
      %v3694 = vld [vmem:[%s1051 + $0x8] sm:$0xff]
      %v3695 = vld [vmem:[%s1051 + $0x18] sm:$0xff]
      %v3696 = vld [vmem:[%s1051 + $0x20] sm:$0xff]
      %v3697 = vld [vmem:[%s1051 + $0x30] sm:$0xff]
      %v3698 = vld [vmem:[%s1051 + $0x38] sm:$0xff]
      %v3699 = vld [vmem:[%s1051 + $0x48] sm:$0xff]
      %v3700 = vld [vmem:[%s1051 + $0x50] sm:$0xff]
      %v3701 = vld [vmem:[%s1051 + $0x60] sm:$0xff]
      %v3702 = vld [vmem:[%s1051 + $0x68] sm:$0xff]
      %v3703 = vld [vmem:[%s1051 + $0x78] sm:$0xff]
      %v3704 = vld [vmem:[%s1051 + $0x80] sm:$0xff]
      %v3705 = vld [vmem:[%s1051 + $0x90] sm:$0xff]
      %v3706 = vld [vmem:[%s1051 + $0x98] sm:$0xff]
      %v3707 = vld [vmem:[%s1051 + $0xa8] sm:$0xff]
      %v3708 = vld [vmem:[%s1051 + $0xb0] sm:$0xff]
      %v3709 = vld [vmem:[%s1051 + $0xc0] sm:$0xff]
      %v3710 = vld [vmem:[%s1051 + $0xc8] sm:$0xff]
      %v3711 = vld [vmem:[%s1051 + $0xd8] sm:$0xff]
      %v3712 = vld [vmem:[%s1051 + $0xe0] sm:$0xff]
      %v3713 = vld [vmem:[%s1051 + $0xf0] sm:$0xff]
      %v3714 = vld [vmem:[%s1051 + $0xf8] sm:$0xff]
      %v3715 = vld [vmem:[%s1051 + $0x108] sm:$0xff]
      %v3716 = vld [vmem:[%s1051 + $0x110] sm:$0xff]
      %v3717 = vld [vmem:[%s1051 + $0x120] sm:$0xff]
      %v3718 = vld [vmem:[%s1051 + $0x128] sm:$0xff]
      %v3719 = vld [vmem:[%s1051 + $0x138] sm:$0xff]
      %v3720 = vld [vmem:[%s1051 + $0x140] sm:$0xff]
      %v3721 = vld [vmem:[%s1051 + $0x150] sm:$0xff]
      %v3722 = vld [vmem:[%s1051 + $0x158] sm:$0xff]
      %v3723 = vld [vmem:[%s1051 + $0x168] sm:$0xff]
      %v3724 = vld [vmem:[%s1051 + $0x170] sm:$0xff]
      %v3725 = vld [vmem:[%s1051 + $0x1] sm:$0xff]
      %v3726 = vld [vmem:[%s1051 + $0x9] sm:$0xff]
      %v3727 = vld [vmem:[%s1051 + $0x19] sm:$0xff]
      %v3728 = vld [vmem:[%s1051 + $0x21] sm:$0xff]
      %v3729 = vld [vmem:[%s1051 + $0x31] sm:$0xff]
      %v3730 = vld [vmem:[%s1051 + $0x39] sm:$0xff]
      %v3731 = vld [vmem:[%s1051 + $0x49] sm:$0xff]
      %v3732 = vld [vmem:[%s1051 + $0x51] sm:$0xff]
      %v3733 = vld [vmem:[%s1051 + $0x61] sm:$0xff]
      %v3734 = vld [vmem:[%s1051 + $0x69] sm:$0xff]
      %v3735 = vld [vmem:[%s1051 + $0x79] sm:$0xff]
      %v3736 = vld [vmem:[%s1051 + $0x81] sm:$0xff]
      %v3737 = vld [vmem:[%s1051 + $0x91] sm:$0xff]
      %v3738 = vld [vmem:[%s1051 + $0x99] sm:$0xff]
      %v3739 = vld [vmem:[%s1051 + $0xa9] sm:$0xff]
      %v3740 = vld [vmem:[%s1051 + $0xb1] sm:$0xff]
      %v3741 = vld [vmem:[%s1051 + $0xc1] sm:$0xff]
      %v3742 = vld [vmem:[%s1051 + $0xc9] sm:$0xff]
      %v3743 = vld [vmem:[%s1051 + $0xd9] sm:$0xff]
      %v3744 = vld [vmem:[%s1051 + $0xe1] sm:$0xff]
      %v3745 = vld [vmem:[%s1051 + $0xf1] sm:$0xff]
      %v3746 = vld [vmem:[%s1051 + $0xf9] sm:$0xff]
      %v3747 = vld [vmem:[%s1051 + $0x109] sm:$0xff]
      %v3748 = vld [vmem:[%s1051 + $0x111] sm:$0xff]
      %v3749 = vld [vmem:[%s1051 + $0x121] sm:$0xff]
      %v3750 = vld [vmem:[%s1051 + $0x129] sm:$0xff]
      %v3751 = vld [vmem:[%s1051 + $0x139] sm:$0xff]
      %v3752 = vld [vmem:[%s1051 + $0x141] sm:$0xff]
      %v3753 = vld [vmem:[%s1051 + $0x151] sm:$0xff]
      %v3754 = vld [vmem:[%s1051 + $0x159] sm:$0xff]
      %v3755 = vld [vmem:[%s1051 + $0x169] sm:$0xff]
      %v3756 = vld [vmem:[%s1051 + $0x171] sm:$0xff]
      %s3757 = scalar_lea.vmem [#allocation2], 48
      %v3758 = vld [vmem:[%s3757] sm:$0xff]
      %v3759 = vld [vmem:[%s3757 + $0x8] sm:$0xff]
      %v3760 = vld [vmem:[%s3757 + $0x18] sm:$0xff]
      %v3761 = vld [vmem:[%s3757 + $0x20] sm:$0xff]
      %v3762 = vld [vmem:[%s3757 + $0x30] sm:$0xff]
      %v3763 = vld [vmem:[%s3757 + $0x38] sm:$0xff]
      %v3764 = vld [vmem:[%s3757 + $0x48] sm:$0xff]
      %v3765 = vld [vmem:[%s3757 + $0x50] sm:$0xff]
      %v3766 = vld [vmem:[%s3757 + $0x60] sm:$0xff]
      %v3767 = vld [vmem:[%s3757 + $0x68] sm:$0xff]
      %v3768 = vld [vmem:[%s3757 + $0x78] sm:$0xff]
      %v3769 = vld [vmem:[%s3757 + $0x80] sm:$0xff]
      %v3770 = vld [vmem:[%s3757 + $0x90] sm:$0xff]
      %v3771 = vld [vmem:[%s3757 + $0x98] sm:$0xff]
      %v3772 = vld [vmem:[%s3757 + $0xa8] sm:$0xff]
      %v3773 = vld [vmem:[%s3757 + $0xb0] sm:$0xff]
      %v3774 = vld [vmem:[%s3757 + $0xc0] sm:$0xff]
      %v3775 = vld [vmem:[%s3757 + $0xc8] sm:$0xff]
      %v3776 = vld [vmem:[%s3757 + $0xd8] sm:$0xff]
      %v3777 = vld [vmem:[%s3757 + $0xe0] sm:$0xff]
      %v3778 = vld [vmem:[%s3757 + $0xf0] sm:$0xff]
      %v3779 = vld [vmem:[%s3757 + $0xf8] sm:$0xff]
      %v3780 = vld [vmem:[%s3757 + $0x108] sm:$0xff]
      %v3781 = vld [vmem:[%s3757 + $0x110] sm:$0xff]
      %v3782 = vld [vmem:[%s3757 + $0x120] sm:$0xff]
      %v3783 = vld [vmem:[%s3757 + $0x128] sm:$0xff]
      %v3784 = vld [vmem:[%s3757 + $0x138] sm:$0xff]
      %v3785 = vld [vmem:[%s3757 + $0x140] sm:$0xff]
      %v3786 = vld [vmem:[%s3757 + $0x150] sm:$0xff]
      %v3787 = vld [vmem:[%s3757 + $0x158] sm:$0xff]
      %v3788 = vld [vmem:[%s3757 + $0x168] sm:$0xff]
      %v3789 = vld [vmem:[%s3757 + $0x170] sm:$0xff]
      %v3790 = vld [vmem:[%s3757 + $0x1] sm:$0xff]
      %v3791 = vld [vmem:[%s3757 + $0x9] sm:$0xff]
      %v3792 = vld [vmem:[%s3757 + $0x19] sm:$0xff]
      %v3793 = vld [vmem:[%s3757 + $0x21] sm:$0xff]
      %v3794 = vld [vmem:[%s3757 + $0x31] sm:$0xff]
      %v3795 = vld [vmem:[%s3757 + $0x39] sm:$0xff]
      %v3796 = vld [vmem:[%s3757 + $0x49] sm:$0xff]
      %v3797 = vld [vmem:[%s3757 + $0x51] sm:$0xff]
      %v3798 = vld [vmem:[%s3757 + $0x61] sm:$0xff]
      %v3799 = vld [vmem:[%s3757 + $0x69] sm:$0xff]
      %v3800 = vld [vmem:[%s3757 + $0x79] sm:$0xff]
      %v3801 = vld [vmem:[%s3757 + $0x81] sm:$0xff]
      %v3802 = vld [vmem:[%s3757 + $0x91] sm:$0xff]
      %v3803 = vld [vmem:[%s3757 + $0x99] sm:$0xff]
      %v3804 = vld [vmem:[%s3757 + $0xa9] sm:$0xff]
      %v3805 = vld [vmem:[%s3757 + $0xb1] sm:$0xff]
      %v3806 = vld [vmem:[%s3757 + $0xc1] sm:$0xff]
      %v3807 = vld [vmem:[%s3757 + $0xc9] sm:$0xff]
      %v3808 = vld [vmem:[%s3757 + $0xd9] sm:$0xff]
      %v3809 = vld [vmem:[%s3757 + $0xe1] sm:$0xff]
      %v3810 = vld [vmem:[%s3757 + $0xf1] sm:$0xff]
      %v3811 = vld [vmem:[%s3757 + $0xf9] sm:$0xff]
      %v3812 = vld [vmem:[%s3757 + $0x109] sm:$0xff]
      %v3813 = vld [vmem:[%s3757 + $0x111] sm:$0xff]
      %v3814 = vld [vmem:[%s3757 + $0x121] sm:$0xff]
      %v3815 = vld [vmem:[%s3757 + $0x129] sm:$0xff]
      %v3816 = vld [vmem:[%s3757 + $0x139] sm:$0xff]
      %v3817 = vld [vmem:[%s3757 + $0x141] sm:$0xff]
      %v3818 = vld [vmem:[%s3757 + $0x151] sm:$0xff]
      %v3819 = vld [vmem:[%s3757 + $0x159] sm:$0xff]
      %v3820 = vld [vmem:[%s3757 + $0x169] sm:$0xff]
      %v3821 = vld [vmem:[%s3757 + $0x171] sm:$0xff]
      %3854 = vrot.lane.b32.xlu0 %v3693, 124
      %v3855 = vpop.permute.xlu0 %3854
      %3856 = vrot.lane.b32.xlu0 %v3694, 124
      %v3857 = vpop.permute.xlu0 %3856
      %3858 = vrot.lane.b32.xlu0 %v3695, 124
      %v3859 = vpop.permute.xlu0 %3858
      %3860 = vrot.lane.b32.xlu0 %v3696, 124
      %v3861 = vpop.permute.xlu0 %3860
      %3862 = vrot.lane.b32.xlu0 %v3697, 124
      %v3863 = vpop.permute.xlu0 %3862
      %3864 = vrot.lane.b32.xlu0 %v3698, 124
      %v3865 = vpop.permute.xlu0 %3864
      %3866 = vrot.lane.b32.xlu0 %v3699, 124
      %v3867 = vpop.permute.xlu0 %3866
      %3868 = vrot.lane.b32.xlu0 %v3700, 124
      %v3869 = vpop.permute.xlu0 %3868
      %3870 = vrot.lane.b32.xlu0 %v3701, 124
      %v3871 = vpop.permute.xlu0 %3870
      %3872 = vrot.lane.b32.xlu0 %v3702, 124
      %v3873 = vpop.permute.xlu0 %3872
      %3874 = vrot.lane.b32.xlu0 %v3703, 124
      %v3875 = vpop.permute.xlu0 %3874
      %3876 = vrot.lane.b32.xlu0 %v3704, 124
      %v3877 = vpop.permute.xlu0 %3876
      %3878 = vrot.lane.b32.xlu0 %v3705, 124
      %v3879 = vpop.permute.xlu0 %3878
      %3880 = vrot.lane.b32.xlu0 %v3706, 124
      %v3881 = vpop.permute.xlu0 %3880
      %3882 = vrot.lane.b32.xlu0 %v3707, 124
      %v3883 = vpop.permute.xlu0 %3882
      %3884 = vrot.lane.b32.xlu0 %v3708, 124
      %v3885 = vpop.permute.xlu0 %3884
      %3886 = vrot.lane.b32.xlu0 %v3709, 124
      %v3887 = vpop.permute.xlu0 %3886
      %3888 = vrot.lane.b32.xlu0 %v3710, 124
      %v3889 = vpop.permute.xlu0 %3888
      %3890 = vrot.lane.b32.xlu0 %v3711, 124
      %v3891 = vpop.permute.xlu0 %3890
      %3892 = vrot.lane.b32.xlu0 %v3712, 124
      %v3893 = vpop.permute.xlu0 %3892
      %3894 = vrot.lane.b32.xlu0 %v3713, 124
      %v3895 = vpop.permute.xlu0 %3894
      %3896 = vrot.lane.b32.xlu0 %v3714, 124
      %v3897 = vpop.permute.xlu0 %3896
      %3898 = vrot.lane.b32.xlu0 %v3715, 124
      %v3899 = vpop.permute.xlu0 %3898
      %3900 = vrot.lane.b32.xlu0 %v3716, 124
      %v3901 = vpop.permute.xlu0 %3900
      %3902 = vrot.lane.b32.xlu0 %v3717, 124
      %v3903 = vpop.permute.xlu0 %3902
      %3904 = vrot.lane.b32.xlu0 %v3718, 124
      %v3905 = vpop.permute.xlu0 %3904
      %3906 = vrot.lane.b32.xlu0 %v3719, 124
      %v3907 = vpop.permute.xlu0 %3906
      %3908 = vrot.lane.b32.xlu0 %v3720, 124
      %v3909 = vpop.permute.xlu0 %3908
      %3910 = vrot.lane.b32.xlu0 %v3721, 124
      %v3911 = vpop.permute.xlu0 %3910
      %3912 = vrot.lane.b32.xlu0 %v3722, 124
      %v3913 = vpop.permute.xlu0 %3912
      %3914 = vrot.lane.b32.xlu0 %v3723, 124
      %v3915 = vpop.permute.xlu0 %3914
      %3916 = vrot.lane.b32.xlu0 %v3724, 124
      %v3917 = vpop.permute.xlu0 %3916
      %3982 = vrot.lane.b32.xlu0 %v3725, 4
      %v3983 = vpop.permute.xlu0 %3982
      %3984 = vrot.lane.b32.xlu0 %v3726, 4
      %v3985 = vpop.permute.xlu0 %3984
      %3986 = vrot.lane.b32.xlu0 %v3727, 4
      %v3987 = vpop.permute.xlu0 %3986
      %3988 = vrot.lane.b32.xlu0 %v3728, 4
      %v3989 = vpop.permute.xlu0 %3988
      %3990 = vrot.lane.b32.xlu0 %v3729, 4
      %v3991 = vpop.permute.xlu0 %3990
      %3992 = vrot.lane.b32.xlu0 %v3730, 4
      %v3993 = vpop.permute.xlu0 %3992
      %3994 = vrot.lane.b32.xlu0 %v3731, 4
      %v3995 = vpop.permute.xlu0 %3994
      %3996 = vrot.lane.b32.xlu0 %v3732, 4
      %v3997 = vpop.permute.xlu0 %3996
      %3998 = vrot.lane.b32.xlu0 %v3733, 4
      %v3999 = vpop.permute.xlu0 %3998
      %4000 = vrot.lane.b32.xlu0 %v3734, 4
      %v4001 = vpop.permute.xlu0 %4000
      %4002 = vrot.lane.b32.xlu0 %v3735, 4
      %v4003 = vpop.permute.xlu0 %4002
      %4004 = vrot.lane.b32.xlu0 %v3736, 4
      %v4005 = vpop.permute.xlu0 %4004
      %4006 = vrot.lane.b32.xlu0 %v3737, 4
      %v4007 = vpop.permute.xlu0 %4006
      %4008 = vrot.lane.b32.xlu0 %v3738, 4
      %v4009 = vpop.permute.xlu0 %4008
      %4010 = vrot.lane.b32.xlu0 %v3739, 4
      %v4011 = vpop.permute.xlu0 %4010
      %4012 = vrot.lane.b32.xlu0 %v3740, 4
      %v4013 = vpop.permute.xlu0 %4012
      %4014 = vrot.lane.b32.xlu0 %v3741, 4
      %v4015 = vpop.permute.xlu0 %4014
      %4016 = vrot.lane.b32.xlu0 %v3742, 4
      %v4017 = vpop.permute.xlu0 %4016
      %4018 = vrot.lane.b32.xlu0 %v3743, 4
      %v4019 = vpop.permute.xlu0 %4018
      %4020 = vrot.lane.b32.xlu0 %v3744, 4
      %v4021 = vpop.permute.xlu0 %4020
      %4022 = vrot.lane.b32.xlu0 %v3745, 4
      %v4023 = vpop.permute.xlu0 %4022
      %4024 = vrot.lane.b32.xlu0 %v3746, 4
      %v4025 = vpop.permute.xlu0 %4024
      %4026 = vrot.lane.b32.xlu0 %v3747, 4
      %v4027 = vpop.permute.xlu0 %4026
      %4028 = vrot.lane.b32.xlu0 %v3748, 4
      %v4029 = vpop.permute.xlu0 %4028
      %4030 = vrot.lane.b32.xlu0 %v3749, 4
      %v4031 = vpop.permute.xlu0 %4030
      %4032 = vrot.lane.b32.xlu0 %v3750, 4
      %v4033 = vpop.permute.xlu0 %4032
      %4034 = vrot.lane.b32.xlu0 %v3751, 4
      %v4035 = vpop.permute.xlu0 %4034
      %4036 = vrot.lane.b32.xlu0 %v3752, 4
      %v4037 = vpop.permute.xlu0 %4036
      %4038 = vrot.lane.b32.xlu0 %v3753, 4
      %v4039 = vpop.permute.xlu0 %4038
      %4040 = vrot.lane.b32.xlu0 %v3754, 4
      %v4041 = vpop.permute.xlu0 %4040
      %4042 = vrot.lane.b32.xlu0 %v3755, 4
      %v4043 = vpop.permute.xlu0 %4042
      %4044 = vrot.lane.b32.xlu0 %v3756, 4
      %v4045 = vpop.permute.xlu0 %4044
      %4078 = vrot.lane.b32.xlu0 %v3725, 8
      %v4079 = vpop.permute.xlu0 %4078
      %4080 = vrot.lane.b32.xlu0 %v3726, 8
      %v4081 = vpop.permute.xlu0 %4080
      %4082 = vrot.lane.b32.xlu0 %v3727, 8
      %v4083 = vpop.permute.xlu0 %4082
      %4084 = vrot.lane.b32.xlu0 %v3728, 8
      %v4085 = vpop.permute.xlu0 %4084
      %4086 = vrot.lane.b32.xlu0 %v3729, 8
      %v4087 = vpop.permute.xlu0 %4086
      %4088 = vrot.lane.b32.xlu0 %v3730, 8
      %v4089 = vpop.permute.xlu0 %4088
      %4090 = vrot.lane.b32.xlu0 %v3731, 8
      %v4091 = vpop.permute.xlu0 %4090
      %4092 = vrot.lane.b32.xlu0 %v3732, 8
      %v4093 = vpop.permute.xlu0 %4092
      %4094 = vrot.lane.b32.xlu0 %v3733, 8
      %v4095 = vpop.permute.xlu0 %4094
      %4096 = vrot.lane.b32.xlu0 %v3734, 8
      %v4097 = vpop.permute.xlu0 %4096
      %4098 = vrot.lane.b32.xlu0 %v3735, 8
      %v4099 = vpop.permute.xlu0 %4098
      %4100 = vrot.lane.b32.xlu0 %v3736, 8
      %v4101 = vpop.permute.xlu0 %4100
      %4102 = vrot.lane.b32.xlu0 %v3737, 8
      %v4103 = vpop.permute.xlu0 %4102
      %4104 = vrot.lane.b32.xlu0 %v3738, 8
      %v4105 = vpop.permute.xlu0 %4104
      %4106 = vrot.lane.b32.xlu0 %v3739, 8
      %v4107 = vpop.permute.xlu0 %4106
      %4108 = vrot.lane.b32.xlu0 %v3740, 8
      %v4109 = vpop.permute.xlu0 %4108
      %4110 = vrot.lane.b32.xlu0 %v3741, 8
      %v4111 = vpop.permute.xlu0 %4110
      %4112 = vrot.lane.b32.xlu0 %v3742, 8
      %v4113 = vpop.permute.xlu0 %4112
      %4114 = vrot.lane.b32.xlu0 %v3743, 8
      %v4115 = vpop.permute.xlu0 %4114
      %4116 = vrot.lane.b32.xlu0 %v3744, 8
      %v4117 = vpop.permute.xlu0 %4116
      %4118 = vrot.lane.b32.xlu0 %v3745, 8
      %v4119 = vpop.permute.xlu0 %4118
      %4120 = vrot.lane.b32.xlu0 %v3746, 8
      %v4121 = vpop.permute.xlu0 %4120
      %4122 = vrot.lane.b32.xlu0 %v3747, 8
      %v4123 = vpop.permute.xlu0 %4122
      %4124 = vrot.lane.b32.xlu0 %v3748, 8
      %v4125 = vpop.permute.xlu0 %4124
      %4126 = vrot.lane.b32.xlu0 %v3749, 8
      %v4127 = vpop.permute.xlu0 %4126
      %4128 = vrot.lane.b32.xlu0 %v3750, 8
      %v4129 = vpop.permute.xlu0 %4128
      %4130 = vrot.lane.b32.xlu0 %v3751, 8
      %v4131 = vpop.permute.xlu0 %4130
      %4132 = vrot.lane.b32.xlu0 %v3752, 8
      %v4133 = vpop.permute.xlu0 %4132
      %4134 = vrot.lane.b32.xlu0 %v3753, 8
      %v4135 = vpop.permute.xlu0 %4134
      %4136 = vrot.lane.b32.xlu0 %v3754, 8
      %v4137 = vpop.permute.xlu0 %4136
      %4138 = vrot.lane.b32.xlu0 %v3755, 8
      %v4139 = vpop.permute.xlu0 %4138
      %4140 = vrot.lane.b32.xlu0 %v3756, 8
      %v4141 = vpop.permute.xlu0 %4140
      %4206 = vrot.lane.b32.xlu0 %v3758, 20
      %v4207 = vpop.permute.xlu0 %4206
      %4208 = vrot.lane.b32.xlu0 %v3759, 20
      %v4209 = vpop.permute.xlu0 %4208
      %4210 = vrot.lane.b32.xlu0 %v3760, 20
      %v4211 = vpop.permute.xlu0 %4210
      %4212 = vrot.lane.b32.xlu0 %v3761, 20
      %v4213 = vpop.permute.xlu0 %4212
      %4214 = vrot.lane.b32.xlu0 %v3762, 20
      %v4215 = vpop.permute.xlu0 %4214
      %4216 = vrot.lane.b32.xlu0 %v3763, 20
      %v4217 = vpop.permute.xlu0 %4216
      %4218 = vrot.lane.b32.xlu0 %v3764, 20
      %v4219 = vpop.permute.xlu0 %4218
      %4220 = vrot.lane.b32.xlu0 %v3765, 20
      %v4221 = vpop.permute.xlu0 %4220
      %4222 = vrot.lane.b32.xlu0 %v3766, 20
      %v4223 = vpop.permute.xlu0 %4222
      %4224 = vrot.lane.b32.xlu0 %v3767, 20
      %v4225 = vpop.permute.xlu0 %4224
      %4226 = vrot.lane.b32.xlu0 %v3768, 20
      %v4227 = vpop.permute.xlu0 %4226
      %4228 = vrot.lane.b32.xlu0 %v3769, 20
      %v4229 = vpop.permute.xlu0 %4228
      %4230 = vrot.lane.b32.xlu0 %v3770, 20
      %v4231 = vpop.permute.xlu0 %4230
      %4232 = vrot.lane.b32.xlu0 %v3771, 20
      %v4233 = vpop.permute.xlu0 %4232
      %4234 = vrot.lane.b32.xlu0 %v3772, 20
      %v4235 = vpop.permute.xlu0 %4234
      %4236 = vrot.lane.b32.xlu0 %v3773, 20
      %v4237 = vpop.permute.xlu0 %4236
      %4238 = vrot.lane.b32.xlu0 %v3774, 20
      %v4239 = vpop.permute.xlu0 %4238
      %4240 = vrot.lane.b32.xlu0 %v3775, 20
      %v4241 = vpop.permute.xlu0 %4240
      %4242 = vrot.lane.b32.xlu0 %v3776, 20
      %v4243 = vpop.permute.xlu0 %4242
      %4244 = vrot.lane.b32.xlu0 %v3777, 20
      %v4245 = vpop.permute.xlu0 %4244
      %4246 = vrot.lane.b32.xlu0 %v3778, 20
      %v4247 = vpop.permute.xlu0 %4246
      %4248 = vrot.lane.b32.xlu0 %v3779, 20
      %v4249 = vpop.permute.xlu0 %4248
      %4250 = vrot.lane.b32.xlu0 %v3780, 20
      %v4251 = vpop.permute.xlu0 %4250
      %4252 = vrot.lane.b32.xlu0 %v3781, 20
      %v4253 = vpop.permute.xlu0 %4252
      %4254 = vrot.lane.b32.xlu0 %v3782, 20
      %v4255 = vpop.permute.xlu0 %4254
      %4256 = vrot.lane.b32.xlu0 %v3783, 20
      %v4257 = vpop.permute.xlu0 %4256
      %4258 = vrot.lane.b32.xlu0 %v3784, 20
      %v4259 = vpop.permute.xlu0 %4258
      %4260 = vrot.lane.b32.xlu0 %v3785, 20
      %v4261 = vpop.permute.xlu0 %4260
      %4262 = vrot.lane.b32.xlu0 %v3786, 20
      %v4263 = vpop.permute.xlu0 %4262
      %4264 = vrot.lane.b32.xlu0 %v3787, 20
      %v4265 = vpop.permute.xlu0 %4264
      %4266 = vrot.lane.b32.xlu0 %v3788, 20
      %v4267 = vpop.permute.xlu0 %4266
      %4268 = vrot.lane.b32.xlu0 %v3789, 20
      %v4269 = vpop.permute.xlu0 %4268
      %4334 = vrot.lane.b32.xlu0 %v3790, 28
      %v4335 = vpop.permute.xlu0 %4334
      %4336 = vrot.lane.b32.xlu0 %v3791, 28
      %v4337 = vpop.permute.xlu0 %4336
      %4338 = vrot.lane.b32.xlu0 %v3792, 28
      %v4339 = vpop.permute.xlu0 %4338
      %4340 = vrot.lane.b32.xlu0 %v3793, 28
      %v4341 = vpop.permute.xlu0 %4340
      %4342 = vrot.lane.b32.xlu0 %v3794, 28
      %v4343 = vpop.permute.xlu0 %4342
      %4344 = vrot.lane.b32.xlu0 %v3795, 28
      %v4345 = vpop.permute.xlu0 %4344
      %4346 = vrot.lane.b32.xlu0 %v3796, 28
      %v4347 = vpop.permute.xlu0 %4346
      %4348 = vrot.lane.b32.xlu0 %v3797, 28
      %v4349 = vpop.permute.xlu0 %4348
      %4350 = vrot.lane.b32.xlu0 %v3798, 28
      %v4351 = vpop.permute.xlu0 %4350
      %4352 = vrot.lane.b32.xlu0 %v3799, 28
      %v4353 = vpop.permute.xlu0 %4352
      %4354 = vrot.lane.b32.xlu0 %v3800, 28
      %v4355 = vpop.permute.xlu0 %4354
      %4356 = vrot.lane.b32.xlu0 %v3801, 28
      %v4357 = vpop.permute.xlu0 %4356
      %4358 = vrot.lane.b32.xlu0 %v3802, 28
      %v4359 = vpop.permute.xlu0 %4358
      %4360 = vrot.lane.b32.xlu0 %v3803, 28
      %v4361 = vpop.permute.xlu0 %4360
      %4362 = vrot.lane.b32.xlu0 %v3804, 28
      %v4363 = vpop.permute.xlu0 %4362
      %4364 = vrot.lane.b32.xlu0 %v3805, 28
      %v4365 = vpop.permute.xlu0 %4364
      %4366 = vrot.lane.b32.xlu0 %v3806, 28
      %v4367 = vpop.permute.xlu0 %4366
      %4368 = vrot.lane.b32.xlu0 %v3807, 28
      %v4369 = vpop.permute.xlu0 %4368
      %4370 = vrot.lane.b32.xlu0 %v3808, 28
      %v4371 = vpop.permute.xlu0 %4370
      %4372 = vrot.lane.b32.xlu0 %v3809, 28
      %v4373 = vpop.permute.xlu0 %4372
      %4374 = vrot.lane.b32.xlu0 %v3810, 28
      %v4375 = vpop.permute.xlu0 %4374
      %4376 = vrot.lane.b32.xlu0 %v3811, 28
      %v4377 = vpop.permute.xlu0 %4376
      %4378 = vrot.lane.b32.xlu0 %v3812, 28
      %v4379 = vpop.permute.xlu0 %4378
      %4380 = vrot.lane.b32.xlu0 %v3813, 28
      %v4381 = vpop.permute.xlu0 %4380
      %4382 = vrot.lane.b32.xlu0 %v3814, 28
      %v4383 = vpop.permute.xlu0 %4382
      %4384 = vrot.lane.b32.xlu0 %v3815, 28
      %v4385 = vpop.permute.xlu0 %4384
      %4386 = vrot.lane.b32.xlu0 %v3816, 28
      %v4387 = vpop.permute.xlu0 %4386
      %4388 = vrot.lane.b32.xlu0 %v3817, 28
      %v4389 = vpop.permute.xlu0 %4388
      %4390 = vrot.lane.b32.xlu0 %v3818, 28
      %v4391 = vpop.permute.xlu0 %4390
      %4392 = vrot.lane.b32.xlu0 %v3819, 28
      %v4393 = vpop.permute.xlu0 %4392
      %4394 = vrot.lane.b32.xlu0 %v3820, 28
      %v4395 = vpop.permute.xlu0 %4394
      %4396 = vrot.lane.b32.xlu0 %v3821, 28
      %v4397 = vpop.permute.xlu0 %4396
      %v4430 = vsel %vm308, %v3855, %v3983
      %v4431 = vsel %vm308, %v3857, %v3985
      %v4432 = vsel %vm308, %v3859, %v3987
      %v4433 = vsel %vm308, %v3861, %v3989
      %v4434 = vsel %vm308, %v3863, %v3991
      %v4435 = vsel %vm308, %v3865, %v3993
      %v4436 = vsel %vm308, %v3867, %v3995
      %v4437 = vsel %vm308, %v3869, %v3997
      %v4438 = vsel %vm308, %v3871, %v3999
      %v4439 = vsel %vm308, %v3873, %v4001
      %v4440 = vsel %vm308, %v3875, %v4003
      %v4441 = vsel %vm308, %v3877, %v4005
      %v4442 = vsel %vm308, %v3879, %v4007
      %v4443 = vsel %vm308, %v3881, %v4009
      %v4444 = vsel %vm308, %v3883, %v4011
      %v4445 = vsel %vm308, %v3885, %v4013
      %v4446 = vsel %vm308, %v3887, %v4015
      %v4447 = vsel %vm308, %v3889, %v4017
      %v4448 = vsel %vm308, %v3891, %v4019
      %v4449 = vsel %vm308, %v3893, %v4021
      %v4450 = vsel %vm308, %v3895, %v4023
      %v4451 = vsel %vm308, %v3897, %v4025
      %v4452 = vsel %vm308, %v3899, %v4027
      %v4453 = vsel %vm308, %v3901, %v4029
      %v4454 = vsel %vm308, %v3903, %v4031
      %v4455 = vsel %vm308, %v3905, %v4033
      %v4456 = vsel %vm308, %v3907, %v4035
      %v4457 = vsel %vm308, %v3909, %v4037
      %v4458 = vsel %vm308, %v3911, %v4039
      %v4459 = vsel %vm308, %v3913, %v4041
      %v4460 = vsel %vm308, %v3915, %v4043
      %v4461 = vsel %vm308, %v3917, %v4045
      %v4462 = vsel %vm1852, %v4430, %v3983
      %v4463 = vsel %vm1852, %v4431, %v3985
      %v4464 = vsel %vm1852, %v4432, %v3987
      %v4465 = vsel %vm1852, %v4433, %v3989
      %v4466 = vsel %vm1852, %v4434, %v3991
      %v4467 = vsel %vm1852, %v4435, %v3993
      %v4468 = vsel %vm1852, %v4436, %v3995
      %v4469 = vsel %vm1852, %v4437, %v3997
      %v4470 = vsel %vm1852, %v4438, %v3999
      %v4471 = vsel %vm1852, %v4439, %v4001
      %v4472 = vsel %vm1852, %v4440, %v4003
      %v4473 = vsel %vm1852, %v4441, %v4005
      %v4474 = vsel %vm1852, %v4442, %v4007
      %v4475 = vsel %vm1852, %v4443, %v4009
      %v4476 = vsel %vm1852, %v4444, %v4011
      %v4477 = vsel %vm1852, %v4445, %v4013
      %v4478 = vsel %vm1852, %v4446, %v4015
      %v4479 = vsel %vm1852, %v4447, %v4017
      %v4480 = vsel %vm1852, %v4448, %v4019
      %v4481 = vsel %vm1852, %v4449, %v4021
      %v4482 = vsel %vm1852, %v4450, %v4023
      %v4483 = vsel %vm1852, %v4451, %v4025
      %v4484 = vsel %vm1852, %v4452, %v4027
      %v4485 = vsel %vm1852, %v4453, %v4029
      %v4486 = vsel %vm1852, %v4454, %v4031
      %v4487 = vsel %vm1852, %v4455, %v4033
      %v4488 = vsel %vm1852, %v4456, %v4035
      %v4489 = vsel %vm1852, %v4457, %v4037
      %v4490 = vsel %vm1852, %v4458, %v4039
      %v4491 = vsel %vm1852, %v4459, %v4041
      %v4492 = vsel %vm1852, %v4460, %v4043
      %v4493 = vsel %vm1852, %v4461, %v4045
      %v4494 = vsel %vm1885, %v4462, %v3693
      %v4495 = vsel %vm1885, %v4463, %v3694
      %v4496 = vsel %vm1885, %v4464, %v3695
      %v4497 = vsel %vm1885, %v4465, %v3696
      %v4498 = vsel %vm1885, %v4466, %v3697
      %v4499 = vsel %vm1885, %v4467, %v3698
      %v4500 = vsel %vm1885, %v4468, %v3699
      %v4501 = vsel %vm1885, %v4469, %v3700
      %v4502 = vsel %vm1885, %v4470, %v3701
      %v4503 = vsel %vm1885, %v4471, %v3702
      %v4504 = vsel %vm1885, %v4472, %v3703
      %v4505 = vsel %vm1885, %v4473, %v3704
      %v4506 = vsel %vm1885, %v4474, %v3705
      %v4507 = vsel %vm1885, %v4475, %v3706
      %v4508 = vsel %vm1885, %v4476, %v3707
      %v4509 = vsel %vm1885, %v4477, %v3708
      %v4510 = vsel %vm1885, %v4478, %v3709
      %v4511 = vsel %vm1885, %v4479, %v3710
      %v4512 = vsel %vm1885, %v4480, %v3711
      %v4513 = vsel %vm1885, %v4481, %v3712
      %v4514 = vsel %vm1885, %v4482, %v3713
      %v4515 = vsel %vm1885, %v4483, %v3714
      %v4516 = vsel %vm1885, %v4484, %v3715
      %v4517 = vsel %vm1885, %v4485, %v3716
      %v4518 = vsel %vm1885, %v4486, %v3717
      %v4519 = vsel %vm1885, %v4487, %v3718
      %v4520 = vsel %vm1885, %v4488, %v3719
      %v4521 = vsel %vm1885, %v4489, %v3720
      %v4522 = vsel %vm1885, %v4490, %v3721
      %v4523 = vsel %vm1885, %v4491, %v3722
      %v4524 = vsel %vm1885, %v4492, %v3723
      %v4525 = vsel %vm1885, %v4493, %v3724
      %v4526 = vsel %vm702, %v4494, %v4079
      %v4527 = vsel %vm702, %v4495, %v4081
      %v4528 = vsel %vm702, %v4496, %v4083
      %v4529 = vsel %vm702, %v4497, %v4085
      %v4530 = vsel %vm702, %v4498, %v4087
      %v4531 = vsel %vm702, %v4499, %v4089
      %v4532 = vsel %vm702, %v4500, %v4091
      %v4533 = vsel %vm702, %v4501, %v4093
      %v4534 = vsel %vm702, %v4502, %v4095
      %v4535 = vsel %vm702, %v4503, %v4097
      %v4536 = vsel %vm702, %v4504, %v4099
      %v4537 = vsel %vm702, %v4505, %v4101
      %v4538 = vsel %vm702, %v4506, %v4103
      %v4539 = vsel %vm702, %v4507, %v4105
      %v4540 = vsel %vm702, %v4508, %v4107
      %v4541 = vsel %vm702, %v4509, %v4109
      %v4542 = vsel %vm702, %v4510, %v4111
      %v4543 = vsel %vm702, %v4511, %v4113
      %v4544 = vsel %vm702, %v4512, %v4115
      %v4545 = vsel %vm702, %v4513, %v4117
      %v4546 = vsel %vm702, %v4514, %v4119
      %v4547 = vsel %vm702, %v4515, %v4121
      %v4548 = vsel %vm702, %v4516, %v4123
      %v4549 = vsel %vm702, %v4517, %v4125
      %v4550 = vsel %vm702, %v4518, %v4127
      %v4551 = vsel %vm702, %v4519, %v4129
      %v4552 = vsel %vm702, %v4520, %v4131
      %v4553 = vsel %vm702, %v4521, %v4133
      %v4554 = vsel %vm702, %v4522, %v4135
      %v4555 = vsel %vm702, %v4523, %v4137
      %v4556 = vsel %vm702, %v4524, %v4139
      %v4557 = vsel %vm702, %v4525, %v4141
      %v4558 = vsel %vm1950, %v4526, %v4079
      %v4559 = vsel %vm1950, %v4527, %v4081
      %v4560 = vsel %vm1950, %v4528, %v4083
      %v4561 = vsel %vm1950, %v4529, %v4085
      %v4562 = vsel %vm1950, %v4530, %v4087
      %v4563 = vsel %vm1950, %v4531, %v4089
      %v4564 = vsel %vm1950, %v4532, %v4091
      %v4565 = vsel %vm1950, %v4533, %v4093
      %v4566 = vsel %vm1950, %v4534, %v4095
      %v4567 = vsel %vm1950, %v4535, %v4097
      %v4568 = vsel %vm1950, %v4536, %v4099
      %v4569 = vsel %vm1950, %v4537, %v4101
      %v4570 = vsel %vm1950, %v4538, %v4103
      %v4571 = vsel %vm1950, %v4539, %v4105
      %v4572 = vsel %vm1950, %v4540, %v4107
      %v4573 = vsel %vm1950, %v4541, %v4109
      %v4574 = vsel %vm1950, %v4542, %v4111
      %v4575 = vsel %vm1950, %v4543, %v4113
      %v4576 = vsel %vm1950, %v4544, %v4115
      %v4577 = vsel %vm1950, %v4545, %v4117
      %v4578 = vsel %vm1950, %v4546, %v4119
      %v4579 = vsel %vm1950, %v4547, %v4121
      %v4580 = vsel %vm1950, %v4548, %v4123
      %v4581 = vsel %vm1950, %v4549, %v4125
      %v4582 = vsel %vm1950, %v4550, %v4127
      %v4583 = vsel %vm1950, %v4551, %v4129
      %v4584 = vsel %vm1950, %v4552, %v4131
      %v4585 = vsel %vm1950, %v4553, %v4133
      %v4586 = vsel %vm1950, %v4554, %v4135
      %v4587 = vsel %vm1950, %v4555, %v4137
      %v4588 = vsel %vm1950, %v4556, %v4139
      %v4589 = vsel %vm1950, %v4557, %v4141
      %v4590 = vsel %vm1983, %v4558, %v4207
      %v4591 = vsel %vm1983, %v4559, %v4209
      %v4592 = vsel %vm1983, %v4560, %v4211
      %v4593 = vsel %vm1983, %v4561, %v4213
      %v4594 = vsel %vm1983, %v4562, %v4215
      %v4595 = vsel %vm1983, %v4563, %v4217
      %v4596 = vsel %vm1983, %v4564, %v4219
      %v4597 = vsel %vm1983, %v4565, %v4221
      %v4598 = vsel %vm1983, %v4566, %v4223
      %v4599 = vsel %vm1983, %v4567, %v4225
      %v4600 = vsel %vm1983, %v4568, %v4227
      %v4601 = vsel %vm1983, %v4569, %v4229
      %v4602 = vsel %vm1983, %v4570, %v4231
      %v4603 = vsel %vm1983, %v4571, %v4233
      %v4604 = vsel %vm1983, %v4572, %v4235
      %v4605 = vsel %vm1983, %v4573, %v4237
      %v4606 = vsel %vm1983, %v4574, %v4239
      %v4607 = vsel %vm1983, %v4575, %v4241
      %v4608 = vsel %vm1983, %v4576, %v4243
      %v4609 = vsel %vm1983, %v4577, %v4245
      %v4610 = vsel %vm1983, %v4578, %v4247
      %v4611 = vsel %vm1983, %v4579, %v4249
      %v4612 = vsel %vm1983, %v4580, %v4251
      %v4613 = vsel %vm1983, %v4581, %v4253
      %v4614 = vsel %vm1983, %v4582, %v4255
      %v4615 = vsel %vm1983, %v4583, %v4257
      %v4616 = vsel %vm1983, %v4584, %v4259
      %v4617 = vsel %vm1983, %v4585, %v4261
      %v4618 = vsel %vm1983, %v4586, %v4263
      %v4619 = vsel %vm1983, %v4587, %v4265
      %v4620 = vsel %vm1983, %v4588, %v4267
      %v4621 = vsel %vm1983, %v4589, %v4269
      %v4622 = vsel %vm2016, %v4590, %v4335
      %v4623 = vsel %vm2016, %v4591, %v4337
      %v4624 = vsel %vm2016, %v4592, %v4339
      %v4625 = vsel %vm2016, %v4593, %v4341
      %v4626 = vsel %vm2016, %v4594, %v4343
      %v4627 = vsel %vm2016, %v4595, %v4345
      %v4628 = vsel %vm2016, %v4596, %v4347
      %v4629 = vsel %vm2016, %v4597, %v4349
      %v4630 = vsel %vm2016, %v4598, %v4351
      %v4631 = vsel %vm2016, %v4599, %v4353
      %v4632 = vsel %vm2016, %v4600, %v4355
      %v4633 = vsel %vm2016, %v4601, %v4357
      %v4634 = vsel %vm2016, %v4602, %v4359
      %v4635 = vsel %vm2016, %v4603, %v4361
      %v4636 = vsel %vm2016, %v4604, %v4363
      %v4637 = vsel %vm2016, %v4605, %v4365
      %v4638 = vsel %vm2016, %v4606, %v4367
      %v4639 = vsel %vm2016, %v4607, %v4369
      %v4640 = vsel %vm2016, %v4608, %v4371
      %v4641 = vsel %vm2016, %v4609, %v4373
      %v4642 = vsel %vm2016, %v4610, %v4375
      %v4643 = vsel %vm2016, %v4611, %v4377
      %v4644 = vsel %vm2016, %v4612, %v4379
      %v4645 = vsel %vm2016, %v4613, %v4381
      %v4646 = vsel %vm2016, %v4614, %v4383
      %v4647 = vsel %vm2016, %v4615, %v4385
      %v4648 = vsel %vm2016, %v4616, %v4387
      %v4649 = vsel %vm2016, %v4617, %v4389
      %v4650 = vsel %vm2016, %v4618, %v4391
      %v4651 = vsel %vm2016, %v4619, %v4393
      %v4652 = vsel %vm2016, %v4620, %v4395
      %v4653 = vsel %vm2016, %v4621, %v4397
      %v4654 = vsel %vm2049, %v4622, %v4335
      %v4655 = vsel %vm2049, %v4623, %v4337
      %v4656 = vsel %vm2049, %v4624, %v4339
      %v4657 = vsel %vm2049, %v4625, %v4341
      %v4658 = vsel %vm2049, %v4626, %v4343
      %v4659 = vsel %vm2049, %v4627, %v4345
      %v4660 = vsel %vm2049, %v4628, %v4347
      %v4661 = vsel %vm2049, %v4629, %v4349
      %v4662 = vsel %vm2049, %v4630, %v4351
      %v4663 = vsel %vm2049, %v4631, %v4353
      %v4664 = vsel %vm2049, %v4632, %v4355
      %v4665 = vsel %vm2049, %v4633, %v4357
      %v4666 = vsel %vm2049, %v4634, %v4359
      %v4667 = vsel %vm2049, %v4635, %v4361
      %v4668 = vsel %vm2049, %v4636, %v4363
      %v4669 = vsel %vm2049, %v4637, %v4365
      %v4670 = vsel %vm2049, %v4638, %v4367
      %v4671 = vsel %vm2049, %v4639, %v4369
      %v4672 = vsel %vm2049, %v4640, %v4371
      %v4673 = vsel %vm2049, %v4641, %v4373
      %v4674 = vsel %vm2049, %v4642, %v4375
      %v4675 = vsel %vm2049, %v4643, %v4377
      %v4676 = vsel %vm2049, %v4644, %v4379
      %v4677 = vsel %vm2049, %v4645, %v4381
      %v4678 = vsel %vm2049, %v4646, %v4383
      %v4679 = vsel %vm2049, %v4647, %v4385
      %v4680 = vsel %vm2049, %v4648, %v4387
      %v4681 = vsel %vm2049, %v4649, %v4389
      %v4682 = vsel %vm2049, %v4650, %v4391
      %v4683 = vsel %vm2049, %v4651, %v4393
      %v4684 = vsel %vm2049, %v4652, %v4395
      %v4685 = vsel %vm2049, %v4653, %v4397
      %v4686 = vld [vmem:[%s3] sm:$0xff]
      %v4687 = vld [vmem:[%s3 + $0x8] sm:$0xff]
      %v4688 = vld [vmem:[%s3 + $0x10] sm:$0xff]
      %v4689 = vld [vmem:[%s3 + $0x18] sm:$0xff]
      %v4690 = vld [vmem:[%s3 + $0x20] sm:$0xf]
      %v4692 = vsel %vm2087, %v4654, 0
      %v4695 = vsel %vm2087, %v4655, 0
      %v4698 = vsel %vm2087, %v4656, 0
      %v4701 = vsel %vm2087, %v4657, 0
      %v4704 = vsel %vm2087, %v4658, 0
      %v4707 = vsel %vm2087, %v4659, 0
      %v4710 = vsel %vm2087, %v4660, 0
      %v4713 = vsel %vm2087, %v4661, 0
      %v4716 = vsel %vm2087, %v4662, 0
      %v4719 = vsel %vm2087, %v4663, 0
      %v4722 = vsel %vm2087, %v4664, 0
      %v4725 = vsel %vm2087, %v4665, 0
      %v4728 = vsel %vm2087, %v4666, 0
      %v4731 = vsel %vm2087, %v4667, 0
      %v4734 = vsel %vm2087, %v4668, 0
      %v4737 = vsel %vm2087, %v4669, 0
      %v4740 = vsel %vm2087, %v4670, 0
      %v4743 = vsel %vm2087, %v4671, 0
      %v4746 = vsel %vm2087, %v4672, 0
      %v4749 = vsel %vm2087, %v4673, 0
      %v4752 = vsel %vm2087, %v4674, 0
      %v4755 = vsel %vm2087, %v4675, 0
      %v4758 = vsel %vm2087, %v4676, 0
      %v4761 = vsel %vm2087, %v4677, 0
      %v4764 = vsel %vm2087, %v4678, 0
      %v4767 = vsel %vm2087, %v4679, 0
      %v4770 = vsel %vm2087, %v4680, 0
      %v4773 = vsel %vm2087, %v4681, 0
      %v4776 = vsel %vm2087, %v4682, 0
      %v4779 = vsel %vm2087, %v4683, 0
      %v4782 = vsel %vm2087, %v4684, 0
      %v4785 = vsel %vm2087, %v4685, 0
      %v4788 = vsel %vm417, %v4690, 0
      %4790 = vmatprep.subr.mxu0 0.0
      %4791 = vmatpush1.msra.mxu0 %v4686
      %4792 = vmatprep.subr.mxu0 0.0
      %4793 = vmatpush1.msra.mxu0 %v4687
      %4794 = vmatprep.subr.mxu0 0.0
      %4795 = vmatpush1.msra.mxu0 %v4688
      %4796 = vmatprep.subr.mxu0 0.0
      %4797 = vmatpush1.msra.mxu0 %v4689
      %4798 = vmatprep.subr.mxu0 0.0
      %4799 = vmatpush1.msra.mxu0 %v4788
      %4800 = vmatprep.subr.mxu0 0.0
      %4801 = vmatpush1.msra.mxu0 0.0
      %4802 = vmatprep.subr.mxu0 0.0
      %4803 = vmatpush1.msra.mxu0 0.0
      %4804 = vmatprep.subr.mxu0 0.0
      %4805 = vmatpush1.msra.mxu0 0.0
      %4806 = vmatprep.subr.mxu0 0.0
      %4807 = vmatpush1.msra.mxu0 0.0
      %4808 = vmatprep.subr.mxu0 0.0
      %4809 = vmatpush1.msra.mxu0 0.0
      %4810 = vmatprep.subr.mxu0 0.0
      %4811 = vmatpush1.msra.mxu0 0.0
      %4812 = vmatprep.subr.mxu0 0.0
      %4813 = vmatpush1.msra.mxu0 0.0
      %4814 = vmatprep.subr.mxu0 0.0
      %4815 = vmatpush1.msra.mxu0 0.0
      %4816 = vmatprep.subr.mxu0 0.0
      %4817 = vmatpush1.msra.mxu0 0.0
      %4818 = vmatprep.subr.mxu0 0.0
      %4819 = vmatpush1.msra.mxu0 0.0
      %4820 = vmatprep.subr.mxu0 0.0
      %4821 = vmatpush1.msra.mxu0 0.0
      %4822 = vmatprep.subr.mxu0 0.0
      %4823 = vmatpush1.msra.mxu0 0.0
      %4824 = vmatprep.subr.mxu0 0.0
      %4825 = vmatpush1.msra.mxu0 0.0
      %4826 = vmatprep.subr.mxu0 0.0
      %4827 = vmatpush1.msra.mxu0 0.0
      %4828 = vmatprep.subr.mxu0 0.0
      %4829 = vmatpush1.msra.mxu0 0.0
      %4830 = vmatprep.subr.mxu0 0.0
      %4831 = vmatpush1.msra.mxu0 0.0
      %4832 = vmatprep.subr.mxu0 0.0
      %4833 = vmatpush1.msra.mxu0 0.0
      %4834 = vmatprep.subr.mxu0 0.0
      %4835 = vmatpush1.msra.mxu0 0.0
      %4836 = vmatprep.subr.mxu0 0.0
      %4837 = vmatpush1.msra.mxu0 0.0
      %4838 = vmatprep.subr.mxu0 0.0
      %4839 = vmatpush1.msra.mxu0 0.0
      %4840 = vmatprep.subr.mxu0 0.0
      %4841 = vmatpush1.msra.mxu0 0.0
      %4842 = vmatprep.subr.mxu0 0.0
      %4843 = vmatpush1.msra.mxu0 0.0
      %4844 = vmatprep.subr.mxu0 0.0
      %4845 = vmatpush1.msra.mxu0 0.0
      %4846 = vmatprep.subr.mxu0 0.0
      %4847 = vmatpush1.msra.mxu0 0.0
      %4848 = vmatprep.subr.mxu0 0.0
      %4849 = vmatpush1.msra.mxu0 0.0
      %4850 = vmatprep.subr.mxu0 0.0
      %4851 = vmatpush1.msra.mxu0 0.0
      %4852 = vmatprep.subr.mxu0 0.0
      %4853 = vmatpush1.msra.mxu0 0.0
      %4854 = vmatprep.mubr.f32.mxu0 0.0
      %4855 = vmatmul.mubr.f32.gmra.mrb[0].mxu0 %v4692
      %v4856 = vpop.f32.mrb[0].mxu0
      %v4857 = vadd.f32 0.0, %v4856
      %v4858 = vpop.f32.mrb[0].mxu0
      %4859 = vmatprep.mubr.f32.mxu0 0.0
      %4860 = vmatmul.mubr.f32.gmra.mrb[0].mxu0 %v4695
      %v4861 = vpop.f32.mrb[0].mxu0
      %v4862 = vadd.f32 0.0, %v4861
      %v4863 = vpop.f32.mrb[0].mxu0
      %4864 = vmatprep.mubr.f32.mxu0 0.0
      %4865 = vmatmul.mubr.f32.gmra.mrb[0].mxu0 %v4698
      %v4866 = vpop.f32.mrb[0].mxu0
      %v4867 = vadd.f32 0.0, %v4866
      %v4868 = vpop.f32.mrb[0].mxu0
      %4869 = vmatprep.mubr.f32.mxu0 0.0
      %4870 = vmatmul.mubr.f32.gmra.mrb[0].mxu0 %v4701
      %v4871 = vpop.f32.mrb[0].mxu0
      %v4872 = vadd.f32 0.0, %v4871
      %v4873 = vpop.f32.mrb[0].mxu0
      %4874 = vmatprep.mubr.f32.mxu0 0.0
      %4875 = vmatmul.mubr.f32.gmra.mrb[0].mxu0 %v4704
      %v4876 = vpop.f32.mrb[0].mxu0
      %v4877 = vadd.f32 0.0, %v4876
      %v4878 = vpop.f32.mrb[0].mxu0
      %4879 = vmatprep.mubr.f32.mxu0 0.0
      %4880 = vmatmul.mubr.f32.gmra.mrb[0].mxu0 %v4707
      %v4881 = vpop.f32.mrb[0].mxu0
      %v4882 = vadd.f32 0.0, %v4881
      %v4883 = vpop.f32.mrb[0].mxu0
      %4884 = vmatprep.mubr.f32.mxu0 0.0
      %4885 = vmatmul.mubr.f32.gmra.mrb[0].mxu0 %v4710
      %v4886 = vpop.f32.mrb[0].mxu0
      %v4887 = vadd.f32 0.0, %v4886
      %v4888 = vpop.f32.mrb[0].mxu0
      %4889 = vmatprep.mubr.f32.mxu0 0.0
      %4890 = vmatmul.mubr.f32.gmra.mrb[0].mxu0 %v4713
      %v4891 = vpop.f32.mrb[0].mxu0
      %v4892 = vadd.f32 0.0, %v4891
      %v4893 = vpop.f32.mrb[0].mxu0
      %4894 = vmatprep.mubr.f32.mxu0 0.0
      %4895 = vmatmul.mubr.f32.gmra.mrb[0].mxu0 %v4716
      %v4896 = vpop.f32.mrb[0].mxu0
      %v4897 = vadd.f32 0.0, %v4896
      %v4898 = vpop.f32.mrb[0].mxu0
      %4899 = vmatprep.mubr.f32.mxu0 0.0
      %4900 = vmatmul.mubr.f32.gmra.mrb[0].mxu0 %v4719
      %v4901 = vpop.f32.mrb[0].mxu0
      %v4902 = vadd.f32 0.0, %v4901
      %v4903 = vpop.f32.mrb[0].mxu0
      %4904 = vmatprep.mubr.f32.mxu0 0.0
      %4905 = vmatmul.mubr.f32.gmra.mrb[0].mxu0 %v4722
      %v4906 = vpop.f32.mrb[0].mxu0
      %v4907 = vadd.f32 0.0, %v4906
      %v4908 = vpop.f32.mrb[0].mxu0
      %4909 = vmatprep.mubr.f32.mxu0 0.0
      %4910 = vmatmul.mubr.f32.gmra.mrb[0].mxu0 %v4725
      %v4911 = vpop.f32.mrb[0].mxu0
      %v4912 = vadd.f32 0.0, %v4911
      %v4913 = vpop.f32.mrb[0].mxu0
      %4914 = vmatprep.mubr.f32.mxu0 0.0
      %4915 = vmatmul.mubr.f32.gmra.mrb[0].mxu0 %v4728
      %v4916 = vpop.f32.mrb[0].mxu0
      %v4917 = vadd.f32 0.0, %v4916
      %v4918 = vpop.f32.mrb[0].mxu0
      %4919 = vmatprep.mubr.f32.mxu0 0.0
      %4920 = vmatmul.mubr.f32.gmra.mrb[0].mxu0 %v4731
      %v4921 = vpop.f32.mrb[0].mxu0
      %v4922 = vadd.f32 0.0, %v4921
      %v4923 = vpop.f32.mrb[0].mxu0
      %4924 = vmatprep.mubr.f32.mxu0 0.0
      %4925 = vmatmul.mubr.f32.gmra.mrb[0].mxu0 %v4734
      %v4926 = vpop.f32.mrb[0].mxu0
      %v4927 = vadd.f32 0.0, %v4926
      %v4928 = vpop.f32.mrb[0].mxu0
      %4929 = vmatprep.mubr.f32.mxu0 0.0
      %4930 = vmatmul.mubr.f32.gmra.mrb[0].mxu0 %v4737
      %v4931 = vpop.f32.mrb[0].mxu0
      %v4932 = vadd.f32 0.0, %v4931
      %v4933 = vpop.f32.mrb[0].mxu0
      %4934 = vmatprep.mubr.f32.mxu0 0.0
      %4935 = vmatmul.mubr.f32.gmra.mrb[0].mxu0 %v4740
      %v4936 = vpop.f32.mrb[0].mxu0
      %v4937 = vadd.f32 0.0, %v4936
      %v4938 = vpop.f32.mrb[0].mxu0
      %4939 = vmatprep.mubr.f32.mxu0 0.0
      %4940 = vmatmul.mubr.f32.gmra.mrb[0].mxu0 %v4743
      %v4941 = vpop.f32.mrb[0].mxu0
      %v4942 = vadd.f32 0.0, %v4941
      %v4943 = vpop.f32.mrb[0].mxu0
      %4944 = vmatprep.mubr.f32.mxu0 0.0
      %4945 = vmatmul.mubr.f32.gmra.mrb[0].mxu0 %v4746
      %v4946 = vpop.f32.mrb[0].mxu0
      %v4947 = vadd.f32 0.0, %v4946
      %v4948 = vpop.f32.mrb[0].mxu0
      %4949 = vmatprep.mubr.f32.mxu0 0.0
      %4950 = vmatmul.mubr.f32.gmra.mrb[0].mxu0 %v4749
      %v4951 = vpop.f32.mrb[0].mxu0
      %v4952 = vadd.f32 0.0, %v4951
      %v4953 = vpop.f32.mrb[0].mxu0
      %4954 = vmatprep.mubr.f32.mxu0 0.0
      %4955 = vmatmul.mubr.f32.gmra.mrb[0].mxu0 %v4752
      %v4956 = vpop.f32.mrb[0].mxu0
      %v4957 = vadd.f32 0.0, %v4956
      %v4958 = vpop.f32.mrb[0].mxu0
      %4959 = vmatprep.mubr.f32.mxu0 0.0
      %4960 = vmatmul.mubr.f32.gmra.mrb[0].mxu0 %v4755
      %v4961 = vpop.f32.mrb[0].mxu0
      %v4962 = vadd.f32 0.0, %v4961
      %v4963 = vpop.f32.mrb[0].mxu0
      %4964 = vmatprep.mubr.f32.mxu0 0.0
      %4965 = vmatmul.mubr.f32.gmra.mrb[0].mxu0 %v4758
      %v4966 = vpop.f32.mrb[0].mxu0
      %v4967 = vadd.f32 0.0, %v4966
      %v4968 = vpop.f32.mrb[0].mxu0
      %4969 = vmatprep.mubr.f32.mxu0 0.0
      %4970 = vmatmul.mubr.f32.gmra.mrb[0].mxu0 %v4761
      %v4971 = vpop.f32.mrb[0].mxu0
      %v4972 = vadd.f32 0.0, %v4971
      %v4973 = vpop.f32.mrb[0].mxu0
      %4974 = vmatprep.mubr.f32.mxu0 0.0
      %4975 = vmatmul.mubr.f32.gmra.mrb[0].mxu0 %v4764
      %v4976 = vpop.f32.mrb[0].mxu0
      %v4977 = vadd.f32 0.0, %v4976
      %v4978 = vpop.f32.mrb[0].mxu0
      %4979 = vmatprep.mubr.f32.mxu0 0.0
      %4980 = vmatmul.mubr.f32.gmra.mrb[0].mxu0 %v4767
      %v4981 = vpop.f32.mrb[0].mxu0
      %v4982 = vadd.f32 0.0, %v4981
      %v4983 = vpop.f32.mrb[0].mxu0
      %4984 = vmatprep.mubr.f32.mxu0 0.0
      %4985 = vmatmul.mubr.f32.gmra.mrb[0].mxu0 %v4770
      %v4986 = vpop.f32.mrb[0].mxu0
      %v4987 = vadd.f32 0.0, %v4986
      %v4988 = vpop.f32.mrb[0].mxu0
      %4989 = vmatprep.mubr.f32.mxu0 0.0
      %4990 = vmatmul.mubr.f32.gmra.mrb[0].mxu0 %v4773
      %v4991 = vpop.f32.mrb[0].mxu0
      %v4992 = vadd.f32 0.0, %v4991
      %v4993 = vpop.f32.mrb[0].mxu0
      %4994 = vmatprep.mubr.f32.mxu0 0.0
      %4995 = vmatmul.mubr.f32.gmra.mrb[0].mxu0 %v4776
      %v4996 = vpop.f32.mrb[0].mxu0
      %v4997 = vadd.f32 0.0, %v4996
      %v4998 = vpop.f32.mrb[0].mxu0
      %4999 = vmatprep.mubr.f32.mxu0 0.0
      %5000 = vmatmul.mubr.f32.gmra.mrb[0].mxu0 %v4779
      %v5001 = vpop.f32.mrb[0].mxu0
      %v5002 = vadd.f32 0.0, %v5001
      %v5003 = vpop.f32.mrb[0].mxu0
      %5004 = vmatprep.mubr.f32.mxu0 0.0
      %5005 = vmatmul.mubr.f32.gmra.mrb[0].mxu0 %v4782
      %v5006 = vpop.f32.mrb[0].mxu0
      %v5007 = vadd.f32 0.0, %v5006
      %v5008 = vpop.f32.mrb[0].mxu0
      %5009 = vmatprep.mubr.f32.mxu0 0.0
      %5010 = vmatmul.mubr.f32.gmra.mrb[0].mxu0 %v4785
      %v5011 = vpop.f32.mrb[0].mxu0
      %v5012 = vadd.f32 0.0, %v5011
      %v5013 = vpop.f32.mrb[0].mxu0
      %5014 = vdwg.mxu0
      %v5015 = vld [vmem:[%s1051 + $0x2] sm:$0xff]
      %v5016 = vld [vmem:[%s1051 + $0xa] sm:$0xff]
      %v5017 = vld [vmem:[%s1051 + $0x1a] sm:$0xff]
      %v5018 = vld [vmem:[%s1051 + $0x22] sm:$0xff]
      %v5019 = vld [vmem:[%s1051 + $0x32] sm:$0xff]
      %v5020 = vld [vmem:[%s1051 + $0x3a] sm:$0xff]
      %v5021 = vld [vmem:[%s1051 + $0x4a] sm:$0xff]
      %v5022 = vld [vmem:[%s1051 + $0x52] sm:$0xff]
      %v5023 = vld [vmem:[%s1051 + $0x62] sm:$0xff]
      %v5024 = vld [vmem:[%s1051 + $0x6a] sm:$0xff]
      %v5025 = vld [vmem:[%s1051 + $0x7a] sm:$0xff]
      %v5026 = vld [vmem:[%s1051 + $0x82] sm:$0xff]
      %v5027 = vld [vmem:[%s1051 + $0x92] sm:$0xff]
      %v5028 = vld [vmem:[%s1051 + $0x9a] sm:$0xff]
      %v5029 = vld [vmem:[%s1051 + $0xaa] sm:$0xff]
      %v5030 = vld [vmem:[%s1051 + $0xb2] sm:$0xff]
      %v5031 = vld [vmem:[%s1051 + $0xc2] sm:$0xff]
      %v5032 = vld [vmem:[%s1051 + $0xca] sm:$0xff]
      %v5033 = vld [vmem:[%s1051 + $0xda] sm:$0xff]
      %v5034 = vld [vmem:[%s1051 + $0xe2] sm:$0xff]
      %v5035 = vld [vmem:[%s1051 + $0xf2] sm:$0xff]
      %v5036 = vld [vmem:[%s1051 + $0xfa] sm:$0xff]
      %v5037 = vld [vmem:[%s1051 + $0x10a] sm:$0xff]
      %v5038 = vld [vmem:[%s1051 + $0x112] sm:$0xff]
      %v5039 = vld [vmem:[%s1051 + $0x122] sm:$0xff]
      %v5040 = vld [vmem:[%s1051 + $0x12a] sm:$0xff]
      %v5041 = vld [vmem:[%s1051 + $0x13a] sm:$0xff]
      %v5042 = vld [vmem:[%s1051 + $0x142] sm:$0xff]
      %v5043 = vld [vmem:[%s1051 + $0x152] sm:$0xff]
      %v5044 = vld [vmem:[%s1051 + $0x15a] sm:$0xff]
      %v5045 = vld [vmem:[%s1051 + $0x16a] sm:$0xff]
      %v5046 = vld [vmem:[%s1051 + $0x172] sm:$0xff]
      %v5047 = vld [vmem:[%s3757 + $0x2] sm:$0xff]
      %v5048 = vld [vmem:[%s3757 + $0xa] sm:$0xff]
      %v5049 = vld [vmem:[%s3757 + $0x1a] sm:$0xff]
      %v5050 = vld [vmem:[%s3757 + $0x22] sm:$0xff]
      %v5051 = vld [vmem:[%s3757 + $0x32] sm:$0xff]
      %v5052 = vld [vmem:[%s3757 + $0x3a] sm:$0xff]
      %v5053 = vld [vmem:[%s3757 + $0x4a] sm:$0xff]
      %v5054 = vld [vmem:[%s3757 + $0x52] sm:$0xff]
      %v5055 = vld [vmem:[%s3757 + $0x62] sm:$0xff]
      %v5056 = vld [vmem:[%s3757 + $0x6a] sm:$0xff]
      %v5057 = vld [vmem:[%s3757 + $0x7a] sm:$0xff]
      %v5058 = vld [vmem:[%s3757 + $0x82] sm:$0xff]
      %v5059 = vld [vmem:[%s3757 + $0x92] sm:$0xff]
      %v5060 = vld [vmem:[%s3757 + $0x9a] sm:$0xff]
      %v5061 = vld [vmem:[%s3757 + $0xaa] sm:$0xff]
      %v5062 = vld [vmem:[%s3757 + $0xb2] sm:$0xff]
      %v5063 = vld [vmem:[%s3757 + $0xc2] sm:$0xff]
      %v5064 = vld [vmem:[%s3757 + $0xca] sm:$0xff]
      %v5065 = vld [vmem:[%s3757 + $0xda] sm:$0xff]
      %v5066 = vld [vmem:[%s3757 + $0xe2] sm:$0xff]
      %v5067 = vld [vmem:[%s3757 + $0xf2] sm:$0xff]
      %v5068 = vld [vmem:[%s3757 + $0xfa] sm:$0xff]
      %v5069 = vld [vmem:[%s3757 + $0x10a] sm:$0xff]
      %v5070 = vld [vmem:[%s3757 + $0x112] sm:$0xff]
      %v5071 = vld [vmem:[%s3757 + $0x122] sm:$0xff]
      %v5072 = vld [vmem:[%s3757 + $0x12a] sm:$0xff]
      %v5073 = vld [vmem:[%s3757 + $0x13a] sm:$0xff]
      %v5074 = vld [vmem:[%s3757 + $0x142] sm:$0xff]
      %v5075 = vld [vmem:[%s3757 + $0x152] sm:$0xff]
      %v5076 = vld [vmem:[%s3757 + $0x15a] sm:$0xff]
      %v5077 = vld [vmem:[%s3757 + $0x16a] sm:$0xff]
      %v5078 = vld [vmem:[%s3757 + $0x172] sm:$0xff]
      %5111 = vrot.lane.b32.xlu0 %v5015, 8
      %v5112 = vpop.permute.xlu0 %5111
      %5113 = vrot.lane.b32.xlu0 %v5016, 8
      %v5114 = vpop.permute.xlu0 %5113
      %5115 = vrot.lane.b32.xlu0 %v5017, 8
      %v5116 = vpop.permute.xlu0 %5115
      %5117 = vrot.lane.b32.xlu0 %v5018, 8
      %v5118 = vpop.permute.xlu0 %5117
      %5119 = vrot.lane.b32.xlu0 %v5019, 8
      %v5120 = vpop.permute.xlu0 %5119
      %5121 = vrot.lane.b32.xlu0 %v5020, 8
      %v5122 = vpop.permute.xlu0 %5121
      %5123 = vrot.lane.b32.xlu0 %v5021, 8
      %v5124 = vpop.permute.xlu0 %5123
      %5125 = vrot.lane.b32.xlu0 %v5022, 8
      %v5126 = vpop.permute.xlu0 %5125
      %5127 = vrot.lane.b32.xlu0 %v5023, 8
      %v5128 = vpop.permute.xlu0 %5127
      %5129 = vrot.lane.b32.xlu0 %v5024, 8
      %v5130 = vpop.permute.xlu0 %5129
      %5131 = vrot.lane.b32.xlu0 %v5025, 8
      %v5132 = vpop.permute.xlu0 %5131
      %5133 = vrot.lane.b32.xlu0 %v5026, 8
      %v5134 = vpop.permute.xlu0 %5133
      %5135 = vrot.lane.b32.xlu0 %v5027, 8
      %v5136 = vpop.permute.xlu0 %5135
      %5137 = vrot.lane.b32.xlu0 %v5028, 8
      %v5138 = vpop.permute.xlu0 %5137
      %5139 = vrot.lane.b32.xlu0 %v5029, 8
      %v5140 = vpop.permute.xlu0 %5139
      %5141 = vrot.lane.b32.xlu0 %v5030, 8
      %v5142 = vpop.permute.xlu0 %5141
      %5143 = vrot.lane.b32.xlu0 %v5031, 8
      %v5144 = vpop.permute.xlu0 %5143
      %5145 = vrot.lane.b32.xlu0 %v5032, 8
      %v5146 = vpop.permute.xlu0 %5145
      %5147 = vrot.lane.b32.xlu0 %v5033, 8
      %v5148 = vpop.permute.xlu0 %5147
      %5149 = vrot.lane.b32.xlu0 %v5034, 8
      %v5150 = vpop.permute.xlu0 %5149
      %5151 = vrot.lane.b32.xlu0 %v5035, 8
      %v5152 = vpop.permute.xlu0 %5151
      %5153 = vrot.lane.b32.xlu0 %v5036, 8
      %v5154 = vpop.permute.xlu0 %5153
      %5155 = vrot.lane.b32.xlu0 %v5037, 8
      %v5156 = vpop.permute.xlu0 %5155
      %5157 = vrot.lane.b32.xlu0 %v5038, 8
      %v5158 = vpop.permute.xlu0 %5157
      %5159 = vrot.lane.b32.xlu0 %v5039, 8
      %v5160 = vpop.permute.xlu0 %5159
      %5161 = vrot.lane.b32.xlu0 %v5040, 8
      %v5162 = vpop.permute.xlu0 %5161
      %5163 = vrot.lane.b32.xlu0 %v5041, 8
      %v5164 = vpop.permute.xlu0 %5163
      %5165 = vrot.lane.b32.xlu0 %v5042, 8
      %v5166 = vpop.permute.xlu0 %5165
      %5167 = vrot.lane.b32.xlu0 %v5043, 8
      %v5168 = vpop.permute.xlu0 %5167
      %5169 = vrot.lane.b32.xlu0 %v5044, 8
      %v5170 = vpop.permute.xlu0 %5169
      %5171 = vrot.lane.b32.xlu0 %v5045, 8
      %v5172 = vpop.permute.xlu0 %5171
      %5173 = vrot.lane.b32.xlu0 %v5046, 8
      %v5174 = vpop.permute.xlu0 %5173
      %5207 = vrot.lane.b32.xlu0 %v5015, 12
      %v5208 = vpop.permute.xlu0 %5207
      %5209 = vrot.lane.b32.xlu0 %v5016, 12
      %v5210 = vpop.permute.xlu0 %5209
      %5211 = vrot.lane.b32.xlu0 %v5017, 12
      %v5212 = vpop.permute.xlu0 %5211
      %5213 = vrot.lane.b32.xlu0 %v5018, 12
      %v5214 = vpop.permute.xlu0 %5213
      %5215 = vrot.lane.b32.xlu0 %v5019, 12
      %v5216 = vpop.permute.xlu0 %5215
      %5217 = vrot.lane.b32.xlu0 %v5020, 12
      %v5218 = vpop.permute.xlu0 %5217
      %5219 = vrot.lane.b32.xlu0 %v5021, 12
      %v5220 = vpop.permute.xlu0 %5219
      %5221 = vrot.lane.b32.xlu0 %v5022, 12
      %v5222 = vpop.permute.xlu0 %5221
      %5223 = vrot.lane.b32.xlu0 %v5023, 12
      %v5224 = vpop.permute.xlu0 %5223
      %5225 = vrot.lane.b32.xlu0 %v5024, 12
      %v5226 = vpop.permute.xlu0 %5225
      %5227 = vrot.lane.b32.xlu0 %v5025, 12
      %v5228 = vpop.permute.xlu0 %5227
      %5229 = vrot.lane.b32.xlu0 %v5026, 12
      %v5230 = vpop.permute.xlu0 %5229
      %5231 = vrot.lane.b32.xlu0 %v5027, 12
      %v5232 = vpop.permute.xlu0 %5231
      %5233 = vrot.lane.b32.xlu0 %v5028, 12
      %v5234 = vpop.permute.xlu0 %5233
      %5235 = vrot.lane.b32.xlu0 %v5029, 12
      %v5236 = vpop.permute.xlu0 %5235
      %5237 = vrot.lane.b32.xlu0 %v5030, 12
      %v5238 = vpop.permute.xlu0 %5237
      %5239 = vrot.lane.b32.xlu0 %v5031, 12
      %v5240 = vpop.permute.xlu0 %5239
      %5241 = vrot.lane.b32.xlu0 %v5032, 12
      %v5242 = vpop.permute.xlu0 %5241
      %5243 = vrot.lane.b32.xlu0 %v5033, 12
      %v5244 = vpop.permute.xlu0 %5243
      %5245 = vrot.lane.b32.xlu0 %v5034, 12
      %v5246 = vpop.permute.xlu0 %5245
      %5247 = vrot.lane.b32.xlu0 %v5035, 12
      %v5248 = vpop.permute.xlu0 %5247
      %5249 = vrot.lane.b32.xlu0 %v5036, 12
      %v5250 = vpop.permute.xlu0 %5249
      %5251 = vrot.lane.b32.xlu0 %v5037, 12
      %v5252 = vpop.permute.xlu0 %5251
      %5253 = vrot.lane.b32.xlu0 %v5038, 12
      %v5254 = vpop.permute.xlu0 %5253
      %5255 = vrot.lane.b32.xlu0 %v5039, 12
      %v5256 = vpop.permute.xlu0 %5255
      %5257 = vrot.lane.b32.xlu0 %v5040, 12
      %v5258 = vpop.permute.xlu0 %5257
      %5259 = vrot.lane.b32.xlu0 %v5041, 12
      %v5260 = vpop.permute.xlu0 %5259
      %5261 = vrot.lane.b32.xlu0 %v5042, 12
      %v5262 = vpop.permute.xlu0 %5261
      %5263 = vrot.lane.b32.xlu0 %v5043, 12
      %v5264 = vpop.permute.xlu0 %5263
      %5265 = vrot.lane.b32.xlu0 %v5044, 12
      %v5266 = vpop.permute.xlu0 %5265
      %5267 = vrot.lane.b32.xlu0 %v5045, 12
      %v5268 = vpop.permute.xlu0 %5267
      %5269 = vrot.lane.b32.xlu0 %v5046, 12
      %v5270 = vpop.permute.xlu0 %5269
      %5303 = vrot.lane.b32.xlu0 %v3790, 24
      %v5304 = vpop.permute.xlu0 %5303
      %5305 = vrot.lane.b32.xlu0 %v3791, 24
      %v5306 = vpop.permute.xlu0 %5305
      %5307 = vrot.lane.b32.xlu0 %v3792, 24
      %v5308 = vpop.permute.xlu0 %5307
      %5309 = vrot.lane.b32.xlu0 %v3793, 24
      %v5310 = vpop.permute.xlu0 %5309
      %5311 = vrot.lane.b32.xlu0 %v3794, 24
      %v5312 = vpop.permute.xlu0 %5311
      %5313 = vrot.lane.b32.xlu0 %v3795, 24
      %v5314 = vpop.permute.xlu0 %5313
      %5315 = vrot.lane.b32.xlu0 %v3796, 24
      %v5316 = vpop.permute.xlu0 %5315
      %5317 = vrot.lane.b32.xlu0 %v3797, 24
      %v5318 = vpop.permute.xlu0 %5317
      %5319 = vrot.lane.b32.xlu0 %v3798, 24
      %v5320 = vpop.permute.xlu0 %5319
      %5321 = vrot.lane.b32.xlu0 %v3799, 24
      %v5322 = vpop.permute.xlu0 %5321
      %5323 = vrot.lane.b32.xlu0 %v3800, 24
      %v5324 = vpop.permute.xlu0 %5323
      %5325 = vrot.lane.b32.xlu0 %v3801, 24
      %v5326 = vpop.permute.xlu0 %5325
      %5327 = vrot.lane.b32.xlu0 %v3802, 24
      %v5328 = vpop.permute.xlu0 %5327
      %5329 = vrot.lane.b32.xlu0 %v3803, 24
      %v5330 = vpop.permute.xlu0 %5329
      %5331 = vrot.lane.b32.xlu0 %v3804, 24
      %v5332 = vpop.permute.xlu0 %5331
      %5333 = vrot.lane.b32.xlu0 %v3805, 24
      %v5334 = vpop.permute.xlu0 %5333
      %5335 = vrot.lane.b32.xlu0 %v3806, 24
      %v5336 = vpop.permute.xlu0 %5335
      %5337 = vrot.lane.b32.xlu0 %v3807, 24
      %v5338 = vpop.permute.xlu0 %5337
      %5339 = vrot.lane.b32.xlu0 %v3808, 24
      %v5340 = vpop.permute.xlu0 %5339
      %5341 = vrot.lane.b32.xlu0 %v3809, 24
      %v5342 = vpop.permute.xlu0 %5341
      %5343 = vrot.lane.b32.xlu0 %v3810, 24
      %v5344 = vpop.permute.xlu0 %5343
      %5345 = vrot.lane.b32.xlu0 %v3811, 24
      %v5346 = vpop.permute.xlu0 %5345
      %5347 = vrot.lane.b32.xlu0 %v3812, 24
      %v5348 = vpop.permute.xlu0 %5347
      %5349 = vrot.lane.b32.xlu0 %v3813, 24
      %v5350 = vpop.permute.xlu0 %5349
      %5351 = vrot.lane.b32.xlu0 %v3814, 24
      %v5352 = vpop.permute.xlu0 %5351
      %5353 = vrot.lane.b32.xlu0 %v3815, 24
      %v5354 = vpop.permute.xlu0 %5353
      %5355 = vrot.lane.b32.xlu0 %v3816, 24
      %v5356 = vpop.permute.xlu0 %5355
      %5357 = vrot.lane.b32.xlu0 %v3817, 24
      %v5358 = vpop.permute.xlu0 %5357
      %5359 = vrot.lane.b32.xlu0 %v3818, 24
      %v5360 = vpop.permute.xlu0 %5359
      %5361 = vrot.lane.b32.xlu0 %v3819, 24
      %v5362 = vpop.permute.xlu0 %5361
      %5363 = vrot.lane.b32.xlu0 %v3820, 24
      %v5364 = vpop.permute.xlu0 %5363
      %5365 = vrot.lane.b32.xlu0 %v3821, 24
      %v5366 = vpop.permute.xlu0 %5365
      %5431 = vrot.lane.b32.xlu0 %v5047, 32
      %v5432 = vpop.permute.xlu0 %5431
      %5433 = vrot.lane.b32.xlu0 %v5048, 32
      %v5434 = vpop.permute.xlu0 %5433
      %5435 = vrot.lane.b32.xlu0 %v5049, 32
      %v5436 = vpop.permute.xlu0 %5435
      %5437 = vrot.lane.b32.xlu0 %v5050, 32
      %v5438 = vpop.permute.xlu0 %5437
      %5439 = vrot.lane.b32.xlu0 %v5051, 32
      %v5440 = vpop.permute.xlu0 %5439
      %5441 = vrot.lane.b32.xlu0 %v5052, 32
      %v5442 = vpop.permute.xlu0 %5441
      %5443 = vrot.lane.b32.xlu0 %v5053, 32
      %v5444 = vpop.permute.xlu0 %5443
      %5445 = vrot.lane.b32.xlu0 %v5054, 32
      %v5446 = vpop.permute.xlu0 %5445
      %5447 = vrot.lane.b32.xlu0 %v5055, 32
      %v5448 = vpop.permute.xlu0 %5447
      %5449 = vrot.lane.b32.xlu0 %v5056, 32
      %v5450 = vpop.permute.xlu0 %5449
      %5451 = vrot.lane.b32.xlu0 %v5057, 32
      %v5452 = vpop.permute.xlu0 %5451
      %5453 = vrot.lane.b32.xlu0 %v5058, 32
      %v5454 = vpop.permute.xlu0 %5453
      %5455 = vrot.lane.b32.xlu0 %v5059, 32
      %v5456 = vpop.permute.xlu0 %5455
      %5457 = vrot.lane.b32.xlu0 %v5060, 32
      %v5458 = vpop.permute.xlu0 %5457
      %5459 = vrot.lane.b32.xlu0 %v5061, 32
      %v5460 = vpop.permute.xlu0 %5459
      %5461 = vrot.lane.b32.xlu0 %v5062, 32
      %v5462 = vpop.permute.xlu0 %5461
      %5463 = vrot.lane.b32.xlu0 %v5063, 32
      %v5464 = vpop.permute.xlu0 %5463
      %5465 = vrot.lane.b32.xlu0 %v5064, 32
      %v5466 = vpop.permute.xlu0 %5465
      %5467 = vrot.lane.b32.xlu0 %v5065, 32
      %v5468 = vpop.permute.xlu0 %5467
      %5469 = vrot.lane.b32.xlu0 %v5066, 32
      %v5470 = vpop.permute.xlu0 %5469
      %5471 = vrot.lane.b32.xlu0 %v5067, 32
      %v5472 = vpop.permute.xlu0 %5471
      %5473 = vrot.lane.b32.xlu0 %v5068, 32
      %v5474 = vpop.permute.xlu0 %5473
      %5475 = vrot.lane.b32.xlu0 %v5069, 32
      %v5476 = vpop.permute.xlu0 %5475
      %5477 = vrot.lane.b32.xlu0 %v5070, 32
      %v5478 = vpop.permute.xlu0 %5477
      %5479 = vrot.lane.b32.xlu0 %v5071, 32
      %v5480 = vpop.permute.xlu0 %5479
      %5481 = vrot.lane.b32.xlu0 %v5072, 32
      %v5482 = vpop.permute.xlu0 %5481
      %5483 = vrot.lane.b32.xlu0 %v5073, 32
      %v5484 = vpop.permute.xlu0 %5483
      %5485 = vrot.lane.b32.xlu0 %v5074, 32
      %v5486 = vpop.permute.xlu0 %5485
      %5487 = vrot.lane.b32.xlu0 %v5075, 32
      %v5488 = vpop.permute.xlu0 %5487
      %5489 = vrot.lane.b32.xlu0 %v5076, 32
      %v5490 = vpop.permute.xlu0 %5489
      %5491 = vrot.lane.b32.xlu0 %v5077, 32
      %v5492 = vpop.permute.xlu0 %5491
      %5493 = vrot.lane.b32.xlu0 %v5078, 32
      %v5494 = vpop.permute.xlu0 %5493
      %v5527 = vsel %vm1852, %v3725, %v5112
      %v5528 = vsel %vm1852, %v3726, %v5114
      %v5529 = vsel %vm1852, %v3727, %v5116
      %v5530 = vsel %vm1852, %v3728, %v5118
      %v5531 = vsel %vm1852, %v3729, %v5120
      %v5532 = vsel %vm1852, %v3730, %v5122
      %v5533 = vsel %vm1852, %v3731, %v5124
      %v5534 = vsel %vm1852, %v3732, %v5126
      %v5535 = vsel %vm1852, %v3733, %v5128
      %v5536 = vsel %vm1852, %v3734, %v5130
      %v5537 = vsel %vm1852, %v3735, %v5132
      %v5538 = vsel %vm1852, %v3736, %v5134
      %v5539 = vsel %vm1852, %v3737, %v5136
      %v5540 = vsel %vm1852, %v3738, %v5138
      %v5541 = vsel %vm1852, %v3739, %v5140
      %v5542 = vsel %vm1852, %v3740, %v5142
      %v5543 = vsel %vm1852, %v3741, %v5144
      %v5544 = vsel %vm1852, %v3742, %v5146
      %v5545 = vsel %vm1852, %v3743, %v5148
      %v5546 = vsel %vm1852, %v3744, %v5150
      %v5547 = vsel %vm1852, %v3745, %v5152
      %v5548 = vsel %vm1852, %v3746, %v5154
      %v5549 = vsel %vm1852, %v3747, %v5156
      %v5550 = vsel %vm1852, %v3748, %v5158
      %v5551 = vsel %vm1852, %v3749, %v5160
      %v5552 = vsel %vm1852, %v3750, %v5162
      %v5553 = vsel %vm1852, %v3751, %v5164
      %v5554 = vsel %vm1852, %v3752, %v5166
      %v5555 = vsel %vm1852, %v3753, %v5168
      %v5556 = vsel %vm1852, %v3754, %v5170
      %v5557 = vsel %vm1852, %v3755, %v5172
      %v5558 = vsel %vm1852, %v3756, %v5174
      %v5559 = vsel %vm1885, %v5527, %v3983
      %v5560 = vsel %vm1885, %v5528, %v3985
      %v5561 = vsel %vm1885, %v5529, %v3987
      %v5562 = vsel %vm1885, %v5530, %v3989
      %v5563 = vsel %vm1885, %v5531, %v3991
      %v5564 = vsel %vm1885, %v5532, %v3993
      %v5565 = vsel %vm1885, %v5533, %v3995
      %v5566 = vsel %vm1885, %v5534, %v3997
      %v5567 = vsel %vm1885, %v5535, %v3999
      %v5568 = vsel %vm1885, %v5536, %v4001
      %v5569 = vsel %vm1885, %v5537, %v4003
      %v5570 = vsel %vm1885, %v5538, %v4005
      %v5571 = vsel %vm1885, %v5539, %v4007
      %v5572 = vsel %vm1885, %v5540, %v4009
      %v5573 = vsel %vm1885, %v5541, %v4011
      %v5574 = vsel %vm1885, %v5542, %v4013
      %v5575 = vsel %vm1885, %v5543, %v4015
      %v5576 = vsel %vm1885, %v5544, %v4017
      %v5577 = vsel %vm1885, %v5545, %v4019
      %v5578 = vsel %vm1885, %v5546, %v4021
      %v5579 = vsel %vm1885, %v5547, %v4023
      %v5580 = vsel %vm1885, %v5548, %v4025
      %v5581 = vsel %vm1885, %v5549, %v4027
      %v5582 = vsel %vm1885, %v5550, %v4029
      %v5583 = vsel %vm1885, %v5551, %v4031
      %v5584 = vsel %vm1885, %v5552, %v4033
      %v5585 = vsel %vm1885, %v5553, %v4035
      %v5586 = vsel %vm1885, %v5554, %v4037
      %v5587 = vsel %vm1885, %v5555, %v4039
      %v5588 = vsel %vm1885, %v5556, %v4041
      %v5589 = vsel %vm1885, %v5557, %v4043
      %v5590 = vsel %vm1885, %v5558, %v4045
      %v5591 = vsel %vm702, %v5559, %v3983
      %v5592 = vsel %vm702, %v5560, %v3985
      %v5593 = vsel %vm702, %v5561, %v3987
      %v5594 = vsel %vm702, %v5562, %v3989
      %v5595 = vsel %vm702, %v5563, %v3991
      %v5596 = vsel %vm702, %v5564, %v3993
      %v5597 = vsel %vm702, %v5565, %v3995
      %v5598 = vsel %vm702, %v5566, %v3997
      %v5599 = vsel %vm702, %v5567, %v3999
      %v5600 = vsel %vm702, %v5568, %v4001
      %v5601 = vsel %vm702, %v5569, %v4003
      %v5602 = vsel %vm702, %v5570, %v4005
      %v5603 = vsel %vm702, %v5571, %v4007
      %v5604 = vsel %vm702, %v5572, %v4009
      %v5605 = vsel %vm702, %v5573, %v4011
      %v5606 = vsel %vm702, %v5574, %v4013
      %v5607 = vsel %vm702, %v5575, %v4015
      %v5608 = vsel %vm702, %v5576, %v4017
      %v5609 = vsel %vm702, %v5577, %v4019
      %v5610 = vsel %vm702, %v5578, %v4021
      %v5611 = vsel %vm702, %v5579, %v4023
      %v5612 = vsel %vm702, %v5580, %v4025
      %v5613 = vsel %vm702, %v5581, %v4027
      %v5614 = vsel %vm702, %v5582, %v4029
      %v5615 = vsel %vm702, %v5583, %v4031
      %v5616 = vsel %vm702, %v5584, %v4033
      %v5617 = vsel %vm702, %v5585, %v4035
      %v5618 = vsel %vm702, %v5586, %v4037
      %v5619 = vsel %vm702, %v5587, %v4039
      %v5620 = vsel %vm702, %v5588, %v4041
      %v5621 = vsel %vm702, %v5589, %v4043
      %v5622 = vsel %vm702, %v5590, %v4045
      %v5623 = vsel %vm1950, %v5591, %v5208
      %v5624 = vsel %vm1950, %v5592, %v5210
      %v5625 = vsel %vm1950, %v5593, %v5212
      %v5626 = vsel %vm1950, %v5594, %v5214
      %v5627 = vsel %vm1950, %v5595, %v5216
      %v5628 = vsel %vm1950, %v5596, %v5218
      %v5629 = vsel %vm1950, %v5597, %v5220
      %v5630 = vsel %vm1950, %v5598, %v5222
      %v5631 = vsel %vm1950, %v5599, %v5224
      %v5632 = vsel %vm1950, %v5600, %v5226
      %v5633 = vsel %vm1950, %v5601, %v5228
      %v5634 = vsel %vm1950, %v5602, %v5230
      %v5635 = vsel %vm1950, %v5603, %v5232
      %v5636 = vsel %vm1950, %v5604, %v5234
      %v5637 = vsel %vm1950, %v5605, %v5236
      %v5638 = vsel %vm1950, %v5606, %v5238
      %v5639 = vsel %vm1950, %v5607, %v5240
      %v5640 = vsel %vm1950, %v5608, %v5242
      %v5641 = vsel %vm1950, %v5609, %v5244
      %v5642 = vsel %vm1950, %v5610, %v5246
      %v5643 = vsel %vm1950, %v5611, %v5248
      %v5644 = vsel %vm1950, %v5612, %v5250
      %v5645 = vsel %vm1950, %v5613, %v5252
      %v5646 = vsel %vm1950, %v5614, %v5254
      %v5647 = vsel %vm1950, %v5615, %v5256
      %v5648 = vsel %vm1950, %v5616, %v5258
      %v5649 = vsel %vm1950, %v5617, %v5260
      %v5650 = vsel %vm1950, %v5618, %v5262
      %v5651 = vsel %vm1950, %v5619, %v5264
      %v5652 = vsel %vm1950, %v5620, %v5266
      %v5653 = vsel %vm1950, %v5621, %v5268
      %v5654 = vsel %vm1950, %v5622, %v5270
      %v5655 = vsel %vm1983, %v5623, %v5304
      %v5656 = vsel %vm1983, %v5624, %v5306
      %v5657 = vsel %vm1983, %v5625, %v5308
      %v5658 = vsel %vm1983, %v5626, %v5310
      %v5659 = vsel %vm1983, %v5627, %v5312
      %v5660 = vsel %vm1983, %v5628, %v5314
      %v5661 = vsel %vm1983, %v5629, %v5316
      %v5662 = vsel %vm1983, %v5630, %v5318
      %v5663 = vsel %vm1983, %v5631, %v5320
      %v5664 = vsel %vm1983, %v5632, %v5322
      %v5665 = vsel %vm1983, %v5633, %v5324
      %v5666 = vsel %vm1983, %v5634, %v5326
      %v5667 = vsel %vm1983, %v5635, %v5328
      %v5668 = vsel %vm1983, %v5636, %v5330
      %v5669 = vsel %vm1983, %v5637, %v5332
      %v5670 = vsel %vm1983, %v5638, %v5334
      %v5671 = vsel %vm1983, %v5639, %v5336
      %v5672 = vsel %vm1983, %v5640, %v5338
      %v5673 = vsel %vm1983, %v5641, %v5340
      %v5674 = vsel %vm1983, %v5642, %v5342
      %v5675 = vsel %vm1983, %v5643, %v5344
      %v5676 = vsel %vm1983, %v5644, %v5346
      %v5677 = vsel %vm1983, %v5645, %v5348
      %v5678 = vsel %vm1983, %v5646, %v5350
      %v5679 = vsel %vm1983, %v5647, %v5352
      %v5680 = vsel %vm1983, %v5648, %v5354
      %v5681 = vsel %vm1983, %v5649, %v5356
      %v5682 = vsel %vm1983, %v5650, %v5358
      %v5683 = vsel %vm1983, %v5651, %v5360
      %v5684 = vsel %vm1983, %v5652, %v5362
      %v5685 = vsel %vm1983, %v5653, %v5364
      %v5686 = vsel %vm1983, %v5654, %v5366
      %v5687 = vsel %vm2016, %v5655, %v5304
      %v5688 = vsel %vm2016, %v5656, %v5306
      %v5689 = vsel %vm2016, %v5657, %v5308
      %v5690 = vsel %vm2016, %v5658, %v5310
      %v5691 = vsel %vm2016, %v5659, %v5312
      %v5692 = vsel %vm2016, %v5660, %v5314
      %v5693 = vsel %vm2016, %v5661, %v5316
      %v5694 = vsel %vm2016, %v5662, %v5318
      %v5695 = vsel %vm2016, %v5663, %v5320
      %v5696 = vsel %vm2016, %v5664, %v5322
      %v5697 = vsel %vm2016, %v5665, %v5324
      %v5698 = vsel %vm2016, %v5666, %v5326
      %v5699 = vsel %vm2016, %v5667, %v5328
      %v5700 = vsel %vm2016, %v5668, %v5330
      %v5701 = vsel %vm2016, %v5669, %v5332
      %v5702 = vsel %vm2016, %v5670, %v5334
      %v5703 = vsel %vm2016, %v5671, %v5336
      %v5704 = vsel %vm2016, %v5672, %v5338
      %v5705 = vsel %vm2016, %v5673, %v5340
      %v5706 = vsel %vm2016, %v5674, %v5342
      %v5707 = vsel %vm2016, %v5675, %v5344
      %v5708 = vsel %vm2016, %v5676, %v5346
      %v5709 = vsel %vm2016, %v5677, %v5348
      %v5710 = vsel %vm2016, %v5678, %v5350
      %v5711 = vsel %vm2016, %v5679, %v5352
      %v5712 = vsel %vm2016, %v5680, %v5354
      %v5713 = vsel %vm2016, %v5681, %v5356
      %v5714 = vsel %vm2016, %v5682, %v5358
      %v5715 = vsel %vm2016, %v5683, %v5360
      %v5716 = vsel %vm2016, %v5684, %v5362
      %v5717 = vsel %vm2016, %v5685, %v5364
      %v5718 = vsel %vm2016, %v5686, %v5366
      %v5719 = vsel %vm2049, %v5687, %v5432
      %v5720 = vsel %vm2049, %v5688, %v5434
      %v5721 = vsel %vm2049, %v5689, %v5436
      %v5722 = vsel %vm2049, %v5690, %v5438
      %v5723 = vsel %vm2049, %v5691, %v5440
      %v5724 = vsel %vm2049, %v5692, %v5442
      %v5725 = vsel %vm2049, %v5693, %v5444
      %v5726 = vsel %vm2049, %v5694, %v5446
      %v5727 = vsel %vm2049, %v5695, %v5448
      %v5728 = vsel %vm2049, %v5696, %v5450
      %v5729 = vsel %vm2049, %v5697, %v5452
      %v5730 = vsel %vm2049, %v5698, %v5454
      %v5731 = vsel %vm2049, %v5699, %v5456
      %v5732 = vsel %vm2049, %v5700, %v5458
      %v5733 = vsel %vm2049, %v5701, %v5460
      %v5734 = vsel %vm2049, %v5702, %v5462
      %v5735 = vsel %vm2049, %v5703, %v5464
      %v5736 = vsel %vm2049, %v5704, %v5466
      %v5737 = vsel %vm2049, %v5705, %v5468
      %v5738 = vsel %vm2049, %v5706, %v5470
      %v5739 = vsel %vm2049, %v5707, %v5472
      %v5740 = vsel %vm2049, %v5708, %v5474
      %v5741 = vsel %vm2049, %v5709, %v5476
      %v5742 = vsel %vm2049, %v5710, %v5478
      %v5743 = vsel %vm2049, %v5711, %v5480
      %v5744 = vsel %vm2049, %v5712, %v5482
      %v5745 = vsel %vm2049, %v5713, %v5484
      %v5746 = vsel %vm2049, %v5714, %v5486
      %v5747 = vsel %vm2049, %v5715, %v5488
      %v5748 = vsel %vm2049, %v5716, %v5490
      %v5749 = vsel %vm2049, %v5717, %v5492
      %v5750 = vsel %vm2049, %v5718, %v5494
      %v5752 = vsel %vm2087, %v5719, 0
      %v5755 = vsel %vm2087, %v5720, 0
      %v5758 = vsel %vm2087, %v5721, 0
      %v5761 = vsel %vm2087, %v5722, 0
      %v5764 = vsel %vm2087, %v5723, 0
      %v5767 = vsel %vm2087, %v5724, 0
      %v5770 = vsel %vm2087, %v5725, 0
      %v5773 = vsel %vm2087, %v5726, 0
      %v5776 = vsel %vm2087, %v5727, 0
      %v5779 = vsel %vm2087, %v5728, 0
      %v5782 = vsel %vm2087, %v5729, 0
      %v5785 = vsel %vm2087, %v5730, 0
      %v5788 = vsel %vm2087, %v5731, 0
      %v5791 = vsel %vm2087, %v5732, 0
      %v5794 = vsel %vm2087, %v5733, 0
      %v5797 = vsel %vm2087, %v5734, 0
      %v5800 = vsel %vm2087, %v5735, 0
      %v5803 = vsel %vm2087, %v5736, 0
      %v5806 = vsel %vm2087, %v5737, 0
      %v5809 = vsel %vm2087, %v5738, 0
      %v5812 = vsel %vm2087, %v5739, 0
      %v5815 = vsel %vm2087, %v5740, 0
      %v5818 = vsel %vm2087, %v5741, 0
      %v5821 = vsel %vm2087, %v5742, 0
      %v5824 = vsel %vm2087, %v5743, 0
      %v5827 = vsel %vm2087, %v5744, 0
      %v5830 = vsel %vm2087, %v5745, 0
      %v5833 = vsel %vm2087, %v5746, 0
      %v5836 = vsel %vm2087, %v5747, 0
      %v5839 = vsel %vm2087, %v5748, 0
      %v5842 = vsel %vm2087, %v5749, 0
      %v5845 = vsel %vm2087, %v5750, 0
      %5847 = vmatprep.subr.mxu0 0.0
      %5848 = vmatpush1.msra.mxu0 %v4686
      %5849 = vmatprep.subr.mxu0 0.0
      %5850 = vmatpush1.msra.mxu0 %v4687
      %5851 = vmatprep.subr.mxu0 0.0
      %5852 = vmatpush1.msra.mxu0 %v4688
      %5853 = vmatprep.subr.mxu0 0.0
      %5854 = vmatpush1.msra.mxu0 %v4689
      %5855 = vmatprep.subr.mxu0 0.0
      %5856 = vmatpush1.msra.mxu0 %v4788
      %5857 = vmatprep.subr.mxu0 0.0
      %5858 = vmatpush1.msra.mxu0 0.0
      %5859 = vmatprep.subr.mxu0 0.0
      %5860 = vmatpush1.msra.mxu0 0.0
      %5861 = vmatprep.subr.mxu0 0.0
      %5862 = vmatpush1.msra.mxu0 0.0
      %5863 = vmatprep.subr.mxu0 0.0
      %5864 = vmatpush1.msra.mxu0 0.0
      %5865 = vmatprep.subr.mxu0 0.0
      %5866 = vmatpush1.msra.mxu0 0.0
      %5867 = vmatprep.subr.mxu0 0.0
      %5868 = vmatpush1.msra.mxu0 0.0
      %5869 = vmatprep.subr.mxu0 0.0
      %5870 = vmatpush1.msra.mxu0 0.0
      %5871 = vmatprep.subr.mxu0 0.0
      %5872 = vmatpush1.msra.mxu0 0.0
      %5873 = vmatprep.subr.mxu0 0.0
      %5874 = vmatpush1.msra.mxu0 0.0
      %5875 = vmatprep.subr.mxu0 0.0
      %5876 = vmatpush1.msra.mxu0 0.0
      %5877 = vmatprep.subr.mxu0 0.0
      %5878 = vmatpush1.msra.mxu0 0.0
      %5879 = vmatprep.subr.mxu0 0.0
      %5880 = vmatpush1.msra.mxu0 0.0
      %5881 = vmatprep.subr.mxu0 0.0
      %5882 = vmatpush1.msra.mxu0 0.0
      %5883 = vmatprep.subr.mxu0 0.0
      %5884 = vmatpush1.msra.mxu0 0.0
      %5885 = vmatprep.subr.mxu0 0.0
      %5886 = vmatpush1.msra.mxu0 0.0
      %5887 = vmatprep.subr.mxu0 0.0
      %5888 = vmatpush1.msra.mxu0 0.0
      %5889 = vmatprep.subr.mxu0 0.0
      %5890 = vmatpush1.msra.mxu0 0.0
      %5891 = vmatprep.subr.mxu0 0.0
      %5892 = vmatpush1.msra.mxu0 0.0
      %5893 = vmatprep.subr.mxu0 0.0
      %5894 = vmatpush1.msra.mxu0 0.0
      %5895 = vmatprep.subr.mxu0 0.0
      %5896 = vmatpush1.msra.mxu0 0.0
      %5897 = vmatprep.subr.mxu0 0.0
      %5898 = vmatpush1.msra.mxu0 0.0
      %5899 = vmatprep.subr.mxu0 0.0
      %5900 = vmatpush1.msra.mxu0 0.0
      %5901 = vmatprep.subr.mxu0 0.0
      %5902 = vmatpush1.msra.mxu0 0.0
      %5903 = vmatprep.subr.mxu0 0.0
      %5904 = vmatpush1.msra.mxu0 0.0
      %5905 = vmatprep.subr.mxu0 0.0
      %5906 = vmatpush1.msra.mxu0 0.0
      %5907 = vmatprep.subr.mxu0 0.0
      %5908 = vmatpush1.msra.mxu0 0.0
      %5909 = vmatprep.subr.mxu0 0.0
      %5910 = vmatpush1.msra.mxu0 0.0
      %5911 = vmatprep.mubr.f32.mxu0 0.0
      %5912 = vmatmul.mubr.f32.gmra.mrb[0].mxu0 %v5752
      %v5913 = vpop.f32.mrb[0].mxu0
      %v5914 = vadd.f32 0.0, %v5913
      %v5915 = vpop.f32.mrb[0].mxu0
      %5916 = vmatprep.mubr.f32.mxu0 0.0
      %5917 = vmatmul.mubr.f32.gmra.mrb[0].mxu0 %v5755
      %v5918 = vpop.f32.mrb[0].mxu0
      %v5919 = vadd.f32 0.0, %v5918
      %v5920 = vpop.f32.mrb[0].mxu0
      %5921 = vmatprep.mubr.f32.mxu0 0.0
      %5922 = vmatmul.mubr.f32.gmra.mrb[0].mxu0 %v5758
      %v5923 = vpop.f32.mrb[0].mxu0
      %v5924 = vadd.f32 0.0, %v5923
      %v5925 = vpop.f32.mrb[0].mxu0
      %5926 = vmatprep.mubr.f32.mxu0 0.0
      %5927 = vmatmul.mubr.f32.gmra.mrb[0].mxu0 %v5761
      %v5928 = vpop.f32.mrb[0].mxu0
      %v5929 = vadd.f32 0.0, %v5928
      %v5930 = vpop.f32.mrb[0].mxu0
      %5931 = vmatprep.mubr.f32.mxu0 0.0
      %5932 = vmatmul.mubr.f32.gmra.mrb[0].mxu0 %v5764
      %v5933 = vpop.f32.mrb[0].mxu0
      %v5934 = vadd.f32 0.0, %v5933
      %v5935 = vpop.f32.mrb[0].mxu0
      %5936 = vmatprep.mubr.f32.mxu0 0.0
      %5937 = vmatmul.mubr.f32.gmra.mrb[0].mxu0 %v5767
      %v5938 = vpop.f32.mrb[0].mxu0
      %v5939 = vadd.f32 0.0, %v5938
      %v5940 = vpop.f32.mrb[0].mxu0
      %5941 = vmatprep.mubr.f32.mxu0 0.0
      %5942 = vmatmul.mubr.f32.gmra.mrb[0].mxu0 %v5770
      %v5943 = vpop.f32.mrb[0].mxu0
      %v5944 = vadd.f32 0.0, %v5943
      %v5945 = vpop.f32.mrb[0].mxu0
      %5946 = vmatprep.mubr.f32.mxu0 0.0
      %5947 = vmatmul.mubr.f32.gmra.mrb[0].mxu0 %v5773
      %v5948 = vpop.f32.mrb[0].mxu0
      %v5949 = vadd.f32 0.0, %v5948
      %v5950 = vpop.f32.mrb[0].mxu0
      %5951 = vmatprep.mubr.f32.mxu0 0.0
      %5952 = vmatmul.mubr.f32.gmra.mrb[0].mxu0 %v5776
      %v5953 = vpop.f32.mrb[0].mxu0
      %v5954 = vadd.f32 0.0, %v5953
      %v5955 = vpop.f32.mrb[0].mxu0
      %5956 = vmatprep.mubr.f32.mxu0 0.0
      %5957 = vmatmul.mubr.f32.gmra.mrb[0].mxu0 %v5779
      %v5958 = vpop.f32.mrb[0].mxu0
      %v5959 = vadd.f32 0.0, %v5958
      %v5960 = vpop.f32.mrb[0].mxu0
      %5961 = vmatprep.mubr.f32.mxu0 0.0
      %5962 = vmatmul.mubr.f32.gmra.mrb[0].mxu0 %v5782
      %v5963 = vpop.f32.mrb[0].mxu0
      %v5964 = vadd.f32 0.0, %v5963
      %v5965 = vpop.f32.mrb[0].mxu0
      %5966 = vmatprep.mubr.f32.mxu0 0.0
      %5967 = vmatmul.mubr.f32.gmra.mrb[0].mxu0 %v5785
      %v5968 = vpop.f32.mrb[0].mxu0
      %v5969 = vadd.f32 0.0, %v5968
      %v5970 = vpop.f32.mrb[0].mxu0
      %5971 = vmatprep.mubr.f32.mxu0 0.0
      %5972 = vmatmul.mubr.f32.gmra.mrb[0].mxu0 %v5788
      %v5973 = vpop.f32.mrb[0].mxu0
      %v5974 = vadd.f32 0.0, %v5973
      %v5975 = vpop.f32.mrb[0].mxu0
      %5976 = vmatprep.mubr.f32.mxu0 0.0
      %5977 = vmatmul.mubr.f32.gmra.mrb[0].mxu0 %v5791
      %v5978 = vpop.f32.mrb[0].mxu0
      %v5979 = vadd.f32 0.0, %v5978
      %v5980 = vpop.f32.mrb[0].mxu0
      %5981 = vmatprep.mubr.f32.mxu0 0.0
      %5982 = vmatmul.mubr.f32.gmra.mrb[0].mxu0 %v5794
      %v5983 = vpop.f32.mrb[0].mxu0
      %v5984 = vadd.f32 0.0, %v5983
      %v5985 = vpop.f32.mrb[0].mxu0
      %5986 = vmatprep.mubr.f32.mxu0 0.0
      %5987 = vmatmul.mubr.f32.gmra.mrb[0].mxu0 %v5797
      %v5988 = vpop.f32.mrb[0].mxu0
      %v5989 = vadd.f32 0.0, %v5988
      %v5990 = vpop.f32.mrb[0].mxu0
      %5991 = vmatprep.mubr.f32.mxu0 0.0
      %5992 = vmatmul.mubr.f32.gmra.mrb[0].mxu0 %v5800
      %v5993 = vpop.f32.mrb[0].mxu0
      %v5994 = vadd.f32 0.0, %v5993
      %v5995 = vpop.f32.mrb[0].mxu0
      %5996 = vmatprep.mubr.f32.mxu0 0.0
      %5997 = vmatmul.mubr.f32.gmra.mrb[0].mxu0 %v5803
      %v5998 = vpop.f32.mrb[0].mxu0
      %v5999 = vadd.f32 0.0, %v5998
      %v6000 = vpop.f32.mrb[0].mxu0
      %6001 = vmatprep.mubr.f32.mxu0 0.0
      %6002 = vmatmul.mubr.f32.gmra.mrb[0].mxu0 %v5806
      %v6003 = vpop.f32.mrb[0].mxu0
      %v6004 = vadd.f32 0.0, %v6003
      %v6005 = vpop.f32.mrb[0].mxu0
      %6006 = vmatprep.mubr.f32.mxu0 0.0
      %6007 = vmatmul.mubr.f32.gmra.mrb[0].mxu0 %v5809
      %v6008 = vpop.f32.mrb[0].mxu0
      %v6009 = vadd.f32 0.0, %v6008
      %v6010 = vpop.f32.mrb[0].mxu0
      %6011 = vmatprep.mubr.f32.mxu0 0.0
      %6012 = vmatmul.mubr.f32.gmra.mrb[0].mxu0 %v5812
      %v6013 = vpop.f32.mrb[0].mxu0
      %v6014 = vadd.f32 0.0, %v6013
      %v6015 = vpop.f32.mrb[0].mxu0
      %6016 = vmatprep.mubr.f32.mxu0 0.0
      %6017 = vmatmul.mubr.f32.gmra.mrb[0].mxu0 %v5815
      %v6018 = vpop.f32.mrb[0].mxu0
      %v6019 = vadd.f32 0.0, %v6018
      %v6020 = vpop.f32.mrb[0].mxu0
      %6021 = vmatprep.mubr.f32.mxu0 0.0
      %6022 = vmatmul.mubr.f32.gmra.mrb[0].mxu0 %v5818
      %v6023 = vpop.f32.mrb[0].mxu0
      %v6024 = vadd.f32 0.0, %v6023
      %v6025 = vpop.f32.mrb[0].mxu0
      %6026 = vmatprep.mubr.f32.mxu0 0.0
      %6027 = vmatmul.mubr.f32.gmra.mrb[0].mxu0 %v5821
      %v6028 = vpop.f32.mrb[0].mxu0
      %v6029 = vadd.f32 0.0, %v6028
      %v6030 = vpop.f32.mrb[0].mxu0
      %6031 = vmatprep.mubr.f32.mxu0 0.0
      %6032 = vmatmul.mubr.f32.gmra.mrb[0].mxu0 %v5824
      %v6033 = vpop.f32.mrb[0].mxu0
      %v6034 = vadd.f32 0.0, %v6033
      %v6035 = vpop.f32.mrb[0].mxu0
      %6036 = vmatprep.mubr.f32.mxu0 0.0
      %6037 = vmatmul.mubr.f32.gmra.mrb[0].mxu0 %v5827
      %v6038 = vpop.f32.mrb[0].mxu0
      %v6039 = vadd.f32 0.0, %v6038
      %v6040 = vpop.f32.mrb[0].mxu0
      %6041 = vmatprep.mubr.f32.mxu0 0.0
      %6042 = vmatmul.mubr.f32.gmra.mrb[0].mxu0 %v5830
      %v6043 = vpop.f32.mrb[0].mxu0
      %v6044 = vadd.f32 0.0, %v6043
      %v6045 = vpop.f32.mrb[0].mxu0
      %6046 = vmatprep.mubr.f32.mxu0 0.0
      %6047 = vmatmul.mubr.f32.gmra.mrb[0].mxu0 %v5833
      %v6048 = vpop.f32.mrb[0].mxu0
      %v6049 = vadd.f32 0.0, %v6048
      %v6050 = vpop.f32.mrb[0].mxu0
      %6051 = vmatprep.mubr.f32.mxu0 0.0
      %6052 = vmatmul.mubr.f32.gmra.mrb[0].mxu0 %v5836
      %v6053 = vpop.f32.mrb[0].mxu0
      %v6054 = vadd.f32 0.0, %v6053
      %v6055 = vpop.f32.mrb[0].mxu0
      %6056 = vmatprep.mubr.f32.mxu0 0.0
      %6057 = vmatmul.mubr.f32.gmra.mrb[0].mxu0 %v5839
      %v6058 = vpop.f32.mrb[0].mxu0
      %v6059 = vadd.f32 0.0, %v6058
      %v6060 = vpop.f32.mrb[0].mxu0
      %6061 = vmatprep.mubr.f32.mxu0 0.0
      %6062 = vmatmul.mubr.f32.gmra.mrb[0].mxu0 %v5842
      %v6063 = vpop.f32.mrb[0].mxu0
      %v6064 = vadd.f32 0.0, %v6063
      %v6065 = vpop.f32.mrb[0].mxu0
      %6066 = vmatprep.mubr.f32.mxu0 0.0
      %6067 = vmatmul.mubr.f32.gmra.mrb[0].mxu0 %v5845
      %v6068 = vpop.f32.mrb[0].mxu0
      %v6069 = vadd.f32 0.0, %v6068
      %v6070 = vpop.f32.mrb[0].mxu0
      %6071 = vdwg.mxu0
      %6104 = vrot.lane.b32.xlu0 %v5914, 4
      %v6105 = vpop.permute.xlu0 %6104
      %6106 = vrot.lane.b32.xlu0 %v5919, 4
      %v6107 = vpop.permute.xlu0 %6106
      %6108 = vrot.lane.b32.xlu0 %v5924, 4
      %v6109 = vpop.permute.xlu0 %6108
      %6110 = vrot.lane.b32.xlu0 %v5929, 4
      %v6111 = vpop.permute.xlu0 %6110
      %6112 = vrot.lane.b32.xlu0 %v5934, 4
      %v6113 = vpop.permute.xlu0 %6112
      %6114 = vrot.lane.b32.xlu0 %v5939, 4
      %v6115 = vpop.permute.xlu0 %6114
      %6116 = vrot.lane.b32.xlu0 %v5944, 4
      %v6117 = vpop.permute.xlu0 %6116
      %6118 = vrot.lane.b32.xlu0 %v5949, 4
      %v6119 = vpop.permute.xlu0 %6118
      %6120 = vrot.lane.b32.xlu0 %v5954, 4
      %v6121 = vpop.permute.xlu0 %6120
      %6122 = vrot.lane.b32.xlu0 %v5959, 4
      %v6123 = vpop.permute.xlu0 %6122
      %6124 = vrot.lane.b32.xlu0 %v5964, 4
      %v6125 = vpop.permute.xlu0 %6124
      %6126 = vrot.lane.b32.xlu0 %v5969, 4
      %v6127 = vpop.permute.xlu0 %6126
      %6128 = vrot.lane.b32.xlu0 %v5974, 4
      %v6129 = vpop.permute.xlu0 %6128
      %6130 = vrot.lane.b32.xlu0 %v5979, 4
      %v6131 = vpop.permute.xlu0 %6130
      %6132 = vrot.lane.b32.xlu0 %v5984, 4
      %v6133 = vpop.permute.xlu0 %6132
      %6134 = vrot.lane.b32.xlu0 %v5989, 4
      %v6135 = vpop.permute.xlu0 %6134
      %6136 = vrot.lane.b32.xlu0 %v5994, 4
      %v6137 = vpop.permute.xlu0 %6136
      %6138 = vrot.lane.b32.xlu0 %v5999, 4
      %v6139 = vpop.permute.xlu0 %6138
      %6140 = vrot.lane.b32.xlu0 %v6004, 4
      %v6141 = vpop.permute.xlu0 %6140
      %6142 = vrot.lane.b32.xlu0 %v6009, 4
      %v6143 = vpop.permute.xlu0 %6142
      %6144 = vrot.lane.b32.xlu0 %v6014, 4
      %v6145 = vpop.permute.xlu0 %6144
      %6146 = vrot.lane.b32.xlu0 %v6019, 4
      %v6147 = vpop.permute.xlu0 %6146
      %6148 = vrot.lane.b32.xlu0 %v6024, 4
      %v6149 = vpop.permute.xlu0 %6148
      %6150 = vrot.lane.b32.xlu0 %v6029, 4
      %v6151 = vpop.permute.xlu0 %6150
      %6152 = vrot.lane.b32.xlu0 %v6034, 4
      %v6153 = vpop.permute.xlu0 %6152
      %6154 = vrot.lane.b32.xlu0 %v6039, 4
      %v6155 = vpop.permute.xlu0 %6154
      %6156 = vrot.lane.b32.xlu0 %v6044, 4
      %v6157 = vpop.permute.xlu0 %6156
      %6158 = vrot.lane.b32.xlu0 %v6049, 4
      %v6159 = vpop.permute.xlu0 %6158
      %6160 = vrot.lane.b32.xlu0 %v6054, 4
      %v6161 = vpop.permute.xlu0 %6160
      %6162 = vrot.lane.b32.xlu0 %v6059, 4
      %v6163 = vpop.permute.xlu0 %6162
      %6164 = vrot.lane.b32.xlu0 %v6064, 4
      %v6165 = vpop.permute.xlu0 %6164
      %6166 = vrot.lane.b32.xlu0 %v6069, 4
      %v6167 = vpop.permute.xlu0 %6166
      %v6200 = vsel %vm308, %v4857, %v6105
      %v6201 = vsel %vm308, %v4862, %v6107
      %v6202 = vsel %vm308, %v4867, %v6109
      %v6203 = vsel %vm308, %v4872, %v6111
      %v6204 = vsel %vm308, %v4877, %v6113
      %v6205 = vsel %vm308, %v4882, %v6115
      %v6206 = vsel %vm308, %v4887, %v6117
      %v6207 = vsel %vm308, %v4892, %v6119
      %v6208 = vsel %vm308, %v4897, %v6121
      %v6209 = vsel %vm308, %v4902, %v6123
      %v6210 = vsel %vm308, %v4907, %v6125
      %v6211 = vsel %vm308, %v4912, %v6127
      %v6212 = vsel %vm308, %v4917, %v6129
      %v6213 = vsel %vm308, %v4922, %v6131
      %v6214 = vsel %vm308, %v4927, %v6133
      %v6215 = vsel %vm308, %v4932, %v6135
      %v6216 = vsel %vm308, %v4937, %v6137
      %v6217 = vsel %vm308, %v4942, %v6139
      %v6218 = vsel %vm308, %v4947, %v6141
      %v6219 = vsel %vm308, %v4952, %v6143
      %v6220 = vsel %vm308, %v4957, %v6145
      %v6221 = vsel %vm308, %v4962, %v6147
      %v6222 = vsel %vm308, %v4967, %v6149
      %v6223 = vsel %vm308, %v4972, %v6151
      %v6224 = vsel %vm308, %v4977, %v6153
      %v6225 = vsel %vm308, %v4982, %v6155
      %v6226 = vsel %vm308, %v4987, %v6157
      %v6227 = vsel %vm308, %v4992, %v6159
      %v6228 = vsel %vm308, %v4997, %v6161
      %v6229 = vsel %vm308, %v5002, %v6163
      %v6230 = vsel %vm308, %v5007, %v6165
      %v6231 = vsel %vm308, %v5012, %v6167
      %v6232 = vadd.f32 %v6200, %v955
      %v6233 = vadd.f32 %v6201, %v956
      %v6234 = vadd.f32 %v6202, %v957
      %v6235 = vadd.f32 %v6203, %v958
      %v6236 = vadd.f32 %v6204, %v959
      %v6237 = vadd.f32 %v6205, %v960
      %v6238 = vadd.f32 %v6206, %v961
      %v6239 = vadd.f32 %v6207, %v962
      %v6240 = vadd.f32 %v6208, %v963
      %v6241 = vadd.f32 %v6209, %v964
      %v6242 = vadd.f32 %v6210, %v965
      %v6243 = vadd.f32 %v6211, %v966
      %v6244 = vadd.f32 %v6212, %v967
      %v6245 = vadd.f32 %v6213, %v968
      %v6246 = vadd.f32 %v6214, %v969
      %v6247 = vadd.f32 %v6215, %v970
      %v6248 = vadd.f32 %v6216, %v971
      %v6249 = vadd.f32 %v6217, %v972
      %v6250 = vadd.f32 %v6218, %v973
      %v6251 = vadd.f32 %v6219, %v974
      %v6252 = vadd.f32 %v6220, %v975
      %v6253 = vadd.f32 %v6221, %v976
      %v6254 = vadd.f32 %v6222, %v977
      %v6255 = vadd.f32 %v6223, %v978
      %v6256 = vadd.f32 %v6224, %v979
      %v6257 = vadd.f32 %v6225, %v980
      %v6258 = vadd.f32 %v6226, %v981
      %v6259 = vadd.f32 %v6227, %v982
      %v6260 = vadd.f32 %v6228, %v983
      %v6261 = vadd.f32 %v6229, %v984
      %v6262 = vadd.f32 %v6230, %v985
      %v6263 = vadd.f32 %v6231, %v986
      %v6264 = vmax.f32 %v6232, 0.0
      %v6265 = vmax.f32 %v6233, 0.0
      %v6266 = vmax.f32 %v6234, 0.0
      %v6267 = vmax.f32 %v6235, 0.0
      %v6268 = vmax.f32 %v6236, 0.0
      %v6269 = vmax.f32 %v6237, 0.0
      %v6270 = vmax.f32 %v6238, 0.0
      %v6271 = vmax.f32 %v6239, 0.0
      %v6272 = vmax.f32 %v6240, 0.0
      %v6273 = vmax.f32 %v6241, 0.0
      %v6274 = vmax.f32 %v6242, 0.0
      %v6275 = vmax.f32 %v6243, 0.0
      %v6276 = vmax.f32 %v6244, 0.0
      %v6277 = vmax.f32 %v6245, 0.0
      %v6278 = vmax.f32 %v6246, 0.0
      %v6279 = vmax.f32 %v6247, 0.0
      %v6280 = vmax.f32 %v6248, 0.0
      %v6281 = vmax.f32 %v6249, 0.0
      %v6282 = vmax.f32 %v6250, 0.0
      %v6283 = vmax.f32 %v6251, 0.0
      %v6284 = vmax.f32 %v6252, 0.0
      %v6285 = vmax.f32 %v6253, 0.0
      %v6286 = vmax.f32 %v6254, 0.0
      %v6287 = vmax.f32 %v6255, 0.0
      %v6288 = vmax.f32 %v6256, 0.0
      %v6289 = vmax.f32 %v6257, 0.0
      %v6290 = vmax.f32 %v6258, 0.0
      %v6291 = vmax.f32 %v6259, 0.0
      %v6292 = vmax.f32 %v6260, 0.0
      %v6293 = vmax.f32 %v6261, 0.0
      %v6294 = vmax.f32 %v6262, 0.0
      %v6295 = vmax.f32 %v6263, 0.0
      %s6296 = scalar_lea.vmem %s262, 16
      %6297 = vst.msk [vmem:[%s6296] sm:$0xff] %vm1852, %v6264
      %6298 = vst.msk [vmem:[%s6296 + $0x8] sm:$0xff] %vm1852, %v6265
      %6299 = vst.msk [vmem:[%s6296 + $0x20] sm:$0xff] %vm1852, %v6266
      %6300 = vst.msk [vmem:[%s6296 + $0x28] sm:$0xff] %vm1852, %v6267
      %6301 = vst.msk [vmem:[%s6296 + $0x40] sm:$0xff] %vm1852, %v6268
      %6302 = vst.msk [vmem:[%s6296 + $0x48] sm:$0xff] %vm1852, %v6269
      %6303 = vst.msk [vmem:[%s6296 + $0x60] sm:$0xff] %vm1852, %v6270
      %6304 = vst.msk [vmem:[%s6296 + $0x68] sm:$0xff] %vm1852, %v6271
      %6305 = vst.msk [vmem:[%s6296 + $0x80] sm:$0xff] %vm1852, %v6272
      %6306 = vst.msk [vmem:[%s6296 + $0x88] sm:$0xff] %vm1852, %v6273
      %6307 = vst.msk [vmem:[%s6296 + $0xa0] sm:$0xff] %vm1852, %v6274
      %6308 = vst.msk [vmem:[%s6296 + $0xa8] sm:$0xff] %vm1852, %v6275
      %6309 = vst.msk [vmem:[%s6296 + $0xc0] sm:$0xff] %vm1852, %v6276
      %6310 = vst.msk [vmem:[%s6296 + $0xc8] sm:$0xff] %vm1852, %v6277
      %6311 = vst.msk [vmem:[%s6296 + $0xe0] sm:$0xff] %vm1852, %v6278
      %6312 = vst.msk [vmem:[%s6296 + $0xe8] sm:$0xff] %vm1852, %v6279
      %6313 = vst.msk [vmem:[%s6296 + $0x100] sm:$0xff] %vm1852, %v6280
      %6314 = vst.msk [vmem:[%s6296 + $0x108] sm:$0xff] %vm1852, %v6281
      %6315 = vst.msk [vmem:[%s6296 + $0x120] sm:$0xff] %vm1852, %v6282
      %6316 = vst.msk [vmem:[%s6296 + $0x128] sm:$0xff] %vm1852, %v6283
      %6317 = vst.msk [vmem:[%s6296 + $0x140] sm:$0xff] %vm1852, %v6284
      %6318 = vst.msk [vmem:[%s6296 + $0x148] sm:$0xff] %vm1852, %v6285
      %6319 = vst.msk [vmem:[%s6296 + $0x160] sm:$0xff] %vm1852, %v6286
      %6320 = vst.msk [vmem:[%s6296 + $0x168] sm:$0xff] %vm1852, %v6287
      %6321 = vst.msk [vmem:[%s6296 + $0x180] sm:$0xff] %vm1852, %v6288
      %6322 = vst.msk [vmem:[%s6296 + $0x188] sm:$0xff] %vm1852, %v6289
      %6323 = vst.msk [vmem:[%s6296 + $0x1a0] sm:$0xff] %vm1852, %v6290
      %6324 = vst.msk [vmem:[%s6296 + $0x1a8] sm:$0xff] %vm1852, %v6291
      %6325 = vst.msk [vmem:[%s6296 + $0x1c0] sm:$0xff] %vm1852, %v6292
      %6326 = vst.msk [vmem:[%s6296 + $0x1c8] sm:$0xff] %vm1852, %v6293
      %6327 = vst.msk [vmem:[%s6296 + $0x1e0] sm:$0xff] %vm1852, %v6294
      %6328 = vst.msk [vmem:[%s6296 + $0x1e8] sm:$0xff] %vm1852, %v6295
      %s6329 = smul.u32 16, %s21
      %p6330 = scmp.lt.s32.totalorder %s20, 1
      %s6331 = scalar_select %p6330, %s20, 1
      %p6332 = scmp.lt.s32.totalorder %s6329, 15
      %s6333 = scalar_select %p6332, %s6329, 15
      %s6334 = smul.addr %s6333, 4
      %s6335 = smul.addr %s6331, 64
      %s6336 = sadd.s32 %s6334, %s6335
      %s6337 = smul.addr %s6336, 8
      %s6338 = scalar_lea.vmem %s5, %s6337
      // Predicated region
      $region45: #{tpu_custom_call.1} parent=39 // pred_check
        %p6339 = pneg %p160
      $region46: #{tpu_custom_call.1} parent=39 // pred_check_branch
        %6341 = sbr.rel (%p6339) target = $region48
      $region47: #{tpu_custom_call.1} parent=39 // pred_region
        %s6342 = smul.u32 16, %s21
      $region48: #{tpu_custom_call.1} parent=39 // pred_fallthru
        _
    $region40: #{tpu_custom_call.1} parent=5 // pred_fallthru
      _
    %p6343 = scmp.le.s32.totalorder 2, %s11
    // Predicated region
    $region49: #{tpu_custom_call.1} parent=5 // pred_check
      %p6344 = pneg %p6343
    $region50: #{tpu_custom_call.1} parent=5 // pred_check_branch
      %6346 = sbr.rel (%p6344) target = $region52
    $region51: #{tpu_custom_call.1} parent=5 // pred_region
      %s6347 = ssub.s32 %s11, 2
      // Predicated region
      $region53: #{tpu_custom_call.1} parent=51 // pred_check
        %p6348 = pneg %p166
      $region54: #{tpu_custom_call.1} parent=51 // pred_check_branch
        %6350 = sbr.rel (%p6348) target = $region56
      $region55: #{tpu_custom_call.1} parent=51 // pred_region
        %s6351 = smul.u32 16, %s23
        %p6352 = scmp.lt.s32.totalorder %s22, 1
        %s6353 = scalar_select %p6352, %s22, 1
        %p6354 = scmp.lt.s32.totalorder %s6351, 15
        %s6355 = scalar_select %p6354, %s6351, 15
        %s6356 = smul.addr %s6355, 4
        %s6357 = smul.addr %s6353, 64
        %s6358 = sadd.s32 %s6356, %s6357
        %s6359 = smul.addr %s6358, 8
        %s6360 = scalar_lea.vmem %s5, %s6359
      $region56: #{tpu_custom_call.1} parent=51 // pred_fallthru
        _
    $region52: #{tpu_custom_call.1} parent=5 // pred_fallthru
      _
  $region6: #{tpu_custom_call.1} parent=0 // loop_footer
    %s15 = sadd.s32 1, %s11
  $region7: #{tpu_custom_call.1} parent=0 // loop_footer_branch
    %10 = sbr.rel target = $region3
  $region8: #{tpu_custom_call.1} parent=0 // loop_exit
    _

</llo_original>
